<compile_context>
chip_gen: v7x
topology: tpu7x:2x2x1
jax: 0.10.0
libtpu: 0.0.40
codegen_flags: <defaults>
</compile_context>

<pallas_src>
import jax
import jax.numpy as jnp
from jax import lax
from jax.experimental import pallas as pl
from jax.experimental.pallas import tpu as pltpu

LANE = 128


def _round_up(x, m):
    return (x + m - 1) // m * m


def _bn_fold(gamma, beta, mean, var, eps=1e-5):
    scale = gamma / jnp.sqrt(var + eps)
    shift = beta - mean * scale
    return scale, shift


def _double_conv_kernel(xp_ref, w1_ref, b1_ref, w2_ref, b2_ref, o_ref, hpad_ref):
    # xp_ref : (1, H, W, K1p)   bf16  stage-1 im2col-packed input (9*Cin -> K1p lanes)
    # w1_ref : (K1p, C_p)       bf16  BN1-folded stage-1 weights
    # b1_ref : (1, C_p)         f32   BN1 shift (beta - mean*scale)
    # w2_ref : (9, C_p, C_p)    bf16  BN2-folded stage-2 weights, one block per tap
    # b2_ref : (1, C_p)         f32   BN2 shift
    # o_ref  : (1, H, W, C_p)   f32   lane-dense output block
    # hpad_ref: (H+2, W+2, C_p) f32   scratch: zero halo ring + stage-1 activation
    _, H, W, C_p = o_ref.shape
    K1p = xp_ref.shape[-1]

    # ---- stage 1: conv3x3 + BN1 + ReLU (single K=K1p MXU contraction) ------
    p1 = xp_ref[0].reshape(H * W, K1p)                                    # bf16
    h = jnp.dot(p1, w1_ref[...], preferred_element_type=jnp.float32)
    h = jnp.maximum(h + b1_ref[...], 0.0)                                 # (H*W, C_p) f32

    # Dropout2d(0.1) in eval mode == identity.

    # ---- stage 2: conv3x3 + BN2 + ReLU, per-tap accumulating matmuls -------
    # Zero only the halo ring (cheap) every step -> correct under megacore
    # sharding of the "parallel" batch axis (scratch is per-core).
    zero_row = jnp.zeros((1, W + 2, C_p), hpad_ref.dtype)
    zero_col = jnp.zeros((H + 2, 1, C_p), hpad_ref.dtype)
    hpad_ref[0:1, :, :] = zero_row
    hpad_ref[H + 1:H + 2, :, :] = zero_row
    hpad_ref[:, 0:1, :] = zero_col
    hpad_ref[:, W + 1:W + 2, :] = zero_col
    hpad_ref[1:H + 1, 1:W + 1, :] = h.reshape(H, W, C_p)

    # 9 accumulating (H*W, C_p) x (C_p, C_p) matmuls -- no 9x im2col temporary.
    # TODO(synk): on v6e, fuse adjacent taps (K = 2*C_p = 256) to fill the MXU depth.
    acc = jnp.zeros((H * W, C_p), jnp.float32)
    for t in range(9):
        ky, kx = divmod(t, 3)
        patch = hpad_ref[ky:ky + H, kx:kx + W, :].reshape(H * W, C_p)
        acc = acc + jnp.dot(patch.astype(jnp.bfloat16), w2_ref[t],
                            preferred_element_type=jnp.float32)
    y = jnp.maximum(acc + b2_ref[...], 0.0)
    o_ref[...] = y.reshape(1, H, W, C_p).astype(o_ref.dtype)


def efficient_double_conv_nhwc(x_nhwc, params):
    """EfficientDoubleConv forward (use_attention=False, eval mode), NHWC in/out."""
    N, H, W, Cin = x_nhwc.shape
    Cout = params["conv1_w"].shape[0]
    C_p = _round_up(Cout, LANE)
    K1 = 9 * Cin
    K1p = _round_up(K1, LANE)

    s1, b1 = _bn_fold(params["bn1_gamma"], params["bn1_beta"],
                      params["bn1_mean"], params["bn1_var"])
    s2, b2 = _bn_fold(params["bn2_gamma"], params["bn2_beta"],
                      params["bn2_mean"], params["bn2_var"])

    # Stage-1 input: pack (ky, kx, cin) along the lane axis and pad to one
    # lane-dense K block.  For a stem (Cin ~ 3-8) this costs the same HBM bytes
    # as padding Cin to 128 but removes the stage-1 halo scratch / in-kernel
    # im2col entirely.
    # TODO(synk): for large Cin (9*Cin >> 128) switch stage 1 to the same
    #             in-kernel per-tap accumulation as stage 2 to avoid 9x HBM reads.
    xpad = jnp.pad(x_nhwc.astype(jnp.float32), ((0, 0), (1, 1), (1, 1), (0, 0)))
    xp = jnp.concatenate(
        [xpad[:, ky:ky + H, kx:kx + W, :] for ky in range(3) for kx in range(3)],
        axis=-1)                                                  # (N, H, W, 9*Cin)
    xp = jnp.pad(xp, ((0, 0), (0, 0), (0, 0), (0, K1p - K1))).astype(jnp.bfloat16)

    # Stage-1 weights: OIHW -> (ky, kx, cin, cout), fold BN1 scale, flatten to
    # (9*Cin, Cout) matching the xp packing, pad to (K1p, C_p), cast bf16.
    w1 = jnp.transpose(params["conv1_w"], (2, 3, 1, 0)) * s1[None, None, None, :]
    w1 = w1.reshape(K1, Cout)
    w1 = jnp.pad(w1, ((0, K1p - K1), (0, C_p - Cout))).astype(jnp.bfloat16)

    # Stage-2 weights: one BN2-folded (C_p, C_p) block per tap -> (9, C_p, C_p) bf16.
    w2 = jnp.transpose(params["conv2_w"], (2, 3, 1, 0)) * s2[None, None, None, :]
    w2 = jnp.pad(w2, ((0, 0), (0, 0), (0, C_p - Cout), (0, C_p - Cout)))
    w2 = w2.reshape(9, C_p, C_p).astype(jnp.bfloat16)

    b1p = jnp.pad(b1, (0, C_p - Cout)).reshape(1, C_p).astype(jnp.float32)
    b2p = jnp.pad(b2, (0, C_p - Cout)).reshape(1, C_p).astype(jnp.float32)

    flops = 2 * N * H * W * (K1p * C_p + 9 * C_p * C_p)
    bytes_accessed = (xp.size * 2 + w1.size * 2 + w2.size * 2
                      + b1p.size * 4 + b2p.size * 4 + N * H * W * C_p * 4)

    out = pl.pallas_call(
        _double_conv_kernel,
        out_shape=jax.ShapeDtypeStruct((N, H, W, C_p), jnp.float32),
        grid=(N,),
        in_specs=[
            pl.BlockSpec((1, H, W, K1p), lambda n: (n, 0, 0, 0)),
            pl.BlockSpec((K1p, C_p), lambda n: (0, 0)),
            pl.BlockSpec((1, C_p), lambda n: (0, 0)),
            pl.BlockSpec((9, C_p, C_p), lambda n: (0, 0, 0)),
            pl.BlockSpec((1, C_p), lambda n: (0, 0)),
        ],
        out_specs=pl.BlockSpec((1, H, W, C_p), lambda n: (n, 0, 0, 0)),
        scratch_shapes=[
            pltpu.VMEM((H + 2, W + 2, C_p), jnp.float32),
        ],
        compiler_params=pltpu.CompilerParams(
            dimension_semantics=("parallel",)),
        cost_estimate=pl.CostEstimate(
            flops=flops, transcendentals=0, bytes_accessed=bytes_accessed),
    )(xp, w1, b1p, w2, b2p)

    # Drop padded output channels (no-op when Cout is already a 128-multiple).
    return out[..., :Cout]


def efficient_double_conv(x_nchw, params):
    """NCHW adapter matching the PyTorch module interface."""
    # TODO(synk): keep activations NHWC / channel-padded across the whole network
    #             and call efficient_double_conv_nhwc directly to avoid these
    #             extra HBM transpose passes at every module boundary.
    x = jnp.transpose(x_nchw, (0, 2, 3, 1))
    y = efficient_double_conv_nhwc(x, params)
    return jnp.transpose(y, (0, 3, 1, 2))


def init_params(key, in_channels, out_channels):
    """Deterministic synthetic parameters matching EfficientDoubleConv.__init__."""
    k1, k2, k3, k4, k5, k6, k7, k8 = jax.random.split(key, 8)
    return {
        # PyTorch conv weight layout (Cout, Cin, kH, kW)
        "conv1_w": jax.random.normal(k1, (out_channels, in_channels, 3, 3), jnp.float32) * 0.1,
        "conv2_w": jax.random.normal(k2, (out_channels, out_channels, 3, 3), jnp.float32) * 0.1,
        "bn1_gamma": 1.0 + 0.1 * jax.random.normal(k3, (out_channels,), jnp.float32),
        "bn1_beta": 0.1 * jax.random.normal(k4, (out_channels,), jnp.float32),
        "bn1_mean": 0.05 * jax.random.normal(k5, (out_channels,), jnp.float32),
        "bn1_var": jnp.abs(1.0 + 0.1 * jax.random.normal(k6, (out_channels,), jnp.float32)),
        "bn2_gamma": 1.0 + 0.1 * jax.random.normal(k7, (out_channels,), jnp.float32),
        "bn2_beta": 0.1 * jax.random.normal(k8, (out_channels,), jnp.float32),
        "bn2_mean": jnp.zeros((out_channels,), jnp.float32),
        "bn2_var": jnp.ones((out_channels,), jnp.float32),
    }


def _reference_f32(x_nchw, params):
    """Pure-f32 JAX reference of the module forward (semantic sanity check)."""
    def stage(x, w_oihw, gamma, beta, mean, var):
        y = lax.conv_general_dilated(
            x, w_oihw, window_strides=(1, 1), padding="SAME",
            dimension_numbers=("NCHW", "OIHW", "NCHW"))
        scale, shift = _bn_fold(gamma, beta, mean, var)
        return jnp.maximum(y * scale[None, :, None, None] + shift[None, :, None, None], 0.0)

    h = stage(x_nchw, params["conv1_w"], params["bn1_gamma"], params["bn1_beta"],
              params["bn1_mean"], params["bn1_var"])
    return stage(h, params["conv2_w"], params["bn2_gamma"], params["bn2_beta"],
                 params["bn2_mean"], params["bn2_var"])


def _reference_bf16(x_nchw, params):
    """Reference that quantizes MXU operands to bf16 exactly like the kernel."""
    def stage(x, w_oihw, gamma, beta, mean, var):
        scale, shift = _bn_fold(gamma, beta, mean, var)
        w = w_oihw * scale[:, None, None, None]
        y = lax.conv_general_dilated(
            x.astype(jnp.bfloat16), w.astype(jnp.bfloat16),
            window_strides=(1, 1), padding="SAME",
            dimension_numbers=("NCHW", "OIHW", "NCHW"),
            preferred_element_type=jnp.float32)
        return jnp.maximum(y + shift[None, :, None, None], 0.0)

    h = stage(x_nchw, params["conv1_w"], params["bn1_gamma"], params["bn1_beta"],
              params["bn1_mean"], params["bn1_var"])
    return stage(h, params["conv2_w"], params["bn2_gamma"], params["bn2_beta"],
                 params["bn2_mean"], params["bn2_var"])


if __name__ == "__main__":
    key = jax.random.PRNGKey(0)
    kx, kp = jax.random.split(key)

    N, C_IN, C_OUT, H, W = 2, 4, 8, 16, 16
    x = jax.random.normal(kx, (N, C_IN, H, W), jnp.float32)
    params = init_params(kp, C_IN, C_OUT)

    fwd = jax.jit(efficient_double_conv)
    out = jax.block_until_ready(fwd(x, params))

    ref_bf16 = jax.block_until_ready(_reference_bf16(x, params))
    ref_f32 = jax.block_until_ready(_reference_f32(x, params))

    assert out.shape == (N, C_OUT, H, W), out.shape
    # Tight check vs a reference with the same bf16 operand quantization.
    assert jnp.allclose(out, ref_bf16, atol=5e-3, rtol=5e-3), \
        float(jnp.max(jnp.abs(out - ref_bf16)))
    # Loose sanity check vs the pure-f32 module semantics (bf16 MXU operands).
    assert jnp.allclose(out, ref_f32, atol=1e-1, rtol=1e-1), \
        float(jnp.max(jnp.abs(out - ref_f32)))
    print("KERNEL_OK")
</pallas_src>

<mosaic_0001>
module attributes {stable_mosaic.version = 11 : i64} {
  func.func @_double_conv_kernel(%arg0: i32, %arg1: memref<1x16x16x128xbf16, #tpu.memory_space<vmem>>, %arg2: memref<128x128xbf16, #tpu.memory_space<vmem>>, %arg3: memref<1x128xf32, #tpu.memory_space<vmem>>, %arg4: memref<9x128x128xbf16, #tpu.memory_space<vmem>>, %arg5: memref<1x128xf32, #tpu.memory_space<vmem>>, %arg6: memref<1x16x16x128xf32, #tpu.memory_space<vmem>>, %arg7: memref<18x18x128xf32, #tpu.memory_space<vmem>>) attributes {dimension_semantics = [#tpu.dimension_semantics<parallel>], iteration_bounds = array<i64: 2>, scalar_prefetch = 0 : i64, scratch_operands = 1 : i64, tpu.core_type = #tpu.core_type<tc>, window_params = [{transform_indices = @transform_0, window_bounds = array<i64: 1, 16, 16, 128>}, {pipeline_mode = #tpu.pipeline_mode<synchronous>, transform_indices = @transform_1, window_bounds = array<i64: 128, 128>}, {pipeline_mode = #tpu.pipeline_mode<synchronous>, transform_indices = @transform_2, window_bounds = array<i64: 1, 128>}, {pipeline_mode = #tpu.pipeline_mode<synchronous>, transform_indices = @transform_3, window_bounds = array<i64: 9, 128, 128>}, {pipeline_mode = #tpu.pipeline_mode<synchronous>, transform_indices = @transform_4, window_bounds = array<i64: 1, 128>}, {transform_indices = @transform_5, window_bounds = array<i64: 1, 16, 16, 128>}]} {
    %c0 = arith.constant 0 : index
    %c0_0 = arith.constant 0 : index
    %c0_1 = arith.constant 0 : index
    %c0_2 = arith.constant 0 : index
    %0 = vector.load %arg1[%c0, %c0_0, %c0_1, %c0_2] : memref<1x16x16x128xbf16, #tpu.memory_space<vmem>>, vector<1x16x16x128xbf16>
    %1 = vector.shape_cast %0 : vector<1x16x16x128xbf16> to vector<16x16x128xbf16>
    %2 = vector.shape_cast %1 : vector<16x16x128xbf16> to vector<256x128xbf16>
    %c0_3 = arith.constant 0 : index
    %c0_4 = arith.constant 0 : index
    %3 = vector.load %arg2[%c0_3, %c0_4] : memref<128x128xbf16, #tpu.memory_space<vmem>>, vector<128x128xbf16>
    %cst = arith.constant dense<0.000000e+00> : vector<256x128xf32>
    %4 = tpu.matmul %2, %3, %cst {dimension_numbers = #tpu.dot_dimension_numbers<[1], [0], [0], [1], [0, 0, 1, 1], [], []>} : vector<256x128xbf16>, vector<128x128xbf16>, vector<256x128xf32> -> vector<256x128xf32>
    %c0_5 = arith.constant 0 : index
    %c0_6 = arith.constant 0 : index
    %5 = vector.load %arg3[%c0_5, %c0_6] : memref<1x128xf32, #tpu.memory_space<vmem>>, vector<1x128xf32>
    %6 = vector.broadcast %5 : vector<1x128xf32> to vector<256x128xf32>
    %7 = arith.addf %4, %6 : vector<256x128xf32>
    %cst_7 = arith.constant 0.000000e+00 : f32
    %8 = vector.broadcast %cst_7 : f32 to vector<256x128xf32>
    %9 = arith.maximumf %7, %8 : vector<256x128xf32>
    %cst_8 = arith.constant 0.000000e+00 : f32
    %10 = vector.broadcast %cst_8 : f32 to vector<1x18x128xf32>
    %cst_9 = arith.constant 0.000000e+00 : f32
    %11 = vector.broadcast %cst_9 : f32 to vector<18x1x128xf32>
    %c0_10 = arith.constant 0 : index
    %c0_11 = arith.constant 0 : index
    %c0_12 = arith.constant 0 : index
    %12 = vector.load %arg7[%c0_10, %c0_11, %c0_12] : memref<18x18x128xf32, #tpu.memory_space<vmem>>, vector<1x18x128xf32>
    tpu.vector_store %arg7[%c0_10, %c0_11, %c0_12], %10 {strides = array<i32>} : memref<18x18x128xf32, #tpu.memory_space<vmem>>, vector<1x18x128xf32>,
    %c17 = arith.constant 17 : index
    %c0_13 = arith.constant 0 : index
    %c0_14 = arith.constant 0 : index
    %13 = vector.load %arg7[%c17, %c0_13, %c0_14] : memref<18x18x128xf32, #tpu.memory_space<vmem>>, vector<1x18x128xf32>
    tpu.vector_store %arg7[%c17, %c0_13, %c0_14], %10 {strides = array<i32>} : memref<18x18x128xf32, #tpu.memory_space<vmem>>, vector<1x18x128xf32>,
    %c0_15 = arith.constant 0 : index
    %c0_16 = arith.constant 0 : index
    %c0_17 = arith.constant 0 : index
    %14 = vector.load %arg7[%c0_15, %c0_16, %c0_17] : memref<18x18x128xf32, #tpu.memory_space<vmem>>, vector<18x1x128xf32>
    tpu.vector_store %arg7[%c0_15, %c0_16, %c0_17], %11 {strides = array<i32>} : memref<18x18x128xf32, #tpu.memory_space<vmem>>, vector<18x1x128xf32>,
    %c0_18 = arith.constant 0 : index
    %c17_19 = arith.constant 17 : index
    %c0_20 = arith.constant 0 : index
    %15 = vector.load %arg7[%c0_18, %c17_19, %c0_20] : memref<18x18x128xf32, #tpu.memory_space<vmem>>, vector<18x1x128xf32>
    tpu.vector_store %arg7[%c0_18, %c17_19, %c0_20], %11 {strides = array<i32>} : memref<18x18x128xf32, #tpu.memory_space<vmem>>, vector<18x1x128xf32>,
    %16 = vector.shape_cast %9 : vector<256x128xf32> to vector<16x16x128xf32>
    %c1 = arith.constant 1 : index
    %c1_21 = arith.constant 1 : index
    %c0_22 = arith.constant 0 : index
    %17 = vector.load %arg7[%c1, %c1_21, %c0_22] : memref<18x18x128xf32, #tpu.memory_space<vmem>>, vector<16x16x128xf32>
    tpu.vector_store %arg7[%c1, %c1_21, %c0_22], %16 {strides = array<i32>} : memref<18x18x128xf32, #tpu.memory_space<vmem>>, vector<16x16x128xf32>,
    %cst_23 = arith.constant 0.000000e+00 : f32
    %18 = vector.broadcast %cst_23 : f32 to vector<256x128xf32>
    %c0_24 = arith.constant 0 : index
    %c0_25 = arith.constant 0 : index
    %c0_26 = arith.constant 0 : index
    %19 = vector.load %arg7[%c0_24, %c0_25, %c0_26] : memref<18x18x128xf32, #tpu.memory_space<vmem>>, vector<16x16x128xf32>
    %20 = vector.shape_cast %19 : vector<16x16x128xf32> to vector<256x128xf32>
    %21 = arith.truncf %20 : vector<256x128xf32> to vector<256x128xbf16>
    %c0_27 = arith.constant 0 : index
    %c0_28 = arith.constant 0 : index
    %c0_29 = arith.constant 0 : index
    %22 = vector.load %arg4[%c0_27, %c0_28, %c0_29] : memref<9x128x128xbf16, #tpu.memory_space<vmem>>, vector<1x128x128xbf16>
    %23 = vector.shape_cast %22 : vector<1x128x128xbf16> to vector<128x128xbf16>
    %cst_30 = arith.constant dense<0.000000e+00> : vector<256x128xf32>
    %24 = tpu.matmul %21, %23, %cst_30 {dimension_numbers = #tpu.dot_dimension_numbers<[1], [0], [0], [1], [0, 0, 1, 1], [], []>} : vector<256x128xbf16>, vector<128x128xbf16>, vector<256x128xf32> -> vector<256x128xf32>
    %25 = arith.addf %18, %24 : vector<256x128xf32>
    %c0_31 = arith.constant 0 : index
    %c1_32 = arith.constant 1 : index
    %c0_33 = arith.constant 0 : index
    %26 = vector.load %arg7[%c0_31, %c1_32, %c0_33] : memref<18x18x128xf32, #tpu.memory_space<vmem>>, vector<16x16x128xf32>
    %27 = vector.shape_cast %26 : vector<16x16x128xf32> to vector<256x128xf32>
    %28 = arith.truncf %27 : vector<256x128xf32> to vector<256x128xbf16>
    %c1_34 = arith.constant 1 : index
    %c0_35 = arith.constant 0 : index
    %c0_36 = arith.constant 0 : index
    %29 = vector.load %arg4[%c1_34, %c0_35, %c0_36] : memref<9x128x128xbf16, #tpu.memory_space<vmem>>, vector<1x128x128xbf16>
    %30 = vector.shape_cast %29 : vector<1x128x128xbf16> to vector<128x128xbf16>
    %cst_37 = arith.constant dense<0.000000e+00> : vector<256x128xf32>
    %31 = tpu.matmul %28, %30, %cst_37 {dimension_numbers = #tpu.dot_dimension_numbers<[1], [0], [0], [1], [0, 0, 1, 1], [], []>} : vector<256x128xbf16>, vector<128x128xbf16>, vector<256x128xf32> -> vector<256x128xf32>
    %32 = arith.addf %25, %31 : vector<256x128xf32>
    %c0_38 = arith.constant 0 : index
    %c2 = arith.constant 2 : index
    %c0_39 = arith.constant 0 : index
    %33 = vector.load %arg7[%c0_38, %c2, %c0_39] : memref<18x18x128xf32, #tpu.memory_space<vmem>>, vector<16x16x128xf32>
    %34 = vector.shape_cast %33 : vector<16x16x128xf32> to vector<256x128xf32>
    %35 = arith.truncf %34 : vector<256x128xf32> to vector<256x128xbf16>
    %c2_40 = arith.constant 2 : index
    %c0_41 = arith.constant 0 : index
    %c0_42 = arith.constant 0 : index
    %36 = vector.load %arg4[%c2_40, %c0_41, %c0_42] : memref<9x128x128xbf16, #tpu.memory_space<vmem>>, vector<1x128x128xbf16>
    %37 = vector.shape_cast %36 : vector<1x128x128xbf16> to vector<128x128xbf16>
    %cst_43 = arith.constant dense<0.000000e+00> : vector<256x128xf32>
    %38 = tpu.matmul %35, %37, %cst_43 {dimension_numbers = #tpu.dot_dimension_numbers<[1], [0], [0], [1], [0, 0, 1, 1], [], []>} : vector<256x128xbf16>, vector<128x128xbf16>, vector<256x128xf32> -> vector<256x128xf32>
    %39 = arith.addf %32, %38 : vector<256x128xf32>
    %c1_44 = arith.constant 1 : index
    %c0_45 = arith.constant 0 : index
    %c0_46 = arith.constant 0 : index
    %40 = vector.load %arg7[%c1_44, %c0_45, %c0_46] : memref<18x18x128xf32, #tpu.memory_space<vmem>>, vector<16x16x128xf32>
    %41 = vector.shape_cast %40 : vector<16x16x128xf32> to vector<256x128xf32>
    %42 = arith.truncf %41 : vector<256x128xf32> to vector<256x128xbf16>
    %c3 = arith.constant 3 : index
    %c0_47 = arith.constant 0 : index
    %c0_48 = arith.constant 0 : index
    %43 = vector.load %arg4[%c3, %c0_47, %c0_48] : memref<9x128x128xbf16, #tpu.memory_space<vmem>>, vector<1x128x128xbf16>
    %44 = vector.shape_cast %43 : vector<1x128x128xbf16> to vector<128x128xbf16>
    %cst_49 = arith.constant dense<0.000000e+00> : vector<256x128xf32>
    %45 = tpu.matmul %42, %44, %cst_49 {dimension_numbers = #tpu.dot_dimension_numbers<[1], [0], [0], [1], [0, 0, 1, 1], [], []>} : vector<256x128xbf16>, vector<128x128xbf16>, vector<256x128xf32> -> vector<256x128xf32>
    %46 = arith.addf %39, %45 : vector<256x128xf32>
    %c1_50 = arith.constant 1 : index
    %c1_51 = arith.constant 1 : index
    %c0_52 = arith.constant 0 : index
    %47 = vector.load %arg7[%c1_50, %c1_51, %c0_52] : memref<18x18x128xf32, #tpu.memory_space<vmem>>, vector<16x16x128xf32>
    %48 = vector.shape_cast %47 : vector<16x16x128xf32> to vector<256x128xf32>
    %49 = arith.truncf %48 : vector<256x128xf32> to vector<256x128xbf16>
    %c4 = arith.constant 4 : index
    %c0_53 = arith.constant 0 : index
    %c0_54 = arith.constant 0 : index
    %50 = vector.load %arg4[%c4, %c0_53, %c0_54] : memref<9x128x128xbf16, #tpu.memory_space<vmem>>, vector<1x128x128xbf16>
    %51 = vector.shape_cast %50 : vector<1x128x128xbf16> to vector<128x128xbf16>
    %cst_55 = arith.constant dense<0.000000e+00> : vector<256x128xf32>
    %52 = tpu.matmul %49, %51, %cst_55 {dimension_numbers = #tpu.dot_dimension_numbers<[1], [0], [0], [1], [0, 0, 1, 1], [], []>} : vector<256x128xbf16>, vector<128x128xbf16>, vector<256x128xf32> -> vector<256x128xf32>
    %53 = arith.addf %46, %52 : vector<256x128xf32>
    %c1_56 = arith.constant 1 : index
    %c2_57 = arith.constant 2 : index
    %c0_58 = arith.constant 0 : index
    %54 = vector.load %arg7[%c1_56, %c2_57, %c0_58] : memref<18x18x128xf32, #tpu.memory_space<vmem>>, vector<16x16x128xf32>
    %55 = vector.shape_cast %54 : vector<16x16x128xf32> to vector<256x128xf32>
    %56 = arith.truncf %55 : vector<256x128xf32> to vector<256x128xbf16>
    %c5 = arith.constant 5 : index
    %c0_59 = arith.constant 0 : index
    %c0_60 = arith.constant 0 : index
    %57 = vector.load %arg4[%c5, %c0_59, %c0_60] : memref<9x128x128xbf16, #tpu.memory_space<vmem>>, vector<1x128x128xbf16>
    %58 = vector.shape_cast %57 : vector<1x128x128xbf16> to vector<128x128xbf16>
    %cst_61 = arith.constant dense<0.000000e+00> : vector<256x128xf32>
    %59 = tpu.matmul %56, %58, %cst_61 {dimension_numbers = #tpu.dot_dimension_numbers<[1], [0], [0], [1], [0, 0, 1, 1], [], []>} : vector<256x128xbf16>, vector<128x128xbf16>, vector<256x128xf32> -> vector<256x128xf32>
    %60 = arith.addf %53, %59 : vector<256x128xf32>
    %c2_62 = arith.constant 2 : index
    %c0_63 = arith.constant 0 : index
    %c0_64 = arith.constant 0 : index
    %61 = vector.load %arg7[%c2_62, %c0_63, %c0_64] : memref<18x18x128xf32, #tpu.memory_space<vmem>>, vector<16x16x128xf32>
    %62 = vector.shape_cast %61 : vector<16x16x128xf32> to vector<256x128xf32>
    %63 = arith.truncf %62 : vector<256x128xf32> to vector<256x128xbf16>
    %c6 = arith.constant 6 : index
    %c0_65 = arith.constant 0 : index
    %c0_66 = arith.constant 0 : index
    %64 = vector.load %arg4[%c6, %c0_65, %c0_66] : memref<9x128x128xbf16, #tpu.memory_space<vmem>>, vector<1x128x128xbf16>
    %65 = vector.shape_cast %64 : vector<1x128x128xbf16> to vector<128x128xbf16>
    %cst_67 = arith.constant dense<0.000000e+00> : vector<256x128xf32>
    %66 = tpu.matmul %63, %65, %cst_67 {dimension_numbers = #tpu.dot_dimension_numbers<[1], [0], [0], [1], [0, 0, 1, 1], [], []>} : vector<256x128xbf16>, vector<128x128xbf16>, vector<256x128xf32> -> vector<256x128xf32>
    %67 = arith.addf %60, %66 : vector<256x128xf32>
    %c2_68 = arith.constant 2 : index
    %c1_69 = arith.constant 1 : index
    %c0_70 = arith.constant 0 : index
    %68 = vector.load %arg7[%c2_68, %c1_69, %c0_70] : memref<18x18x128xf32, #tpu.memory_space<vmem>>, vector<16x16x128xf32>
    %69 = vector.shape_cast %68 : vector<16x16x128xf32> to vector<256x128xf32>
    %70 = arith.truncf %69 : vector<256x128xf32> to vector<256x128xbf16>
    %c7 = arith.constant 7 : index
    %c0_71 = arith.constant 0 : index
    %c0_72 = arith.constant 0 : index
    %71 = vector.load %arg4[%c7, %c0_71, %c0_72] : memref<9x128x128xbf16, #tpu.memory_space<vmem>>, vector<1x128x128xbf16>
    %72 = vector.shape_cast %71 : vector<1x128x128xbf16> to vector<128x128xbf16>
    %cst_73 = arith.constant dense<0.000000e+00> : vector<256x128xf32>
    %73 = tpu.matmul %70, %72, %cst_73 {dimension_numbers = #tpu.dot_dimension_numbers<[1], [0], [0], [1], [0, 0, 1, 1], [], []>} : vector<256x128xbf16>, vector<128x128xbf16>, vector<256x128xf32> -> vector<256x128xf32>
    %74 = arith.addf %67, %73 : vector<256x128xf32>
    %c2_74 = arith.constant 2 : index
    %c2_75 = arith.constant 2 : index
    %c0_76 = arith.constant 0 : index
    %75 = vector.load %arg7[%c2_74, %c2_75, %c0_76] : memref<18x18x128xf32, #tpu.memory_space<vmem>>, vector<16x16x128xf32>
    %76 = vector.shape_cast %75 : vector<16x16x128xf32> to vector<256x128xf32>
    %77 = arith.truncf %76 : vector<256x128xf32> to vector<256x128xbf16>
    %c8 = arith.constant 8 : index
    %c0_77 = arith.constant 0 : index
    %c0_78 = arith.constant 0 : index
    %78 = vector.load %arg4[%c8, %c0_77, %c0_78] : memref<9x128x128xbf16, #tpu.memory_space<vmem>>, vector<1x128x128xbf16>
    %79 = vector.shape_cast %78 : vector<1x128x128xbf16> to vector<128x128xbf16>
    %cst_79 = arith.constant dense<0.000000e+00> : vector<256x128xf32>
    %80 = tpu.matmul %77, %79, %cst_79 {dimension_numbers = #tpu.dot_dimension_numbers<[1], [0], [0], [1], [0, 0, 1, 1], [], []>} : vector<256x128xbf16>, vector<128x128xbf16>, vector<256x128xf32> -> vector<256x128xf32>
    %81 = arith.addf %74, %80 : vector<256x128xf32>
    %c0_80 = arith.constant 0 : index
    %c0_81 = arith.constant 0 : index
    %82 = vector.load %arg5[%c0_80, %c0_81] : memref<1x128xf32, #tpu.memory_space<vmem>>, vector<1x128xf32>
    %83 = vector.broadcast %82 : vector<1x128xf32> to vector<256x128xf32>
    %84 = arith.addf %81, %83 : vector<256x128xf32>
    %cst_82 = arith.constant 0.000000e+00 : f32
    %85 = vector.broadcast %cst_82 : f32 to vector<256x128xf32>
    %86 = arith.maximumf %84, %85 : vector<256x128xf32>
    %87 = vector.shape_cast %86 : vector<256x128xf32> to vector<1x16x16x128xf32>
    %c0_83 = arith.constant 0 : index
    %c0_84 = arith.constant 0 : index
    %c0_85 = arith.constant 0 : index
    %c0_86 = arith.constant 0 : index
    %88 = vector.load %arg6[%c0_83, %c0_84, %c0_85, %c0_86] : memref<1x16x16x128xf32, #tpu.memory_space<vmem>>, vector<1x16x16x128xf32>
    tpu.vector_store %arg6[%c0_83, %c0_84, %c0_85, %c0_86], %87 {strides = array<i32>} : memref<1x16x16x128xf32, #tpu.memory_space<vmem>>, vector<1x16x16x128xf32>,
    return
  }
  func.func @transform_0(%arg0: i32) -> (i32, i32, i32, i32) {
    %c0_i32 = arith.constant 0 : i32
    %c0_i32_0 = arith.constant 0 : i32
    %c0_i32_1 = arith.constant 0 : i32
    %c0_i32_2 = arith.constant 0 : i32
    return %arg0, %c0_i32, %c0_i32_0, %c0_i32_1 : i32, i32, i32, i32
  }
  func.func @transform_1(%arg0: i32) -> (i32, i32) {
    %c0_i32 = arith.constant 0 : i32
    %c0_i32_0 = arith.constant 0 : i32
    %c0_i32_1 = arith.constant 0 : i32
    return %c0_i32, %c0_i32_0 : i32, i32
  }
  func.func @transform_2(%arg0: i32) -> (i32, i32) {
    %c0_i32 = arith.constant 0 : i32
    %c0_i32_0 = arith.constant 0 : i32
    %c0_i32_1 = arith.constant 0 : i32
    return %c0_i32, %c0_i32_0 : i32, i32
  }
  func.func @transform_3(%arg0: i32) -> (i32, i32, i32) {
    %c0_i32 = arith.constant 0 : i32
    %c0_i32_0 = arith.constant 0 : i32
    %c0_i32_1 = arith.constant 0 : i32
    %c0_i32_2 = arith.constant 0 : i32
    return %c0_i32, %c0_i32_0, %c0_i32_1 : i32, i32, i32
  }
  func.func @transform_4(%arg0: i32) -> (i32, i32) {
    %c0_i32 = arith.constant 0 : i32
    %c0_i32_0 = arith.constant 0 : i32
    %c0_i32_1 = arith.constant 0 : i32
    return %c0_i32, %c0_i32_0 : i32, i32
  }
  func.func @transform_5(%arg0: i32) -> (i32, i32, i32, i32) {
    %c0_i32 = arith.constant 0 : i32
    %c0_i32_0 = arith.constant 0 : i32
    %c0_i32_1 = arith.constant 0 : i32
    %c0_i32_2 = arith.constant 0 : i32
    return %arg0, %c0_i32, %c0_i32_0, %c0_i32_1 : i32, i32, i32, i32
  }
}

</mosaic_0001>

<llo_original>
// kernel: efficient_double_conv.1
$region0: #{efficient_double_conv.1}
  #allocation0 [shape = 'u32[]', space=smem, size = 0x4, offset = 0x4, fixed_abs, tag = 'smem constant byte address 0x4 - core index']
  #allocation1 [shape = 'u32[144,128]{1,0:T(1,128)}', space=vmem, size = 0x12000, scoped, tag = 'internal scratch']
  #allocation2 [shape = 'f32[18,18,128]{2,1,0:T(8,128)}', space=vmem, size = 0x36000, scoped, tag = 'scratch operand']
  %s0 = inlined_call_operand.vmem [shape: bf16[2,16,16,128], index: 0, kind: input, shape index: {}]
  %s1 = inlined_call_operand.vmem [shape: bf16[128,128], index: 1, kind: input, shape index: {}]
  %s2 = inlined_call_operand.vmem [shape: f32[1,128], index: 2, kind: input, shape index: {}]
  %s3 = inlined_call_operand.vmem [shape: bf16[9,128,128], index: 3, kind: input, shape index: {}]
  %s4 = inlined_call_operand.vmem [shape: f32[1,128], index: 4, kind: input, shape index: {}]
  %s5 = inlined_call_operand.vmem [shape: f32[2,16,16,128], index: 5, kind: output, shape index: {}]
  %s6 = sld [smem:[#allocation0]]
  $region53: #{efficient_double_conv.1} parent=0
    _
  %s8 = ssub.s32 1, %s6
  %s9 = scalar_select 0, %s8, %s6
  loop: start=0, step=1, limit=4
  $region2: #{efficient_double_conv.1} parent=0 // loop_pre_header
    _
  $region3: #{efficient_double_conv.1} parent=0 // loop_header
    %s11 = sphi 0, %s15
    %p12 = scmp.ge.s32.totalorder %s11, 4
    %s21 = sphi 0, %s23
    %s24 = sphi 0, %s21
    %s25 = sphi 0, %s24
    %s41 = sphi 0, %s25
    %s45 = sphi 0, %s45
    %s47 = sphi 0, %s45
    %s48 = sphi 0, %s47
    %s62 = sphi 0, %s48
    %s66 = sphi 0, %s66
    %s68 = sphi 0, %s66
    %s69 = sphi 0, %s68
    %s83 = sphi 0, %s69
    %s87 = sphi 0, %s87
    %s89 = sphi 0, %s87
    %s90 = sphi 0, %s89
    %s104 = sphi 0, %s90
    %s108 = sphi 0, %s108
    %s110 = sphi 0, %s108
    %s111 = sphi 0, %s110
    %s125 = sphi 0, %s111
    %s131 = sphi 0, %s133
    %s134 = sphi 0, %s131
    %s135 = sphi 0, %s134
    %s151 = sphi 0, %s135
  $region4: #{efficient_double_conv.1} parent=0 // loop_header_branch
    %14 = sbr.rel (%p12) target = $region8
  $region5: #{efficient_double_conv.1} parent=0 // loop_body
    %s16 = ssub.s32 %s11, 1
    %s17 = ssub.s32 %s11, 2
    %s18 = sadd.s32 %s11, 1
    %s19 = ssub.s32 %s11, %s18
    %p20 = scmp.eq.s32.totalorder %s19, 0
    %s22 = sadd.s32 %s21, 1
    %s23 = scalar_select %p20, %s21, %s22
    %p26 = pneg %p20
    %p27 = scmp.eq.s32.totalorder %s11, 1
    %p28 = por %p26, %p27
    %p29 = scmp.ne.s32.totalorder %s21, %s24
    %p30 = scmp.eq.s32.totalorder %s11, 0
    %p31 = por %p29, %p30
    %p32 = scmp.ne.s32.totalorder %s21, %s24
    %p33 = scmp.eq.s32.totalorder %s16, 1
    %p34 = por %p32, %p33
    %p35 = scmp.ne.s32.totalorder %s24, %s25
    %p36 = scmp.eq.s32.totalorder %s16, 0
    %p37 = por %p35, %p36
    %p38 = scmp.ne.s32.totalorder %s24, %s25
    %p39 = scmp.eq.s32.totalorder %s17, 1
    %p40 = por %p38, %p39
    %p42 = scmp.ne.s32.totalorder %s25, %s41
    %p43 = scmp.eq.s32.totalorder %s17, 0
    %p44 = por %p42, %p43
    %s46 = sadd.s32 %s45, 1
    %p49 = scmp.eq.s32.totalorder %s11, 1
    %p50 = scmp.ne.s32.totalorder %s45, %s47
    %p51 = scmp.eq.s32.totalorder %s11, 0
    %p52 = por %p50, %p51
    %p53 = scmp.ne.s32.totalorder %s45, %s47
    %p54 = scmp.eq.s32.totalorder %s16, 1
    %p55 = por %p53, %p54
    %p56 = scmp.ne.s32.totalorder %s47, %s48
    %p57 = scmp.eq.s32.totalorder %s16, 0
    %p58 = por %p56, %p57
    %p59 = scmp.ne.s32.totalorder %s47, %s48
    %p60 = scmp.eq.s32.totalorder %s17, 1
    %p61 = por %p59, %p60
    %p63 = scmp.ne.s32.totalorder %s48, %s62
    %p64 = scmp.eq.s32.totalorder %s17, 0
    %p65 = por %p63, %p64
    %s67 = sadd.s32 %s66, 1
    %p70 = scmp.eq.s32.totalorder %s11, 1
    %p71 = scmp.ne.s32.totalorder %s66, %s68
    %p72 = scmp.eq.s32.totalorder %s11, 0
    %p73 = por %p71, %p72
    %p74 = scmp.ne.s32.totalorder %s66, %s68
    %p75 = scmp.eq.s32.totalorder %s16, 1
    %p76 = por %p74, %p75
    %p77 = scmp.ne.s32.totalorder %s68, %s69
    %p78 = scmp.eq.s32.totalorder %s16, 0
    %p79 = por %p77, %p78
    %p80 = scmp.ne.s32.totalorder %s68, %s69
    %p81 = scmp.eq.s32.totalorder %s17, 1
    %p82 = por %p80, %p81
    %p84 = scmp.ne.s32.totalorder %s69, %s83
    %p85 = scmp.eq.s32.totalorder %s17, 0
    %p86 = por %p84, %p85
    %s88 = sadd.s32 %s87, 1
    %p91 = scmp.eq.s32.totalorder %s11, 1
    %p92 = scmp.ne.s32.totalorder %s87, %s89
    %p93 = scmp.eq.s32.totalorder %s11, 0
    %p94 = por %p92, %p93
    %p95 = scmp.ne.s32.totalorder %s87, %s89
    %p96 = scmp.eq.s32.totalorder %s16, 1
    %p97 = por %p95, %p96
    %p98 = scmp.ne.s32.totalorder %s89, %s90
    %p99 = scmp.eq.s32.totalorder %s16, 0
    %p100 = por %p98, %p99
    %p101 = scmp.ne.s32.totalorder %s89, %s90
    %p102 = scmp.eq.s32.totalorder %s17, 1
    %p103 = por %p101, %p102
    %p105 = scmp.ne.s32.totalorder %s90, %s104
    %p106 = scmp.eq.s32.totalorder %s17, 0
    %p107 = por %p105, %p106
    %s109 = sadd.s32 %s108, 1
    %p112 = scmp.eq.s32.totalorder %s11, 1
    %p113 = scmp.ne.s32.totalorder %s108, %s110
    %p114 = scmp.eq.s32.totalorder %s11, 0
    %p115 = por %p113, %p114
    %p116 = scmp.ne.s32.totalorder %s108, %s110
    %p117 = scmp.eq.s32.totalorder %s16, 1
    %p118 = por %p116, %p117
    %p119 = scmp.ne.s32.totalorder %s110, %s111
    %p120 = scmp.eq.s32.totalorder %s16, 0
    %p121 = por %p119, %p120
    %p122 = scmp.ne.s32.totalorder %s110, %s111
    %p123 = scmp.eq.s32.totalorder %s17, 1
    %p124 = por %p122, %p123
    %p126 = scmp.ne.s32.totalorder %s111, %s125
    %p127 = scmp.eq.s32.totalorder %s17, 0
    %p128 = por %p126, %p127
    %s129 = ssub.s32 %s11, %s18
    %p130 = scmp.eq.s32.totalorder %s129, 0
    %s132 = sadd.s32 %s131, 1
    %s133 = scalar_select %p130, %s131, %s132
    %p136 = pneg %p130
    %p137 = scmp.eq.s32.totalorder %s11, 1
    %p138 = por %p136, %p137
    %p139 = scmp.ne.s32.totalorder %s131, %s134
    %p140 = scmp.eq.s32.totalorder %s11, 0
    %p141 = por %p139, %p140
    %p142 = scmp.ne.s32.totalorder %s131, %s134
    %p143 = scmp.eq.s32.totalorder %s16, 1
    %p144 = por %p142, %p143
    %p145 = scmp.ne.s32.totalorder %s134, %s135
    %p146 = scmp.eq.s32.totalorder %s16, 0
    %p147 = por %p145, %p146
    %p148 = scmp.ne.s32.totalorder %s134, %s135
    %p149 = scmp.eq.s32.totalorder %s17, 1
    %p150 = por %p148, %p149
    %p152 = scmp.ne.s32.totalorder %s135, %s151
    %p153 = scmp.eq.s32.totalorder %s17, 0
    %p154 = por %p152, %p153
    %p155 = scmp.le.s32.totalorder 1, %s11
    %p156 = scmp.lt.s32.totalorder %s11, 3
    %p157 = pnand %p155, %p156
    %p158 = pneg %p157
    // Predicated region
    $region9: #{efficient_double_conv.1} parent=5 // pred_check
      _
    $region10: #{efficient_double_conv.1} parent=5 // pred_check_branch
      %160 = sbr.rel (%p157) target = $region12
    $region11: #{efficient_double_conv.1} parent=5 // pred_region
      %s161 = ssub.s32 %s11, 1
      // Predicated region
      $region13: #{efficient_double_conv.1} parent=11 // pred_check
        %p162 = pneg %p58
      $region14: #{efficient_double_conv.1} parent=11 // pred_check_branch
        %164 = sbr.rel (%p162) target = $region16
      $region15: #{efficient_double_conv.1} parent=11 // pred_region
        _
      $region16: #{efficient_double_conv.1} parent=11 // pred_fallthru
        _
      // Predicated region
      $region17: #{efficient_double_conv.1} parent=11 // pred_check
        %p165 = pneg %p79
      $region18: #{efficient_double_conv.1} parent=11 // pred_check_branch
        %167 = sbr.rel (%p165) target = $region20
      $region19: #{efficient_double_conv.1} parent=11 // pred_region
        _
      $region20: #{efficient_double_conv.1} parent=11 // pred_fallthru
        _
      // Predicated region
      $region21: #{efficient_double_conv.1} parent=11 // pred_check
        %p168 = pneg %p100
      $region22: #{efficient_double_conv.1} parent=11 // pred_check_branch
        %170 = sbr.rel (%p168) target = $region24
      $region23: #{efficient_double_conv.1} parent=11 // pred_region
        _
      $region24: #{efficient_double_conv.1} parent=11 // pred_fallthru
        _
      // Predicated region
      $region25: #{efficient_double_conv.1} parent=11 // pred_check
        %p171 = pneg %p121
      $region26: #{efficient_double_conv.1} parent=11 // pred_check_branch
        %173 = sbr.rel (%p171) target = $region28
      $region27: #{efficient_double_conv.1} parent=11 // pred_region
        _
      $region28: #{efficient_double_conv.1} parent=11 // pred_fallthru
        _
    $region12: #{efficient_double_conv.1} parent=5 // pred_fallthru
      _
    %p174 = scmp.lt.s32.totalorder %s11, 2
    // Predicated region
    $region29: #{efficient_double_conv.1} parent=5 // pred_check
      %p175 = pneg %p174
    $region30: #{efficient_double_conv.1} parent=5 // pred_check_branch
      %177 = sbr.rel (%p175) target = $region32
    $region31: #{efficient_double_conv.1} parent=5 // pred_region
      // Predicated region
      $region33: #{efficient_double_conv.1} parent=31 // pred_check
        %p178 = pneg %p31
      $region34: #{efficient_double_conv.1} parent=31 // pred_check_branch
        %180 = sbr.rel (%p178) target = $region36
      $region35: #{efficient_double_conv.1} parent=31 // pred_region
        %p181 = scmp.lt.s32.totalorder %s11, 1
        %s182 = scalar_select %p181, %s11, 1
        %s183 = smul.addr %s182, 32
        %s184 = smul.addr %s183, 4
        %s185 = scalar_lea.vmem %s0, %s184
      $region36: #{efficient_double_conv.1} parent=31 // pred_fallthru
        _
    $region32: #{efficient_double_conv.1} parent=5 // pred_fallthru
      _
    %p186 = scmp.le.s32.totalorder 1, %s11
    %p187 = scmp.lt.s32.totalorder %s11, 3
    %p188 = pnand %p186, %p187
    %p189 = pneg %p188
    // Predicated region
    $region37: #{efficient_double_conv.1} parent=5 // pred_check
      _
    $region38: #{efficient_double_conv.1} parent=5 // pred_check_branch
      %191 = sbr.rel (%p188) target = $region40
    $region39: #{efficient_double_conv.1} parent=5 // pred_region
      %s192 = ssub.s32 %s11, 1
      %p193 = scmp.lt.s32.totalorder %s16, 1
      %s194 = scalar_select %p193, %s16, 1
      %s195 = smul.addr %s194, 32
      %s196 = smul.addr %s195, 4
      %s197 = scalar_lea.vmem %s0, %s196
      %p198 = pneg %p37
      %p199 = pneg %p34
      %p200 = pneg %p58
      %p201 = pneg %p55
      %p202 = pneg %p79
      %p203 = pneg %p76
      %p204 = pneg %p100
      %p205 = pneg %p97
      %p206 = pneg %p121
      %p207 = pneg %p118
      %p208 = pneg %p147
      %p209 = pneg %p144
      %p210 = scmp.lt.s32.totalorder %s16, 1
      %s211 = scalar_select %p210, %s16, 1
      %s212 = smul.addr %s211, 32
      %s213 = smul.addr %s212, 8
      %s214 = scalar_lea.vmem %s5, %s213
      %p215 = scmp.lt.s32.totalorder %s16, 1
      %s216 = scalar_select %p215, %s16, 1
      %s217 = smul.addr %s216, 32
      %s218 = smul.addr %s217, 4
      %s219 = scalar_lea.vmem %s0, %s218
      %p220 = scmp.lt.s32.totalorder %s16, 1
      %s221 = scalar_select %p220, %s16, 1
      %s222 = smul.addr %s221, 32
      %s223 = smul.addr %s222, 8
      %s224 = scalar_lea.vmem %s5, %s223
      %v226 = vld [vmem:[%s219] sm:$0xf]
      %v227 = vld [vmem:[%s219 + $0x4] sm:$0xf]
      %v228 = vld [vmem:[%s219 + $0x8] sm:$0xf]
      %v229 = vld [vmem:[%s219 + $0xc] sm:$0xf]
      %v230 = vld [vmem:[%s219 + $0x10] sm:$0xf]
      %v231 = vld [vmem:[%s219 + $0x14] sm:$0xf]
      %v232 = vld [vmem:[%s219 + $0x18] sm:$0xf]
      %v233 = vld [vmem:[%s219 + $0x1c] sm:$0xf]
      %v234 = vld [vmem:[%s219 + $0x20] sm:$0xf]
      %v235 = vld [vmem:[%s219 + $0x24] sm:$0xf]
      %v236 = vld [vmem:[%s219 + $0x28] sm:$0xf]
      %v237 = vld [vmem:[%s219 + $0x2c] sm:$0xf]
      %v238 = vld [vmem:[%s219 + $0x30] sm:$0xf]
      %v239 = vld [vmem:[%s219 + $0x34] sm:$0xf]
      %v240 = vld [vmem:[%s219 + $0x38] sm:$0xf]
      %v241 = vld [vmem:[%s219 + $0x3c] sm:$0xf]
      %v242 = vld [vmem:[%s219 + $0x40] sm:$0xf]
      %v243 = vld [vmem:[%s219 + $0x44] sm:$0xf]
      %v244 = vld [vmem:[%s219 + $0x48] sm:$0xf]
      %v245 = vld [vmem:[%s219 + $0x4c] sm:$0xf]
      %v246 = vld [vmem:[%s219 + $0x50] sm:$0xf]
      %v247 = vld [vmem:[%s219 + $0x54] sm:$0xf]
      %v248 = vld [vmem:[%s219 + $0x58] sm:$0xf]
      %v249 = vld [vmem:[%s219 + $0x5c] sm:$0xf]
      %v250 = vld [vmem:[%s219 + $0x60] sm:$0xf]
      %v251 = vld [vmem:[%s219 + $0x64] sm:$0xf]
      %v252 = vld [vmem:[%s219 + $0x68] sm:$0xf]
      %v253 = vld [vmem:[%s219 + $0x6c] sm:$0xf]
      %v254 = vld [vmem:[%s219 + $0x70] sm:$0xf]
      %v255 = vld [vmem:[%s219 + $0x74] sm:$0xf]
      %v256 = vld [vmem:[%s219 + $0x78] sm:$0xf]
      %v257 = vld [vmem:[%s219 + $0x7c] sm:$0xf]
      %v258 = vld [vmem:[%s1] sm:$0xf]
      %v259 = vld [vmem:[%s1 + $0x4] sm:$0xf]
      %v260 = vld [vmem:[%s1 + $0x8] sm:$0xf]
      %v261 = vld [vmem:[%s1 + $0xc] sm:$0xf]
      %v262 = vld [vmem:[%s1 + $0x10] sm:$0xf]
      %v263 = vld [vmem:[%s1 + $0x14] sm:$0xf]
      %v264 = vld [vmem:[%s1 + $0x18] sm:$0xf]
      %v265 = vld [vmem:[%s1 + $0x1c] sm:$0xf]
      %v266 = vld [vmem:[%s1 + $0x20] sm:$0xf]
      %v267 = vld [vmem:[%s1 + $0x24] sm:$0xf]
      %v268 = vld [vmem:[%s1 + $0x28] sm:$0xf]
      %v269 = vld [vmem:[%s1 + $0x2c] sm:$0xf]
      %v270 = vld [vmem:[%s1 + $0x30] sm:$0xf]
      %v271 = vld [vmem:[%s1 + $0x34] sm:$0xf]
      %v272 = vld [vmem:[%s1 + $0x38] sm:$0xf]
      %v273 = vld [vmem:[%s1 + $0x3c] sm:$0xf]
      %v274 = vld [vmem:[%s2] sm:$0x1]
      %v276 = vlaneseq
      %v277 = vshrl.u32 %v276, 7
      %v278 = vsub.s32 0, %v277
      %v279 = vrot.slane %v274, %v278
      %v313 = vunpack.c.l.b16 %v226
      %v314 = vunpack.c.l.b16 %v227
      %v315 = vunpack.c.l.b16 %v228
      %v316 = vunpack.c.l.b16 %v229
      %v317 = vunpack.c.l.b16 %v230
      %v318 = vunpack.c.l.b16 %v231
      %v319 = vunpack.c.l.b16 %v232
      %v320 = vunpack.c.l.b16 %v233
      %v321 = vunpack.c.l.b16 %v234
      %v322 = vunpack.c.l.b16 %v235
      %v323 = vunpack.c.l.b16 %v236
      %v324 = vunpack.c.l.b16 %v237
      %v325 = vunpack.c.l.b16 %v238
      %v326 = vunpack.c.l.b16 %v239
      %v327 = vunpack.c.l.b16 %v240
      %v328 = vunpack.c.l.b16 %v241
      %v329 = vunpack.c.l.b16 %v242
      %v330 = vunpack.c.l.b16 %v243
      %v331 = vunpack.c.l.b16 %v244
      %v332 = vunpack.c.l.b16 %v245
      %v333 = vunpack.c.l.b16 %v246
      %v334 = vunpack.c.l.b16 %v247
      %v335 = vunpack.c.l.b16 %v248
      %v336 = vunpack.c.l.b16 %v249
      %v337 = vunpack.c.l.b16 %v250
      %v338 = vunpack.c.l.b16 %v251
      %v339 = vunpack.c.l.b16 %v252
      %v340 = vunpack.c.l.b16 %v253
      %v341 = vunpack.c.l.b16 %v254
      %v342 = vunpack.c.l.b16 %v255
      %v343 = vunpack.c.l.b16 %v256
      %v344 = vunpack.c.l.b16 %v257
      %v345 = vpack.c.b16 %v314, %v313
      %v346 = vpack.c.b16 %v316, %v315
      %v347 = vpack.c.b16 %v318, %v317
      %v348 = vpack.c.b16 %v320, %v319
      %v349 = vpack.c.b16 %v322, %v321
      %v350 = vpack.c.b16 %v324, %v323
      %v351 = vpack.c.b16 %v326, %v325
      %v352 = vpack.c.b16 %v328, %v327
      %v353 = vpack.c.b16 %v330, %v329
      %v354 = vpack.c.b16 %v332, %v331
      %v355 = vpack.c.b16 %v334, %v333
      %v356 = vpack.c.b16 %v336, %v335
      %v357 = vpack.c.b16 %v338, %v337
      %v358 = vpack.c.b16 %v340, %v339
      %v359 = vpack.c.b16 %v342, %v341
      %v360 = vpack.c.b16 %v344, %v343
      %v393 = vunpack.c.l.b16 %v258
      %v394 = vunpack.c.l.b16 %v259
      %v395 = vunpack.c.l.b16 %v260
      %v396 = vunpack.c.l.b16 %v261
      %v397 = vunpack.c.l.b16 %v262
      %v398 = vunpack.c.l.b16 %v263
      %v399 = vunpack.c.l.b16 %v264
      %v400 = vunpack.c.l.b16 %v265
      %v401 = vunpack.c.l.b16 %v266
      %v402 = vunpack.c.l.b16 %v267
      %v403 = vunpack.c.l.b16 %v268
      %v404 = vunpack.c.l.b16 %v269
      %v405 = vunpack.c.l.b16 %v270
      %v406 = vunpack.c.l.b16 %v271
      %v407 = vunpack.c.l.b16 %v272
      %v408 = vunpack.c.l.b16 %v273
      %v409 = vpack.c.b16 %v394, %v393
      %v410 = vpack.c.b16 %v396, %v395
      %v411 = vpack.c.b16 %v398, %v397
      %v412 = vpack.c.b16 %v400, %v399
      %v413 = vpack.c.b16 %v402, %v401
      %v414 = vpack.c.b16 %v404, %v403
      %v415 = vpack.c.b16 %v406, %v405
      %v416 = vpack.c.b16 %v408, %v407
      %425 = vmatprep.subr.bf16.mxu0 0
      %426 = vmatpush1.bf16.msra.mxu0 %v409
      %427 = vmatprep.subr.bf16.mxu0 0
      %428 = vmatpush1.bf16.msra.mxu0 %v410
      %429 = vmatprep.subr.bf16.mxu0 0
      %430 = vmatpush1.bf16.msra.mxu0 %v411
      %431 = vmatprep.subr.bf16.mxu0 0
      %432 = vmatpush1.bf16.msra.mxu0 %v412
      %433 = vmatprep.subr.bf16.mxu0 0
      %434 = vmatpush1.bf16.msra.mxu0 %v413
      %435 = vmatprep.subr.bf16.mxu0 0
      %436 = vmatpush1.bf16.msra.mxu0 %v414
      %437 = vmatprep.subr.bf16.mxu0 0
      %438 = vmatpush1.bf16.msra.mxu0 %v415
      %439 = vmatprep.subr.bf16.mxu0 0
      %440 = vmatpush1.bf16.msra.mxu0 %v416
      %441 = vmatprep.subr.bf16.mxu0 0
      %442 = vmatpush1.bf16.msra.mxu0 0
      %443 = vmatprep.subr.bf16.mxu0 0
      %444 = vmatpush1.bf16.msra.mxu0 0
      %445 = vmatprep.subr.bf16.mxu0 0
      %446 = vmatpush1.bf16.msra.mxu0 0
      %447 = vmatprep.subr.bf16.mxu0 0
      %448 = vmatpush1.bf16.msra.mxu0 0
      %449 = vmatprep.subr.bf16.mxu0 0
      %450 = vmatpush1.bf16.msra.mxu0 0
      %451 = vmatprep.subr.bf16.mxu0 0
      %452 = vmatpush1.bf16.msra.mxu0 0
      %453 = vmatprep.subr.bf16.mxu0 0
      %454 = vmatpush1.bf16.msra.mxu0 0
      %455 = vmatprep.subr.bf16.mxu0 0
      %456 = vmatpush1.bf16.msra.mxu0 0
      %457 = vmatprep.mubr.bf16.mxu0 0
      %458 = vmatmul.mubr.bf16.gmra.mrb[0].mxu0 %v345
      %v459 = vpop.f32.mrb[0].mxu0
      %v460 = vadd.f32 %v279, %v459
      %v461 = vpop.f32.mrb[0].mxu0
      %v462 = vpop.f32.mrb[0].mxu0
      %v463 = vadd.f32 %v279, %v462
      %v464 = vpop.f32.mrb[0].mxu0
      %465 = vmatprep.mubr.bf16.mxu0 0
      %466 = vmatmul.mubr.bf16.gmra.mrb[0].mxu0 %v346
      %v467 = vpop.f32.mrb[0].mxu0
      %v468 = vadd.f32 %v279, %v467
      %v469 = vpop.f32.mrb[0].mxu0
      %v470 = vpop.f32.mrb[0].mxu0
      %v471 = vadd.f32 %v279, %v470
      %v472 = vpop.f32.mrb[0].mxu0
      %473 = vmatprep.mubr.bf16.mxu0 0
      %474 = vmatmul.mubr.bf16.gmra.mrb[0].mxu0 %v347
      %v475 = vpop.f32.mrb[0].mxu0
      %v476 = vadd.f32 %v279, %v475
      %v477 = vpop.f32.mrb[0].mxu0
      %v478 = vpop.f32.mrb[0].mxu0
      %v479 = vadd.f32 %v279, %v478
      %v480 = vpop.f32.mrb[0].mxu0
      %481 = vmatprep.mubr.bf16.mxu0 0
      %482 = vmatmul.mubr.bf16.gmra.mrb[0].mxu0 %v348
      %v483 = vpop.f32.mrb[0].mxu0
      %v484 = vadd.f32 %v279, %v483
      %v485 = vpop.f32.mrb[0].mxu0
      %v486 = vpop.f32.mrb[0].mxu0
      %v487 = vadd.f32 %v279, %v486
      %v488 = vpop.f32.mrb[0].mxu0
      %489 = vmatprep.mubr.bf16.mxu0 0
      %490 = vmatmul.mubr.bf16.gmra.mrb[0].mxu0 %v349
      %v491 = vpop.f32.mrb[0].mxu0
      %v492 = vadd.f32 %v279, %v491
      %v493 = vpop.f32.mrb[0].mxu0
      %v494 = vpop.f32.mrb[0].mxu0
      %v495 = vadd.f32 %v279, %v494
      %v496 = vpop.f32.mrb[0].mxu0
      %497 = vmatprep.mubr.bf16.mxu0 0
      %498 = vmatmul.mubr.bf16.gmra.mrb[0].mxu0 %v350
      %v499 = vpop.f32.mrb[0].mxu0
      %v500 = vadd.f32 %v279, %v499
      %v501 = vpop.f32.mrb[0].mxu0
      %v502 = vpop.f32.mrb[0].mxu0
      %v503 = vadd.f32 %v279, %v502
      %v504 = vpop.f32.mrb[0].mxu0
      %505 = vmatprep.mubr.bf16.mxu0 0
      %506 = vmatmul.mubr.bf16.gmra.mrb[0].mxu0 %v351
      %v507 = vpop.f32.mrb[0].mxu0
      %v508 = vadd.f32 %v279, %v507
      %v509 = vpop.f32.mrb[0].mxu0
      %v510 = vpop.f32.mrb[0].mxu0
      %v511 = vadd.f32 %v279, %v510
      %v512 = vpop.f32.mrb[0].mxu0
      %513 = vmatprep.mubr.bf16.mxu0 0
      %514 = vmatmul.mubr.bf16.gmra.mrb[0].mxu0 %v352
      %v515 = vpop.f32.mrb[0].mxu0
      %v516 = vadd.f32 %v279, %v515
      %v517 = vpop.f32.mrb[0].mxu0
      %v518 = vpop.f32.mrb[0].mxu0
      %v519 = vadd.f32 %v279, %v518
      %v520 = vpop.f32.mrb[0].mxu0
      %521 = vmatprep.mubr.bf16.mxu0 0
      %522 = vmatmul.mubr.bf16.gmra.mrb[0].mxu0 %v353
      %v523 = vpop.f32.mrb[0].mxu0
      %v524 = vadd.f32 %v279, %v523
      %v525 = vpop.f32.mrb[0].mxu0
      %v526 = vpop.f32.mrb[0].mxu0
      %v527 = vadd.f32 %v279, %v526
      %v528 = vpop.f32.mrb[0].mxu0
      %529 = vmatprep.mubr.bf16.mxu0 0
      %530 = vmatmul.mubr.bf16.gmra.mrb[0].mxu0 %v354
      %v531 = vpop.f32.mrb[0].mxu0
      %v532 = vadd.f32 %v279, %v531
      %v533 = vpop.f32.mrb[0].mxu0
      %v534 = vpop.f32.mrb[0].mxu0
      %v535 = vadd.f32 %v279, %v534
      %v536 = vpop.f32.mrb[0].mxu0
      %537 = vmatprep.mubr.bf16.mxu0 0
      %538 = vmatmul.mubr.bf16.gmra.mrb[0].mxu0 %v355
      %v539 = vpop.f32.mrb[0].mxu0
      %v540 = vadd.f32 %v279, %v539
      %v541 = vpop.f32.mrb[0].mxu0
      %v542 = vpop.f32.mrb[0].mxu0
      %v543 = vadd.f32 %v279, %v542
      %v544 = vpop.f32.mrb[0].mxu0
      %545 = vmatprep.mubr.bf16.mxu0 0
      %546 = vmatmul.mubr.bf16.gmra.mrb[0].mxu0 %v356
      %v547 = vpop.f32.mrb[0].mxu0
      %v548 = vadd.f32 %v279, %v547
      %v549 = vpop.f32.mrb[0].mxu0
      %v550 = vpop.f32.mrb[0].mxu0
      %v551 = vadd.f32 %v279, %v550
      %v552 = vpop.f32.mrb[0].mxu0
      %553 = vmatprep.mubr.bf16.mxu0 0
      %554 = vmatmul.mubr.bf16.gmra.mrb[0].mxu0 %v357
      %v555 = vpop.f32.mrb[0].mxu0
      %v556 = vadd.f32 %v279, %v555
      %v557 = vpop.f32.mrb[0].mxu0
      %v558 = vpop.f32.mrb[0].mxu0
      %v559 = vadd.f32 %v279, %v558
      %v560 = vpop.f32.mrb[0].mxu0
      %561 = vmatprep.mubr.bf16.mxu0 0
      %562 = vmatmul.mubr.bf16.gmra.mrb[0].mxu0 %v358
      %v563 = vpop.f32.mrb[0].mxu0
      %v564 = vadd.f32 %v279, %v563
      %v565 = vpop.f32.mrb[0].mxu0
      %v566 = vpop.f32.mrb[0].mxu0
      %v567 = vadd.f32 %v279, %v566
      %v568 = vpop.f32.mrb[0].mxu0
      %569 = vmatprep.mubr.bf16.mxu0 0
      %570 = vmatmul.mubr.bf16.gmra.mrb[0].mxu0 %v359
      %v571 = vpop.f32.mrb[0].mxu0
      %v572 = vadd.f32 %v279, %v571
      %v573 = vpop.f32.mrb[0].mxu0
      %v574 = vpop.f32.mrb[0].mxu0
      %v575 = vadd.f32 %v279, %v574
      %v576 = vpop.f32.mrb[0].mxu0
      %577 = vmatprep.mubr.bf16.mxu0 0
      %578 = vmatmul.mubr.bf16.gmra.mrb[0].mxu0 %v360
      %v579 = vpop.f32.mrb[0].mxu0
      %v580 = vadd.f32 %v279, %v579
      %v581 = vpop.f32.mrb[0].mxu0
      %v582 = vpop.f32.mrb[0].mxu0
      %v583 = vadd.f32 %v279, %v582
      %v584 = vpop.f32.mrb[0].mxu0
      %585 = vdwg.mxu0
      %v586 = vmax.f32 %v460, 0.0
      %v587 = vmax.f32 %v463, 0.0
      %v588 = vmax.f32 %v468, 0.0
      %v589 = vmax.f32 %v471, 0.0
      %v590 = vmax.f32 %v476, 0.0
      %v591 = vmax.f32 %v479, 0.0
      %v592 = vmax.f32 %v484, 0.0
      %v593 = vmax.f32 %v487, 0.0
      %v594 = vmax.f32 %v492, 0.0
      %v595 = vmax.f32 %v495, 0.0
      %v596 = vmax.f32 %v500, 0.0
      %v597 = vmax.f32 %v503, 0.0
      %v598 = vmax.f32 %v508, 0.0
      %v599 = vmax.f32 %v511, 0.0
      %v600 = vmax.f32 %v516, 0.0
      %v601 = vmax.f32 %v519, 0.0
      %v602 = vmax.f32 %v524, 0.0
      %v603 = vmax.f32 %v527, 0.0
      %v604 = vmax.f32 %v532, 0.0
      %v605 = vmax.f32 %v535, 0.0
      %v606 = vmax.f32 %v540, 0.0
      %v607 = vmax.f32 %v543, 0.0
      %v608 = vmax.f32 %v548, 0.0
      %v609 = vmax.f32 %v551, 0.0
      %v610 = vmax.f32 %v556, 0.0
      %v611 = vmax.f32 %v559, 0.0
      %v612 = vmax.f32 %v564, 0.0
      %v613 = vmax.f32 %v567, 0.0
      %v614 = vmax.f32 %v572, 0.0
      %v615 = vmax.f32 %v575, 0.0
      %v616 = vmax.f32 %v580, 0.0
      %v617 = vmax.f32 %v583, 0.0
      %618 = vst [vmem:[#allocation2] sm:$0xff] 0.0
      %619 = vst [vmem:[#allocation2 + $0x8] sm:$0xff] 0.0
      %620 = vst [vmem:[#allocation2 + $0x10] sm:$0x3] 0.0
      %s621 = scalar_lea.vmem [#allocation2], 408
      %622 = vst [vmem:[%s621] sm:$0xff] 0.0
      %623 = vst [vmem:[%s621 + $0x8] sm:$0xff] 0.0
      %624 = vst [vmem:[%s621 + $0x10] sm:$0x3] 0.0
      %625 = vst [vmem:[#allocation2] sm:$0x1] 0.0
      %626 = vst [vmem:[#allocation2 + $0x18] sm:$0x1] 0.0
      %627 = vst [vmem:[#allocation2 + $0x30] sm:$0x1] 0.0
      %628 = vst [vmem:[#allocation2 + $0x48] sm:$0x1] 0.0
      %629 = vst [vmem:[#allocation2 + $0x60] sm:$0x1] 0.0
      %630 = vst [vmem:[#allocation2 + $0x78] sm:$0x1] 0.0
      %631 = vst [vmem:[#allocation2 + $0x90] sm:$0x1] 0.0
      %632 = vst [vmem:[#allocation2 + $0xa8] sm:$0x1] 0.0
      %633 = vst [vmem:[#allocation2 + $0xc0] sm:$0x1] 0.0
      %634 = vst [vmem:[#allocation2 + $0xd8] sm:$0x1] 0.0
      %635 = vst [vmem:[#allocation2 + $0xf0] sm:$0x1] 0.0
      %636 = vst [vmem:[#allocation2 + $0x108] sm:$0x1] 0.0
      %637 = vst [vmem:[#allocation2 + $0x120] sm:$0x1] 0.0
      %638 = vst [vmem:[#allocation2 + $0x138] sm:$0x1] 0.0
      %639 = vst [vmem:[#allocation2 + $0x150] sm:$0x1] 0.0
      %640 = vst [vmem:[#allocation2 + $0x168] sm:$0x1] 0.0
      %641 = vst [vmem:[#allocation2 + $0x180] sm:$0x1] 0.0
      %642 = vst [vmem:[#allocation2 + $0x198] sm:$0x1] 0.0
      %643 = vst [vmem:[#allocation2 + $0x11] sm:$0x1] 0.0
      %644 = vst [vmem:[#allocation2 + $0x29] sm:$0x1] 0.0
      %645 = vst [vmem:[#allocation2 + $0x41] sm:$0x1] 0.0
      %646 = vst [vmem:[#allocation2 + $0x59] sm:$0x1] 0.0
      %647 = vst [vmem:[#allocation2 + $0x71] sm:$0x1] 0.0
      %648 = vst [vmem:[#allocation2 + $0x89] sm:$0x1] 0.0
      %649 = vst [vmem:[#allocation2 + $0xa1] sm:$0x1] 0.0
      %650 = vst [vmem:[#allocation2 + $0xb9] sm:$0x1] 0.0
      %651 = vst [vmem:[#allocation2 + $0xd1] sm:$0x1] 0.0
      %652 = vst [vmem:[#allocation2 + $0xe9] sm:$0x1] 0.0
      %653 = vst [vmem:[#allocation2 + $0x101] sm:$0x1] 0.0
      %654 = vst [vmem:[#allocation2 + $0x119] sm:$0x1] 0.0
      %655 = vst [vmem:[#allocation2 + $0x131] sm:$0x1] 0.0
      %656 = vst [vmem:[#allocation2 + $0x149] sm:$0x1] 0.0
      %657 = vst [vmem:[#allocation2 + $0x161] sm:$0x1] 0.0
      %658 = vst [vmem:[#allocation2 + $0x179] sm:$0x1] 0.0
      %659 = vst [vmem:[#allocation2 + $0x191] sm:$0x1] 0.0
      %660 = vst [vmem:[#allocation2 + $0x1a9] sm:$0x1] 0.0
      %s661 = scalar_lea.vmem [#allocation2], 24
      %662 = vst [vmem:[%s661 + $0x1] sm:$0xff] %v586
      %663 = vst [vmem:[%s661 + $0x9] sm:$0xff] %v587
      %664 = vst [vmem:[%s661 + $0x19] sm:$0xff] %v588
      %665 = vst [vmem:[%s661 + $0x21] sm:$0xff] %v589
      %666 = vst [vmem:[%s661 + $0x31] sm:$0xff] %v590
      %667 = vst [vmem:[%s661 + $0x39] sm:$0xff] %v591
      %668 = vst [vmem:[%s661 + $0x49] sm:$0xff] %v592
      %669 = vst [vmem:[%s661 + $0x51] sm:$0xff] %v593
      %670 = vst [vmem:[%s661 + $0x61] sm:$0xff] %v594
      %671 = vst [vmem:[%s661 + $0x69] sm:$0xff] %v595
      %672 = vst [vmem:[%s661 + $0x79] sm:$0xff] %v596
      %673 = vst [vmem:[%s661 + $0x81] sm:$0xff] %v597
      %674 = vst [vmem:[%s661 + $0x91] sm:$0xff] %v598
      %675 = vst [vmem:[%s661 + $0x99] sm:$0xff] %v599
      %676 = vst [vmem:[%s661 + $0xa9] sm:$0xff] %v600
      %677 = vst [vmem:[%s661 + $0xb1] sm:$0xff] %v601
      %678 = vst [vmem:[%s661 + $0xc1] sm:$0xff] %v602
      %679 = vst [vmem:[%s661 + $0xc9] sm:$0xff] %v603
      %680 = vst [vmem:[%s661 + $0xd9] sm:$0xff] %v604
      %681 = vst [vmem:[%s661 + $0xe1] sm:$0xff] %v605
      %682 = vst [vmem:[%s661 + $0xf1] sm:$0xff] %v606
      %683 = vst [vmem:[%s661 + $0xf9] sm:$0xff] %v607
      %684 = vst [vmem:[%s661 + $0x109] sm:$0xff] %v608
      %685 = vst [vmem:[%s661 + $0x111] sm:$0xff] %v609
      %686 = vst [vmem:[%s661 + $0x121] sm:$0xff] %v610
      %687 = vst [vmem:[%s661 + $0x129] sm:$0xff] %v611
      %688 = vst [vmem:[%s661 + $0x139] sm:$0xff] %v612
      %689 = vst [vmem:[%s661 + $0x141] sm:$0xff] %v613
      %690 = vst [vmem:[%s661 + $0x151] sm:$0xff] %v614
      %691 = vst [vmem:[%s661 + $0x159] sm:$0xff] %v615
      %692 = vst [vmem:[%s661 + $0x169] sm:$0xff] %v616
      %693 = vst [vmem:[%s661 + $0x171] sm:$0xff] %v617
      %v694 = vld [vmem:[#allocation2] sm:$0xff]
      %v695 = vld [vmem:[#allocation2 + $0x8] sm:$0xff]
      %v696 = vld [vmem:[#allocation2 + $0x18] sm:$0xff]
      %v697 = vld [vmem:[#allocation2 + $0x20] sm:$0xff]
      %v698 = vld [vmem:[#allocation2 + $0x30] sm:$0xff]
      %v699 = vld [vmem:[#allocation2 + $0x38] sm:$0xff]
      %v700 = vld [vmem:[#allocation2 + $0x48] sm:$0xff]
      %v701 = vld [vmem:[#allocation2 + $0x50] sm:$0xff]
      %v702 = vld [vmem:[#allocation2 + $0x60] sm:$0xff]
      %v703 = vld [vmem:[#allocation2 + $0x68] sm:$0xff]
      %v704 = vld [vmem:[#allocation2 + $0x78] sm:$0xff]
      %v705 = vld [vmem:[#allocation2 + $0x80] sm:$0xff]
      %v706 = vld [vmem:[#allocation2 + $0x90] sm:$0xff]
      %v707 = vld [vmem:[#allocation2 + $0x98] sm:$0xff]
      %v708 = vld [vmem:[#allocation2 + $0xa8] sm:$0xff]
      %v709 = vld [vmem:[#allocation2 + $0xb0] sm:$0xff]
      %v710 = vld [vmem:[#allocation2 + $0xc0] sm:$0xff]
      %v711 = vld [vmem:[#allocation2 + $0xc8] sm:$0xff]
      %v712 = vld [vmem:[#allocation2 + $0xd8] sm:$0xff]
      %v713 = vld [vmem:[#allocation2 + $0xe0] sm:$0xff]
      %v714 = vld [vmem:[#allocation2 + $0xf0] sm:$0xff]
      %v715 = vld [vmem:[#allocation2 + $0xf8] sm:$0xff]
      %v716 = vld [vmem:[#allocation2 + $0x108] sm:$0xff]
      %v717 = vld [vmem:[#allocation2 + $0x110] sm:$0xff]
      %v718 = vld [vmem:[#allocation2 + $0x120] sm:$0xff]
      %v719 = vld [vmem:[#allocation2 + $0x128] sm:$0xff]
      %v720 = vld [vmem:[#allocation2 + $0x138] sm:$0xff]
      %v721 = vld [vmem:[#allocation2 + $0x140] sm:$0xff]
      %v722 = vld [vmem:[#allocation2 + $0x150] sm:$0xff]
      %v723 = vld [vmem:[#allocation2 + $0x158] sm:$0xff]
      %v724 = vld [vmem:[#allocation2 + $0x168] sm:$0xff]
      %v725 = vld [vmem:[#allocation2 + $0x170] sm:$0xff]
      %v726 = vpack.c.bf16 %v695, %v694
      %v727 = vpack.c.bf16 %v697, %v696
      %v728 = vpack.c.bf16 %v699, %v698
      %v729 = vpack.c.bf16 %v701, %v700
      %v730 = vpack.c.bf16 %v703, %v702
      %v731 = vpack.c.bf16 %v705, %v704
      %v732 = vpack.c.bf16 %v707, %v706
      %v733 = vpack.c.bf16 %v709, %v708
      %v734 = vpack.c.bf16 %v711, %v710
      %v735 = vpack.c.bf16 %v713, %v712
      %v736 = vpack.c.bf16 %v715, %v714
      %v737 = vpack.c.bf16 %v717, %v716
      %v738 = vpack.c.bf16 %v719, %v718
      %v739 = vpack.c.bf16 %v721, %v720
      %v740 = vpack.c.bf16 %v723, %v722
      %v741 = vpack.c.bf16 %v725, %v724
      %v742 = vld [vmem:[%s3] sm:$0xf]
      %v743 = vld [vmem:[%s3 + $0x4] sm:$0xf]
      %v744 = vld [vmem:[%s3 + $0x8] sm:$0xf]
      %v745 = vld [vmem:[%s3 + $0xc] sm:$0xf]
      %v746 = vld [vmem:[%s3 + $0x10] sm:$0xf]
      %v747 = vld [vmem:[%s3 + $0x14] sm:$0xf]
      %v748 = vld [vmem:[%s3 + $0x18] sm:$0xf]
      %v749 = vld [vmem:[%s3 + $0x1c] sm:$0xf]
      %v750 = vld [vmem:[%s3 + $0x20] sm:$0xf]
      %v751 = vld [vmem:[%s3 + $0x24] sm:$0xf]
      %v752 = vld [vmem:[%s3 + $0x28] sm:$0xf]
      %v753 = vld [vmem:[%s3 + $0x2c] sm:$0xf]
      %v754 = vld [vmem:[%s3 + $0x30] sm:$0xf]
      %v755 = vld [vmem:[%s3 + $0x34] sm:$0xf]
      %v756 = vld [vmem:[%s3 + $0x38] sm:$0xf]
      %v757 = vld [vmem:[%s3 + $0x3c] sm:$0xf]
      %v758 = vld [vmem:[#allocation2 + $0x1] sm:$0xff]
      %v759 = vld [vmem:[#allocation2 + $0x9] sm:$0xff]
      %v760 = vld [vmem:[#allocation2 + $0x19] sm:$0xff]
      %v761 = vld [vmem:[#allocation2 + $0x21] sm:$0xff]
      %v762 = vld [vmem:[#allocation2 + $0x31] sm:$0xff]
      %v763 = vld [vmem:[#allocation2 + $0x39] sm:$0xff]
      %v764 = vld [vmem:[#allocation2 + $0x49] sm:$0xff]
      %v765 = vld [vmem:[#allocation2 + $0x51] sm:$0xff]
      %v766 = vld [vmem:[#allocation2 + $0x61] sm:$0xff]
      %v767 = vld [vmem:[#allocation2 + $0x69] sm:$0xff]
      %v768 = vld [vmem:[#allocation2 + $0x79] sm:$0xff]
      %v769 = vld [vmem:[#allocation2 + $0x81] sm:$0xff]
      %v770 = vld [vmem:[#allocation2 + $0x91] sm:$0xff]
      %v771 = vld [vmem:[#allocation2 + $0x99] sm:$0xff]
      %v772 = vld [vmem:[#allocation2 + $0xa9] sm:$0xff]
      %v773 = vld [vmem:[#allocation2 + $0xb1] sm:$0xff]
      %v774 = vld [vmem:[#allocation2 + $0xc1] sm:$0xff]
      %v775 = vld [vmem:[#allocation2 + $0xc9] sm:$0xff]
      %v776 = vld [vmem:[#allocation2 + $0xd9] sm:$0xff]
      %v777 = vld [vmem:[#allocation2 + $0xe1] sm:$0xff]
      %v778 = vld [vmem:[#allocation2 + $0xf1] sm:$0xff]
      %v779 = vld [vmem:[#allocation2 + $0xf9] sm:$0xff]
      %v780 = vld [vmem:[#allocation2 + $0x109] sm:$0xff]
      %v781 = vld [vmem:[#allocation2 + $0x111] sm:$0xff]
      %v782 = vld [vmem:[#allocation2 + $0x121] sm:$0xff]
      %v783 = vld [vmem:[#allocation2 + $0x129] sm:$0xff]
      %v784 = vld [vmem:[#allocation2 + $0x139] sm:$0xff]
      %v785 = vld [vmem:[#allocation2 + $0x141] sm:$0xff]
      %v786 = vld [vmem:[#allocation2 + $0x151] sm:$0xff]
      %v787 = vld [vmem:[#allocation2 + $0x159] sm:$0xff]
      %v788 = vld [vmem:[#allocation2 + $0x169] sm:$0xff]
      %v789 = vld [vmem:[#allocation2 + $0x171] sm:$0xff]
      %v790 = vpack.c.bf16 %v759, %v758
      %v791 = vpack.c.bf16 %v761, %v760
      %v792 = vpack.c.bf16 %v763, %v762
      %v793 = vpack.c.bf16 %v765, %v764
      %v794 = vpack.c.bf16 %v767, %v766
      %v795 = vpack.c.bf16 %v769, %v768
      %v796 = vpack.c.bf16 %v771, %v770
      %v797 = vpack.c.bf16 %v773, %v772
      %v798 = vpack.c.bf16 %v775, %v774
      %v799 = vpack.c.bf16 %v777, %v776
      %v800 = vpack.c.bf16 %v779, %v778
      %v801 = vpack.c.bf16 %v781, %v780
      %v802 = vpack.c.bf16 %v783, %v782
      %v803 = vpack.c.bf16 %v785, %v784
      %v804 = vpack.c.bf16 %v787, %v786
      %v805 = vpack.c.bf16 %v789, %v788
      %s806 = scalar_lea.vmem %s3, 64
      %v807 = vld [vmem:[%s806] sm:$0xf]
      %v808 = vld [vmem:[%s806 + $0x4] sm:$0xf]
      %v809 = vld [vmem:[%s806 + $0x8] sm:$0xf]
      %v810 = vld [vmem:[%s806 + $0xc] sm:$0xf]
      %v811 = vld [vmem:[%s806 + $0x10] sm:$0xf]
      %v812 = vld [vmem:[%s806 + $0x14] sm:$0xf]
      %v813 = vld [vmem:[%s806 + $0x18] sm:$0xf]
      %v814 = vld [vmem:[%s806 + $0x1c] sm:$0xf]
      %v815 = vld [vmem:[%s806 + $0x20] sm:$0xf]
      %v816 = vld [vmem:[%s806 + $0x24] sm:$0xf]
      %v817 = vld [vmem:[%s806 + $0x28] sm:$0xf]
      %v818 = vld [vmem:[%s806 + $0x2c] sm:$0xf]
      %v819 = vld [vmem:[%s806 + $0x30] sm:$0xf]
      %v820 = vld [vmem:[%s806 + $0x34] sm:$0xf]
      %v821 = vld [vmem:[%s806 + $0x38] sm:$0xf]
      %v822 = vld [vmem:[%s806 + $0x3c] sm:$0xf]
      %v839 = vunpack.c.l.b16 %v807
      %v840 = vunpack.c.l.b16 %v808
      %v841 = vunpack.c.l.b16 %v809
      %v842 = vunpack.c.l.b16 %v810
      %v843 = vunpack.c.l.b16 %v811
      %v844 = vunpack.c.l.b16 %v812
      %v845 = vunpack.c.l.b16 %v813
      %v846 = vunpack.c.l.b16 %v814
      %v847 = vunpack.c.l.b16 %v815
      %v848 = vunpack.c.l.b16 %v816
      %v849 = vunpack.c.l.b16 %v817
      %v850 = vunpack.c.l.b16 %v818
      %v851 = vunpack.c.l.b16 %v819
      %v852 = vunpack.c.l.b16 %v820
      %v853 = vunpack.c.l.b16 %v821
      %v854 = vunpack.c.l.b16 %v822
      %v855 = vpack.c.b16 %v840, %v839
      %v856 = vpack.c.b16 %v842, %v841
      %v857 = vpack.c.b16 %v844, %v843
      %v858 = vpack.c.b16 %v846, %v845
      %v859 = vpack.c.b16 %v848, %v847
      %v860 = vpack.c.b16 %v850, %v849
      %v861 = vpack.c.b16 %v852, %v851
      %v862 = vpack.c.b16 %v854, %v853
      %871 = vmatprep.subr.bf16.mxu0 0
      %872 = vmatpush1.bf16.msra.mxu0 %v855
      %873 = vmatprep.subr.bf16.mxu0 0
      %874 = vmatpush1.bf16.msra.mxu0 %v856
      %875 = vmatprep.subr.bf16.mxu0 0
      %876 = vmatpush1.bf16.msra.mxu0 %v857
      %877 = vmatprep.subr.bf16.mxu0 0
      %878 = vmatpush1.bf16.msra.mxu0 %v858
      %879 = vmatprep.subr.bf16.mxu0 0
      %880 = vmatpush1.bf16.msra.mxu0 %v859
      %881 = vmatprep.subr.bf16.mxu0 0
      %882 = vmatpush1.bf16.msra.mxu0 %v860
      %883 = vmatprep.subr.bf16.mxu0 0
      %884 = vmatpush1.bf16.msra.mxu0 %v861
      %885 = vmatprep.subr.bf16.mxu0 0
      %886 = vmatpush1.bf16.msra.mxu0 %v862
      %887 = vmatprep.subr.bf16.mxu0 0
      %888 = vmatpush1.bf16.msra.mxu0 0
      %889 = vmatprep.subr.bf16.mxu0 0
      %890 = vmatpush1.bf16.msra.mxu0 0
      %891 = vmatprep.subr.bf16.mxu0 0
      %892 = vmatpush1.bf16.msra.mxu0 0
      %893 = vmatprep.subr.bf16.mxu0 0
      %894 = vmatpush1.bf16.msra.mxu0 0
      %895 = vmatprep.subr.bf16.mxu0 0
      %896 = vmatpush1.bf16.msra.mxu0 0
      %897 = vmatprep.subr.bf16.mxu0 0
      %898 = vmatpush1.bf16.msra.mxu0 0
      %899 = vmatprep.subr.bf16.mxu0 0
      %900 = vmatpush1.bf16.msra.mxu0 0
      %901 = vmatprep.subr.bf16.mxu0 0
      %902 = vmatpush1.bf16.msra.mxu0 0
      %903 = vmatprep.mubr.bf16.mxu0 0
      %904 = vmatmul.mubr.bf16.gmra.mrb[0].mxu0 %v790
      %v905 = vpop.f32.mrb[0].mxu0
      %v906 = vadd.f32 0.0, %v905
      %v907 = vpop.f32.mrb[0].mxu0
      %v908 = vpop.f32.mrb[0].mxu0
      %v909 = vadd.f32 0.0, %v908
      %v910 = vpop.f32.mrb[0].mxu0
      %911 = vmatprep.mubr.bf16.mxu0 0
      %912 = vmatmul.mubr.bf16.gmra.mrb[0].mxu0 %v791
      %v913 = vpop.f32.mrb[0].mxu0
      %v914 = vadd.f32 0.0, %v913
      %v915 = vpop.f32.mrb[0].mxu0
      %v916 = vpop.f32.mrb[0].mxu0
      %v917 = vadd.f32 0.0, %v916
      %v918 = vpop.f32.mrb[0].mxu0
      %919 = vmatprep.mubr.bf16.mxu0 0
      %920 = vmatmul.mubr.bf16.gmra.mrb[0].mxu0 %v792
      %v921 = vpop.f32.mrb[0].mxu0
      %v922 = vadd.f32 0.0, %v921
      %v923 = vpop.f32.mrb[0].mxu0
      %v924 = vpop.f32.mrb[0].mxu0
      %v925 = vadd.f32 0.0, %v924
      %v926 = vpop.f32.mrb[0].mxu0
      %927 = vmatprep.mubr.bf16.mxu0 0
      %928 = vmatmul.mubr.bf16.gmra.mrb[0].mxu0 %v793
      %v929 = vpop.f32.mrb[0].mxu0
      %v930 = vadd.f32 0.0, %v929
      %v931 = vpop.f32.mrb[0].mxu0
      %v932 = vpop.f32.mrb[0].mxu0
      %v933 = vadd.f32 0.0, %v932
      %v934 = vpop.f32.mrb[0].mxu0
      %935 = vmatprep.mubr.bf16.mxu0 0
      %936 = vmatmul.mubr.bf16.gmra.mrb[0].mxu0 %v794
      %v937 = vpop.f32.mrb[0].mxu0
      %v938 = vadd.f32 0.0, %v937
      %v939 = vpop.f32.mrb[0].mxu0
      %v940 = vpop.f32.mrb[0].mxu0
      %v941 = vadd.f32 0.0, %v940
      %v942 = vpop.f32.mrb[0].mxu0
      %943 = vmatprep.mubr.bf16.mxu0 0
      %944 = vmatmul.mubr.bf16.gmra.mrb[0].mxu0 %v795
      %v945 = vpop.f32.mrb[0].mxu0
      %v946 = vadd.f32 0.0, %v945
      %v947 = vpop.f32.mrb[0].mxu0
      %v948 = vpop.f32.mrb[0].mxu0
      %v949 = vadd.f32 0.0, %v948
      %v950 = vpop.f32.mrb[0].mxu0
      %951 = vmatprep.mubr.bf16.mxu0 0
      %952 = vmatmul.mubr.bf16.gmra.mrb[0].mxu0 %v796
      %v953 = vpop.f32.mrb[0].mxu0
      %v954 = vadd.f32 0.0, %v953
      %v955 = vpop.f32.mrb[0].mxu0
      %v956 = vpop.f32.mrb[0].mxu0
      %v957 = vadd.f32 0.0, %v956
      %v958 = vpop.f32.mrb[0].mxu0
      %959 = vmatprep.mubr.bf16.mxu0 0
      %960 = vmatmul.mubr.bf16.gmra.mrb[0].mxu0 %v797
      %v961 = vpop.f32.mrb[0].mxu0
      %v962 = vadd.f32 0.0, %v961
      %v963 = vpop.f32.mrb[0].mxu0
      %v964 = vpop.f32.mrb[0].mxu0
      %v965 = vadd.f32 0.0, %v964
      %v966 = vpop.f32.mrb[0].mxu0
      %967 = vmatprep.mubr.bf16.mxu0 0
      %968 = vmatmul.mubr.bf16.gmra.mrb[0].mxu0 %v798
      %v969 = vpop.f32.mrb[0].mxu0
      %v970 = vadd.f32 0.0, %v969
      %v971 = vpop.f32.mrb[0].mxu0
      %v972 = vpop.f32.mrb[0].mxu0
      %v973 = vadd.f32 0.0, %v972
      %v974 = vpop.f32.mrb[0].mxu0
      %975 = vmatprep.mubr.bf16.mxu0 0
      %976 = vmatmul.mubr.bf16.gmra.mrb[0].mxu0 %v799
      %v977 = vpop.f32.mrb[0].mxu0
      %v978 = vadd.f32 0.0, %v977
      %v979 = vpop.f32.mrb[0].mxu0
      %v980 = vpop.f32.mrb[0].mxu0
      %v981 = vadd.f32 0.0, %v980
      %v982 = vpop.f32.mrb[0].mxu0
      %983 = vmatprep.mubr.bf16.mxu0 0
      %984 = vmatmul.mubr.bf16.gmra.mrb[0].mxu0 %v800
      %v985 = vpop.f32.mrb[0].mxu0
      %v986 = vadd.f32 0.0, %v985
      %v987 = vpop.f32.mrb[0].mxu0
      %v988 = vpop.f32.mrb[0].mxu0
      %v989 = vadd.f32 0.0, %v988
      %v990 = vpop.f32.mrb[0].mxu0
      %991 = vmatprep.mubr.bf16.mxu0 0
      %992 = vmatmul.mubr.bf16.gmra.mrb[0].mxu0 %v801
      %v993 = vpop.f32.mrb[0].mxu0
      %v994 = vadd.f32 0.0, %v993
      %v995 = vpop.f32.mrb[0].mxu0
      %v996 = vpop.f32.mrb[0].mxu0
      %v997 = vadd.f32 0.0, %v996
      %v998 = vpop.f32.mrb[0].mxu0
      %999 = vmatprep.mubr.bf16.mxu0 0
      %1000 = vmatmul.mubr.bf16.gmra.mrb[0].mxu0 %v802
      %v1001 = vpop.f32.mrb[0].mxu0
      %v1002 = vadd.f32 0.0, %v1001
      %v1003 = vpop.f32.mrb[0].mxu0
      %v1004 = vpop.f32.mrb[0].mxu0
      %v1005 = vadd.f32 0.0, %v1004
      %v1006 = vpop.f32.mrb[0].mxu0
      %1007 = vmatprep.mubr.bf16.mxu0 0
      %1008 = vmatmul.mubr.bf16.gmra.mrb[0].mxu0 %v803
      %v1009 = vpop.f32.mrb[0].mxu0
      %v1010 = vadd.f32 0.0, %v1009
      %v1011 = vpop.f32.mrb[0].mxu0
      %v1012 = vpop.f32.mrb[0].mxu0
      %v1013 = vadd.f32 0.0, %v1012
      %v1014 = vpop.f32.mrb[0].mxu0
      %1015 = vmatprep.mubr.bf16.mxu0 0
      %1016 = vmatmul.mubr.bf16.gmra.mrb[0].mxu0 %v804
      %v1017 = vpop.f32.mrb[0].mxu0
      %v1018 = vadd.f32 0.0, %v1017
      %v1019 = vpop.f32.mrb[0].mxu0
      %v1020 = vpop.f32.mrb[0].mxu0
      %v1021 = vadd.f32 0.0, %v1020
      %v1022 = vpop.f32.mrb[0].mxu0
      %1023 = vmatprep.mubr.bf16.mxu0 0
      %1024 = vmatmul.mubr.bf16.gmra.mrb[0].mxu0 %v805
      %v1025 = vpop.f32.mrb[0].mxu0
      %v1026 = vadd.f32 0.0, %v1025
      %v1027 = vpop.f32.mrb[0].mxu0
      %v1028 = vpop.f32.mrb[0].mxu0
      %v1029 = vadd.f32 0.0, %v1028
      %v1030 = vpop.f32.mrb[0].mxu0
      %1031 = vdwg.mxu0
      %v1048 = vunpack.c.l.b16 %v742
      %v1049 = vunpack.c.l.b16 %v743
      %v1050 = vunpack.c.l.b16 %v744
      %v1051 = vunpack.c.l.b16 %v745
      %v1052 = vunpack.c.l.b16 %v746
      %v1053 = vunpack.c.l.b16 %v747
      %v1054 = vunpack.c.l.b16 %v748
      %v1055 = vunpack.c.l.b16 %v749
      %v1056 = vunpack.c.l.b16 %v750
      %v1057 = vunpack.c.l.b16 %v751
      %v1058 = vunpack.c.l.b16 %v752
      %v1059 = vunpack.c.l.b16 %v753
      %v1060 = vunpack.c.l.b16 %v754
      %v1061 = vunpack.c.l.b16 %v755
      %v1062 = vunpack.c.l.b16 %v756
      %v1063 = vunpack.c.l.b16 %v757
      %v1064 = vpack.c.b16 %v1049, %v1048
      %v1065 = vpack.c.b16 %v1051, %v1050
      %v1066 = vpack.c.b16 %v1053, %v1052
      %v1067 = vpack.c.b16 %v1055, %v1054
      %v1068 = vpack.c.b16 %v1057, %v1056
      %v1069 = vpack.c.b16 %v1059, %v1058
      %v1070 = vpack.c.b16 %v1061, %v1060
      %v1071 = vpack.c.b16 %v1063, %v1062
      %1080 = vmatprep.subr.bf16.mxu0 0
      %1081 = vmatpush1.bf16.msra.mxu0 %v1064
      %1082 = vmatprep.subr.bf16.mxu0 0
      %1083 = vmatpush1.bf16.msra.mxu0 %v1065
      %1084 = vmatprep.subr.bf16.mxu0 0
      %1085 = vmatpush1.bf16.msra.mxu0 %v1066
      %1086 = vmatprep.subr.bf16.mxu0 0
      %1087 = vmatpush1.bf16.msra.mxu0 %v1067
      %1088 = vmatprep.subr.bf16.mxu0 0
      %1089 = vmatpush1.bf16.msra.mxu0 %v1068
      %1090 = vmatprep.subr.bf16.mxu0 0
      %1091 = vmatpush1.bf16.msra.mxu0 %v1069
      %1092 = vmatprep.subr.bf16.mxu0 0
      %1093 = vmatpush1.bf16.msra.mxu0 %v1070
      %1094 = vmatprep.subr.bf16.mxu0 0
      %1095 = vmatpush1.bf16.msra.mxu0 %v1071
      %1096 = vmatprep.subr.bf16.mxu0 0
      %1097 = vmatpush1.bf16.msra.mxu0 0
      %1098 = vmatprep.subr.bf16.mxu0 0
      %1099 = vmatpush1.bf16.msra.mxu0 0
      %1100 = vmatprep.subr.bf16.mxu0 0
      %1101 = vmatpush1.bf16.msra.mxu0 0
      %1102 = vmatprep.subr.bf16.mxu0 0
      %1103 = vmatpush1.bf16.msra.mxu0 0
      %1104 = vmatprep.subr.bf16.mxu0 0
      %1105 = vmatpush1.bf16.msra.mxu0 0
      %1106 = vmatprep.subr.bf16.mxu0 0
      %1107 = vmatpush1.bf16.msra.mxu0 0
      %1108 = vmatprep.subr.bf16.mxu0 0
      %1109 = vmatpush1.bf16.msra.mxu0 0
      %1110 = vmatprep.subr.bf16.mxu0 0
      %1111 = vmatpush1.bf16.msra.mxu0 0
      %1112 = vmatprep.mubr.bf16.mxu0 0
      %1113 = vmatmul.mubr.bf16.gmra.mrb[0].mxu0 %v726
      %v1114 = vpop.f32.mrb[0].mxu0
      %v1115 = vadd.f32 %v906, %v1114
      %v1116 = vpop.f32.mrb[0].mxu0
      %v1117 = vpop.f32.mrb[0].mxu0
      %v1118 = vadd.f32 %v909, %v1117
      %v1119 = vpop.f32.mrb[0].mxu0
      %1120 = vmatprep.mubr.bf16.mxu0 0
      %1121 = vmatmul.mubr.bf16.gmra.mrb[0].mxu0 %v727
      %v1122 = vpop.f32.mrb[0].mxu0
      %v1123 = vadd.f32 %v914, %v1122
      %v1124 = vpop.f32.mrb[0].mxu0
      %v1125 = vpop.f32.mrb[0].mxu0
      %v1126 = vadd.f32 %v917, %v1125
      %v1127 = vpop.f32.mrb[0].mxu0
      %1128 = vmatprep.mubr.bf16.mxu0 0
      %1129 = vmatmul.mubr.bf16.gmra.mrb[0].mxu0 %v728
      %v1130 = vpop.f32.mrb[0].mxu0
      %v1131 = vadd.f32 %v922, %v1130
      %v1132 = vpop.f32.mrb[0].mxu0
      %v1133 = vpop.f32.mrb[0].mxu0
      %v1134 = vadd.f32 %v925, %v1133
      %v1135 = vpop.f32.mrb[0].mxu0
      %1136 = vmatprep.mubr.bf16.mxu0 0
      %1137 = vmatmul.mubr.bf16.gmra.mrb[0].mxu0 %v729
      %v1138 = vpop.f32.mrb[0].mxu0
      %v1139 = vadd.f32 %v930, %v1138
      %v1140 = vpop.f32.mrb[0].mxu0
      %v1141 = vpop.f32.mrb[0].mxu0
      %v1142 = vadd.f32 %v933, %v1141
      %v1143 = vpop.f32.mrb[0].mxu0
      %1144 = vmatprep.mubr.bf16.mxu0 0
      %1145 = vmatmul.mubr.bf16.gmra.mrb[0].mxu0 %v730
      %v1146 = vpop.f32.mrb[0].mxu0
      %v1147 = vadd.f32 %v938, %v1146
      %v1148 = vpop.f32.mrb[0].mxu0
      %v1149 = vpop.f32.mrb[0].mxu0
      %v1150 = vadd.f32 %v941, %v1149
      %v1151 = vpop.f32.mrb[0].mxu0
      %1152 = vmatprep.mubr.bf16.mxu0 0
      %1153 = vmatmul.mubr.bf16.gmra.mrb[0].mxu0 %v731
      %v1154 = vpop.f32.mrb[0].mxu0
      %v1155 = vadd.f32 %v946, %v1154
      %v1156 = vpop.f32.mrb[0].mxu0
      %v1157 = vpop.f32.mrb[0].mxu0
      %v1158 = vadd.f32 %v949, %v1157
      %v1159 = vpop.f32.mrb[0].mxu0
      %1160 = vmatprep.mubr.bf16.mxu0 0
      %1161 = vmatmul.mubr.bf16.gmra.mrb[0].mxu0 %v732
      %v1162 = vpop.f32.mrb[0].mxu0
      %v1163 = vadd.f32 %v954, %v1162
      %v1164 = vpop.f32.mrb[0].mxu0
      %v1165 = vpop.f32.mrb[0].mxu0
      %v1166 = vadd.f32 %v957, %v1165
      %v1167 = vpop.f32.mrb[0].mxu0
      %1168 = vmatprep.mubr.bf16.mxu0 0
      %1169 = vmatmul.mubr.bf16.gmra.mrb[0].mxu0 %v733
      %v1170 = vpop.f32.mrb[0].mxu0
      %v1171 = vadd.f32 %v962, %v1170
      %v1172 = vpop.f32.mrb[0].mxu0
      %v1173 = vpop.f32.mrb[0].mxu0
      %v1174 = vadd.f32 %v965, %v1173
      %v1175 = vpop.f32.mrb[0].mxu0
      %1176 = vmatprep.mubr.bf16.mxu0 0
      %1177 = vmatmul.mubr.bf16.gmra.mrb[0].mxu0 %v734
      %v1178 = vpop.f32.mrb[0].mxu0
      %v1179 = vadd.f32 %v970, %v1178
      %v1180 = vpop.f32.mrb[0].mxu0
      %v1181 = vpop.f32.mrb[0].mxu0
      %v1182 = vadd.f32 %v973, %v1181
      %v1183 = vpop.f32.mrb[0].mxu0
      %1184 = vmatprep.mubr.bf16.mxu0 0
      %1185 = vmatmul.mubr.bf16.gmra.mrb[0].mxu0 %v735
      %v1186 = vpop.f32.mrb[0].mxu0
      %v1187 = vadd.f32 %v978, %v1186
      %v1188 = vpop.f32.mrb[0].mxu0
      %v1189 = vpop.f32.mrb[0].mxu0
      %v1190 = vadd.f32 %v981, %v1189
      %v1191 = vpop.f32.mrb[0].mxu0
      %1192 = vmatprep.mubr.bf16.mxu0 0
      %1193 = vmatmul.mubr.bf16.gmra.mrb[0].mxu0 %v736
      %v1194 = vpop.f32.mrb[0].mxu0
      %v1195 = vadd.f32 %v986, %v1194
      %v1196 = vpop.f32.mrb[0].mxu0
      %v1197 = vpop.f32.mrb[0].mxu0
      %v1198 = vadd.f32 %v989, %v1197
      %v1199 = vpop.f32.mrb[0].mxu0
      %1200 = vmatprep.mubr.bf16.mxu0 0
      %1201 = vmatmul.mubr.bf16.gmra.mrb[0].mxu0 %v737
      %v1202 = vpop.f32.mrb[0].mxu0
      %v1203 = vadd.f32 %v994, %v1202
      %v1204 = vpop.f32.mrb[0].mxu0
      %v1205 = vpop.f32.mrb[0].mxu0
      %v1206 = vadd.f32 %v997, %v1205
      %v1207 = vpop.f32.mrb[0].mxu0
      %1208 = vmatprep.mubr.bf16.mxu0 0
      %1209 = vmatmul.mubr.bf16.gmra.mrb[0].mxu0 %v738
      %v1210 = vpop.f32.mrb[0].mxu0
      %v1211 = vadd.f32 %v1002, %v1210
      %v1212 = vpop.f32.mrb[0].mxu0
      %v1213 = vpop.f32.mrb[0].mxu0
      %v1214 = vadd.f32 %v1005, %v1213
      %v1215 = vpop.f32.mrb[0].mxu0
      %1216 = vmatprep.mubr.bf16.mxu0 0
      %1217 = vmatmul.mubr.bf16.gmra.mrb[0].mxu0 %v739
      %v1218 = vpop.f32.mrb[0].mxu0
      %v1219 = vadd.f32 %v1010, %v1218
      %v1220 = vpop.f32.mrb[0].mxu0
      %v1221 = vpop.f32.mrb[0].mxu0
      %v1222 = vadd.f32 %v1013, %v1221
      %v1223 = vpop.f32.mrb[0].mxu0
      %1224 = vmatprep.mubr.bf16.mxu0 0
      %1225 = vmatmul.mubr.bf16.gmra.mrb[0].mxu0 %v740
      %v1226 = vpop.f32.mrb[0].mxu0
      %v1227 = vadd.f32 %v1018, %v1226
      %v1228 = vpop.f32.mrb[0].mxu0
      %v1229 = vpop.f32.mrb[0].mxu0
      %v1230 = vadd.f32 %v1021, %v1229
      %v1231 = vpop.f32.mrb[0].mxu0
      %1232 = vmatprep.mubr.bf16.mxu0 0
      %1233 = vmatmul.mubr.bf16.gmra.mrb[0].mxu0 %v741
      %v1234 = vpop.f32.mrb[0].mxu0
      %v1235 = vadd.f32 %v1026, %v1234
      %v1236 = vpop.f32.mrb[0].mxu0
      %v1237 = vpop.f32.mrb[0].mxu0
      %v1238 = vadd.f32 %v1029, %v1237
      %v1239 = vpop.f32.mrb[0].mxu0
      %1240 = vdwg.mxu0
      %v1241 = vld [vmem:[#allocation2 + $0x2] sm:$0xff]
      %v1242 = vld [vmem:[#allocation2 + $0xa] sm:$0xff]
      %v1243 = vld [vmem:[#allocation2 + $0x1a] sm:$0xff]
      %v1244 = vld [vmem:[#allocation2 + $0x22] sm:$0xff]
      %v1245 = vld [vmem:[#allocation2 + $0x32] sm:$0xff]
      %v1246 = vld [vmem:[#allocation2 + $0x3a] sm:$0xff]
      %v1247 = vld [vmem:[#allocation2 + $0x4a] sm:$0xff]
      %v1248 = vld [vmem:[#allocation2 + $0x52] sm:$0xff]
      %v1249 = vld [vmem:[#allocation2 + $0x62] sm:$0xff]
      %v1250 = vld [vmem:[#allocation2 + $0x6a] sm:$0xff]
      %v1251 = vld [vmem:[#allocation2 + $0x7a] sm:$0xff]
      %v1252 = vld [vmem:[#allocation2 + $0x82] sm:$0xff]
      %v1253 = vld [vmem:[#allocation2 + $0x92] sm:$0xff]
      %v1254 = vld [vmem:[#allocation2 + $0x9a] sm:$0xff]
      %v1255 = vld [vmem:[#allocation2 + $0xaa] sm:$0xff]
      %v1256 = vld [vmem:[#allocation2 + $0xb2] sm:$0xff]
      %v1257 = vld [vmem:[#allocation2 + $0xc2] sm:$0xff]
      %v1258 = vld [vmem:[#allocation2 + $0xca] sm:$0xff]
      %v1259 = vld [vmem:[#allocation2 + $0xda] sm:$0xff]
      %v1260 = vld [vmem:[#allocation2 + $0xe2] sm:$0xff]
      %v1261 = vld [vmem:[#allocation2 + $0xf2] sm:$0xff]
      %v1262 = vld [vmem:[#allocation2 + $0xfa] sm:$0xff]
      %v1263 = vld [vmem:[#allocation2 + $0x10a] sm:$0xff]
      %v1264 = vld [vmem:[#allocation2 + $0x112] sm:$0xff]
      %v1265 = vld [vmem:[#allocation2 + $0x122] sm:$0xff]
      %v1266 = vld [vmem:[#allocation2 + $0x12a] sm:$0xff]
      %v1267 = vld [vmem:[#allocation2 + $0x13a] sm:$0xff]
      %v1268 = vld [vmem:[#allocation2 + $0x142] sm:$0xff]
      %v1269 = vld [vmem:[#allocation2 + $0x152] sm:$0xff]
      %v1270 = vld [vmem:[#allocation2 + $0x15a] sm:$0xff]
      %v1271 = vld [vmem:[#allocation2 + $0x16a] sm:$0xff]
      %v1272 = vld [vmem:[#allocation2 + $0x172] sm:$0xff]
      %v1273 = vpack.c.bf16 %v1242, %v1241
      %v1274 = vpack.c.bf16 %v1244, %v1243
      %v1275 = vpack.c.bf16 %v1246, %v1245
      %v1276 = vpack.c.bf16 %v1248, %v1247
      %v1277 = vpack.c.bf16 %v1250, %v1249
      %v1278 = vpack.c.bf16 %v1252, %v1251
      %v1279 = vpack.c.bf16 %v1254, %v1253
      %v1280 = vpack.c.bf16 %v1256, %v1255
      %v1281 = vpack.c.bf16 %v1258, %v1257
      %v1282 = vpack.c.bf16 %v1260, %v1259
      %v1283 = vpack.c.bf16 %v1262, %v1261
      %v1284 = vpack.c.bf16 %v1264, %v1263
      %v1285 = vpack.c.bf16 %v1266, %v1265
      %v1286 = vpack.c.bf16 %v1268, %v1267
      %v1287 = vpack.c.bf16 %v1270, %v1269
      %v1288 = vpack.c.bf16 %v1272, %v1271
      %s1289 = scalar_lea.vmem %s3, 128
      %v1290 = vld [vmem:[%s1289] sm:$0xf]
      %v1291 = vld [vmem:[%s1289 + $0x4] sm:$0xf]
      %v1292 = vld [vmem:[%s1289 + $0x8] sm:$0xf]
      %v1293 = vld [vmem:[%s1289 + $0xc] sm:$0xf]
      %v1294 = vld [vmem:[%s1289 + $0x10] sm:$0xf]
      %v1295 = vld [vmem:[%s1289 + $0x14] sm:$0xf]
      %v1296 = vld [vmem:[%s1289 + $0x18] sm:$0xf]
      %v1297 = vld [vmem:[%s1289 + $0x1c] sm:$0xf]
      %v1298 = vld [vmem:[%s1289 + $0x20] sm:$0xf]
      %v1299 = vld [vmem:[%s1289 + $0x24] sm:$0xf]
      %v1300 = vld [vmem:[%s1289 + $0x28] sm:$0xf]
      %v1301 = vld [vmem:[%s1289 + $0x2c] sm:$0xf]
      %v1302 = vld [vmem:[%s1289 + $0x30] sm:$0xf]
      %v1303 = vld [vmem:[%s1289 + $0x34] sm:$0xf]
      %v1304 = vld [vmem:[%s1289 + $0x38] sm:$0xf]
      %v1305 = vld [vmem:[%s1289 + $0x3c] sm:$0xf]
      %v1322 = vunpack.c.l.b16 %v1290
      %v1323 = vunpack.c.l.b16 %v1291
      %v1324 = vunpack.c.l.b16 %v1292
      %v1325 = vunpack.c.l.b16 %v1293
      %v1326 = vunpack.c.l.b16 %v1294
      %v1327 = vunpack.c.l.b16 %v1295
      %v1328 = vunpack.c.l.b16 %v1296
      %v1329 = vunpack.c.l.b16 %v1297
      %v1330 = vunpack.c.l.b16 %v1298
      %v1331 = vunpack.c.l.b16 %v1299
      %v1332 = vunpack.c.l.b16 %v1300
      %v1333 = vunpack.c.l.b16 %v1301
      %v1334 = vunpack.c.l.b16 %v1302
      %v1335 = vunpack.c.l.b16 %v1303
      %v1336 = vunpack.c.l.b16 %v1304
      %v1337 = vunpack.c.l.b16 %v1305
      %v1338 = vpack.c.b16 %v1323, %v1322
      %v1339 = vpack.c.b16 %v1325, %v1324
      %v1340 = vpack.c.b16 %v1327, %v1326
      %v1341 = vpack.c.b16 %v1329, %v1328
      %v1342 = vpack.c.b16 %v1331, %v1330
      %v1343 = vpack.c.b16 %v1333, %v1332
      %v1344 = vpack.c.b16 %v1335, %v1334
      %v1345 = vpack.c.b16 %v1337, %v1336
      %1354 = vmatprep.subr.bf16.mxu0 0
      %1355 = vmatpush1.bf16.msra.mxu0 %v1338
      %1356 = vmatprep.subr.bf16.mxu0 0
      %1357 = vmatpush1.bf16.msra.mxu0 %v1339
      %1358 = vmatprep.subr.bf16.mxu0 0
      %1359 = vmatpush1.bf16.msra.mxu0 %v1340
      %1360 = vmatprep.subr.bf16.mxu0 0
      %1361 = vmatpush1.bf16.msra.mxu0 %v1341
      %1362 = vmatprep.subr.bf16.mxu0 0
      %1363 = vmatpush1.bf16.msra.mxu0 %v1342
      %1364 = vmatprep.subr.bf16.mxu0 0
      %1365 = vmatpush1.bf16.msra.mxu0 %v1343
      %1366 = vmatprep.subr.bf16.mxu0 0
      %1367 = vmatpush1.bf16.msra.mxu0 %v1344
      %1368 = vmatprep.subr.bf16.mxu0 0
      %1369 = vmatpush1.bf16.msra.mxu0 %v1345
      %1370 = vmatprep.subr.bf16.mxu0 0
      %1371 = vmatpush1.bf16.msra.mxu0 0
      %1372 = vmatprep.subr.bf16.mxu0 0
      %1373 = vmatpush1.bf16.msra.mxu0 0
      %1374 = vmatprep.subr.bf16.mxu0 0
      %1375 = vmatpush1.bf16.msra.mxu0 0
      %1376 = vmatprep.subr.bf16.mxu0 0
      %1377 = vmatpush1.bf16.msra.mxu0 0
      %1378 = vmatprep.subr.bf16.mxu0 0
      %1379 = vmatpush1.bf16.msra.mxu0 0
      %1380 = vmatprep.subr.bf16.mxu0 0
      %1381 = vmatpush1.bf16.msra.mxu0 0
      %1382 = vmatprep.subr.bf16.mxu0 0
      %1383 = vmatpush1.bf16.msra.mxu0 0
      %1384 = vmatprep.subr.bf16.mxu0 0
      %1385 = vmatpush1.bf16.msra.mxu0 0
      %1386 = vmatprep.mubr.bf16.mxu0 0
      %1387 = vmatmul.mubr.bf16.gmra.mrb[0].mxu0 %v1273
      %v1388 = vpop.f32.mrb[0].mxu0
      %v1389 = vadd.f32 0.0, %v1388
      %v1390 = vpop.f32.mrb[0].mxu0
      %v1391 = vpop.f32.mrb[0].mxu0
      %v1392 = vadd.f32 0.0, %v1391
      %v1393 = vpop.f32.mrb[0].mxu0
      %1394 = vmatprep.mubr.bf16.mxu0 0
      %1395 = vmatmul.mubr.bf16.gmra.mrb[0].mxu0 %v1274
      %v1396 = vpop.f32.mrb[0].mxu0
      %v1397 = vadd.f32 0.0, %v1396
      %v1398 = vpop.f32.mrb[0].mxu0
      %v1399 = vpop.f32.mrb[0].mxu0
      %v1400 = vadd.f32 0.0, %v1399
      %v1401 = vpop.f32.mrb[0].mxu0
      %1402 = vmatprep.mubr.bf16.mxu0 0
      %1403 = vmatmul.mubr.bf16.gmra.mrb[0].mxu0 %v1275
      %v1404 = vpop.f32.mrb[0].mxu0
      %v1405 = vadd.f32 0.0, %v1404
      %v1406 = vpop.f32.mrb[0].mxu0
      %v1407 = vpop.f32.mrb[0].mxu0
      %v1408 = vadd.f32 0.0, %v1407
      %v1409 = vpop.f32.mrb[0].mxu0
      %1410 = vmatprep.mubr.bf16.mxu0 0
      %1411 = vmatmul.mubr.bf16.gmra.mrb[0].mxu0 %v1276
      %v1412 = vpop.f32.mrb[0].mxu0
      %v1413 = vadd.f32 0.0, %v1412
      %v1414 = vpop.f32.mrb[0].mxu0
      %v1415 = vpop.f32.mrb[0].mxu0
      %v1416 = vadd.f32 0.0, %v1415
      %v1417 = vpop.f32.mrb[0].mxu0
      %1418 = vmatprep.mubr.bf16.mxu0 0
      %1419 = vmatmul.mubr.bf16.gmra.mrb[0].mxu0 %v1277
      %v1420 = vpop.f32.mrb[0].mxu0
      %v1421 = vadd.f32 0.0, %v1420
      %v1422 = vpop.f32.mrb[0].mxu0
      %v1423 = vpop.f32.mrb[0].mxu0
      %v1424 = vadd.f32 0.0, %v1423
      %v1425 = vpop.f32.mrb[0].mxu0
      %1426 = vmatprep.mubr.bf16.mxu0 0
      %1427 = vmatmul.mubr.bf16.gmra.mrb[0].mxu0 %v1278
      %v1428 = vpop.f32.mrb[0].mxu0
      %v1429 = vadd.f32 0.0, %v1428
      %v1430 = vpop.f32.mrb[0].mxu0
      %v1431 = vpop.f32.mrb[0].mxu0
      %v1432 = vadd.f32 0.0, %v1431
      %v1433 = vpop.f32.mrb[0].mxu0
      %1434 = vmatprep.mubr.bf16.mxu0 0
      %1435 = vmatmul.mubr.bf16.gmra.mrb[0].mxu0 %v1279
      %v1436 = vpop.f32.mrb[0].mxu0
      %v1437 = vadd.f32 0.0, %v1436
      %v1438 = vpop.f32.mrb[0].mxu0
      %v1439 = vpop.f32.mrb[0].mxu0
      %v1440 = vadd.f32 0.0, %v1439
      %v1441 = vpop.f32.mrb[0].mxu0
      %1442 = vmatprep.mubr.bf16.mxu0 0
      %1443 = vmatmul.mubr.bf16.gmra.mrb[0].mxu0 %v1280
      %v1444 = vpop.f32.mrb[0].mxu0
      %v1445 = vadd.f32 0.0, %v1444
      %v1446 = vpop.f32.mrb[0].mxu0
      %v1447 = vpop.f32.mrb[0].mxu0
      %v1448 = vadd.f32 0.0, %v1447
      %v1449 = vpop.f32.mrb[0].mxu0
      %1450 = vmatprep.mubr.bf16.mxu0 0
      %1451 = vmatmul.mubr.bf16.gmra.mrb[0].mxu0 %v1281
      %v1452 = vpop.f32.mrb[0].mxu0
      %v1453 = vadd.f32 0.0, %v1452
      %v1454 = vpop.f32.mrb[0].mxu0
      %v1455 = vpop.f32.mrb[0].mxu0
      %v1456 = vadd.f32 0.0, %v1455
      %v1457 = vpop.f32.mrb[0].mxu0
      %1458 = vmatprep.mubr.bf16.mxu0 0
      %1459 = vmatmul.mubr.bf16.gmra.mrb[0].mxu0 %v1282
      %v1460 = vpop.f32.mrb[0].mxu0
      %v1461 = vadd.f32 0.0, %v1460
      %v1462 = vpop.f32.mrb[0].mxu0
      %v1463 = vpop.f32.mrb[0].mxu0
      %v1464 = vadd.f32 0.0, %v1463
      %v1465 = vpop.f32.mrb[0].mxu0
      %1466 = vmatprep.mubr.bf16.mxu0 0
      %1467 = vmatmul.mubr.bf16.gmra.mrb[0].mxu0 %v1283
      %v1468 = vpop.f32.mrb[0].mxu0
      %v1469 = vadd.f32 0.0, %v1468
      %v1470 = vpop.f32.mrb[0].mxu0
      %v1471 = vpop.f32.mrb[0].mxu0
      %v1472 = vadd.f32 0.0, %v1471
      %v1473 = vpop.f32.mrb[0].mxu0
      %1474 = vmatprep.mubr.bf16.mxu0 0
      %1475 = vmatmul.mubr.bf16.gmra.mrb[0].mxu0 %v1284
      %v1476 = vpop.f32.mrb[0].mxu0
      %v1477 = vadd.f32 0.0, %v1476
      %v1478 = vpop.f32.mrb[0].mxu0
      %v1479 = vpop.f32.mrb[0].mxu0
      %v1480 = vadd.f32 0.0, %v1479
      %v1481 = vpop.f32.mrb[0].mxu0
      %1482 = vmatprep.mubr.bf16.mxu0 0
      %1483 = vmatmul.mubr.bf16.gmra.mrb[0].mxu0 %v1285
      %v1484 = vpop.f32.mrb[0].mxu0
      %v1485 = vadd.f32 0.0, %v1484
      %v1486 = vpop.f32.mrb[0].mxu0
      %v1487 = vpop.f32.mrb[0].mxu0
      %v1488 = vadd.f32 0.0, %v1487
      %v1489 = vpop.f32.mrb[0].mxu0
      %1490 = vmatprep.mubr.bf16.mxu0 0
      %1491 = vmatmul.mubr.bf16.gmra.mrb[0].mxu0 %v1286
      %v1492 = vpop.f32.mrb[0].mxu0
      %v1493 = vadd.f32 0.0, %v1492
      %v1494 = vpop.f32.mrb[0].mxu0
      %v1495 = vpop.f32.mrb[0].mxu0
      %v1496 = vadd.f32 0.0, %v1495
      %v1497 = vpop.f32.mrb[0].mxu0
      %1498 = vmatprep.mubr.bf16.mxu0 0
      %1499 = vmatmul.mubr.bf16.gmra.mrb[0].mxu0 %v1287
      %v1500 = vpop.f32.mrb[0].mxu0
      %v1501 = vadd.f32 0.0, %v1500
      %v1502 = vpop.f32.mrb[0].mxu0
      %v1503 = vpop.f32.mrb[0].mxu0
      %v1504 = vadd.f32 0.0, %v1503
      %v1505 = vpop.f32.mrb[0].mxu0
      %1506 = vmatprep.mubr.bf16.mxu0 0
      %1507 = vmatmul.mubr.bf16.gmra.mrb[0].mxu0 %v1288
      %v1508 = vpop.f32.mrb[0].mxu0
      %v1509 = vadd.f32 0.0, %v1508
      %v1510 = vpop.f32.mrb[0].mxu0
      %v1511 = vpop.f32.mrb[0].mxu0
      %v1512 = vadd.f32 0.0, %v1511
      %v1513 = vpop.f32.mrb[0].mxu0
      %1514 = vdwg.mxu0
      %v1515 = vadd.f32 %v1115, %v1389
      %v1516 = vadd.f32 %v1118, %v1392
      %v1517 = vadd.f32 %v1123, %v1397
      %v1518 = vadd.f32 %v1126, %v1400
      %v1519 = vadd.f32 %v1131, %v1405
      %v1520 = vadd.f32 %v1134, %v1408
      %v1521 = vadd.f32 %v1139, %v1413
      %v1522 = vadd.f32 %v1142, %v1416
      %v1523 = vadd.f32 %v1147, %v1421
      %v1524 = vadd.f32 %v1150, %v1424
      %v1525 = vadd.f32 %v1155, %v1429
      %v1526 = vadd.f32 %v1158, %v1432
      %v1527 = vadd.f32 %v1163, %v1437
      %v1528 = vadd.f32 %v1166, %v1440
      %v1529 = vadd.f32 %v1171, %v1445
      %v1530 = vadd.f32 %v1174, %v1448
      %v1531 = vadd.f32 %v1179, %v1453
      %v1532 = vadd.f32 %v1182, %v1456
      %v1533 = vadd.f32 %v1187, %v1461
      %v1534 = vadd.f32 %v1190, %v1464
      %v1535 = vadd.f32 %v1195, %v1469
      %v1536 = vadd.f32 %v1198, %v1472
      %v1537 = vadd.f32 %v1203, %v1477
      %v1538 = vadd.f32 %v1206, %v1480
      %v1539 = vadd.f32 %v1211, %v1485
      %v1540 = vadd.f32 %v1214, %v1488
      %v1541 = vadd.f32 %v1219, %v1493
      %v1542 = vadd.f32 %v1222, %v1496
      %v1543 = vadd.f32 %v1227, %v1501
      %v1544 = vadd.f32 %v1230, %v1504
      %v1545 = vadd.f32 %v1235, %v1509
      %v1546 = vadd.f32 %v1238, %v1512
      %v1547 = vld [vmem:[%s661] sm:$0xff]
      %v1548 = vld [vmem:[%s661 + $0x8] sm:$0xff]
      %v1549 = vld [vmem:[%s661 + $0x18] sm:$0xff]
      %v1550 = vld [vmem:[%s661 + $0x20] sm:$0xff]
      %v1551 = vld [vmem:[%s661 + $0x30] sm:$0xff]
      %v1552 = vld [vmem:[%s661 + $0x38] sm:$0xff]
      %v1553 = vld [vmem:[%s661 + $0x48] sm:$0xff]
      %v1554 = vld [vmem:[%s661 + $0x50] sm:$0xff]
      %v1555 = vld [vmem:[%s661 + $0x60] sm:$0xff]
      %v1556 = vld [vmem:[%s661 + $0x68] sm:$0xff]
      %v1557 = vld [vmem:[%s661 + $0x78] sm:$0xff]
      %v1558 = vld [vmem:[%s661 + $0x80] sm:$0xff]
      %v1559 = vld [vmem:[%s661 + $0x90] sm:$0xff]
      %v1560 = vld [vmem:[%s661 + $0x98] sm:$0xff]
      %v1561 = vld [vmem:[%s661 + $0xa8] sm:$0xff]
      %v1562 = vld [vmem:[%s661 + $0xb0] sm:$0xff]
      %v1563 = vld [vmem:[%s661 + $0xc0] sm:$0xff]
      %v1564 = vld [vmem:[%s661 + $0xc8] sm:$0xff]
      %v1565 = vld [vmem:[%s661 + $0xd8] sm:$0xff]
      %v1566 = vld [vmem:[%s661 + $0xe0] sm:$0xff]
      %v1567 = vld [vmem:[%s661 + $0xf0] sm:$0xff]
      %v1568 = vld [vmem:[%s661 + $0xf8] sm:$0xff]
      %v1569 = vld [vmem:[%s661 + $0x108] sm:$0xff]
      %v1570 = vld [vmem:[%s661 + $0x110] sm:$0xff]
      %v1571 = vld [vmem:[%s661 + $0x120] sm:$0xff]
      %v1572 = vld [vmem:[%s661 + $0x128] sm:$0xff]
      %v1573 = vld [vmem:[%s661 + $0x138] sm:$0xff]
      %v1574 = vld [vmem:[%s661 + $0x140] sm:$0xff]
      %v1575 = vld [vmem:[%s661 + $0x150] sm:$0xff]
      %v1576 = vld [vmem:[%s661 + $0x158] sm:$0xff]
      %v1577 = vld [vmem:[%s661 + $0x168] sm:$0xff]
      %v1578 = vld [vmem:[%s661 + $0x170] sm:$0xff]
      %v1579 = vpack.c.bf16 %v1548, %v1547
      %v1580 = vpack.c.bf16 %v1550, %v1549
      %v1581 = vpack.c.bf16 %v1552, %v1551
      %v1582 = vpack.c.bf16 %v1554, %v1553
      %v1583 = vpack.c.bf16 %v1556, %v1555
      %v1584 = vpack.c.bf16 %v1558, %v1557
      %v1585 = vpack.c.bf16 %v1560, %v1559
      %v1586 = vpack.c.bf16 %v1562, %v1561
      %v1587 = vpack.c.bf16 %v1564, %v1563
      %v1588 = vpack.c.bf16 %v1566, %v1565
      %v1589 = vpack.c.bf16 %v1568, %v1567
      %v1590 = vpack.c.bf16 %v1570, %v1569
      %v1591 = vpack.c.bf16 %v1572, %v1571
      %v1592 = vpack.c.bf16 %v1574, %v1573
      %v1593 = vpack.c.bf16 %v1576, %v1575
      %v1594 = vpack.c.bf16 %v1578, %v1577
      %s1595 = scalar_lea.vmem %s3, 192
      %v1596 = vld [vmem:[%s1595] sm:$0xf]
      %v1597 = vld [vmem:[%s1595 + $0x4] sm:$0xf]
      %v1598 = vld [vmem:[%s1595 + $0x8] sm:$0xf]
      %v1599 = vld [vmem:[%s1595 + $0xc] sm:$0xf]
      %v1600 = vld [vmem:[%s1595 + $0x10] sm:$0xf]
      %v1601 = vld [vmem:[%s1595 + $0x14] sm:$0xf]
      %v1602 = vld [vmem:[%s1595 + $0x18] sm:$0xf]
      %v1603 = vld [vmem:[%s1595 + $0x1c] sm:$0xf]
      %v1604 = vld [vmem:[%s1595 + $0x20] sm:$0xf]
      %v1605 = vld [vmem:[%s1595 + $0x24] sm:$0xf]
      %v1606 = vld [vmem:[%s1595 + $0x28] sm:$0xf]
      %v1607 = vld [vmem:[%s1595 + $0x2c] sm:$0xf]
      %v1608 = vld [vmem:[%s1595 + $0x30] sm:$0xf]
      %v1609 = vld [vmem:[%s1595 + $0x34] sm:$0xf]
      %v1610 = vld [vmem:[%s1595 + $0x38] sm:$0xf]
      %v1611 = vld [vmem:[%s1595 + $0x3c] sm:$0xf]
      %v1628 = vunpack.c.l.b16 %v1596
      %v1629 = vunpack.c.l.b16 %v1597
      %v1630 = vunpack.c.l.b16 %v1598
      %v1631 = vunpack.c.l.b16 %v1599
      %v1632 = vunpack.c.l.b16 %v1600
      %v1633 = vunpack.c.l.b16 %v1601
      %v1634 = vunpack.c.l.b16 %v1602
      %v1635 = vunpack.c.l.b16 %v1603
      %v1636 = vunpack.c.l.b16 %v1604
      %v1637 = vunpack.c.l.b16 %v1605
      %v1638 = vunpack.c.l.b16 %v1606
      %v1639 = vunpack.c.l.b16 %v1607
      %v1640 = vunpack.c.l.b16 %v1608
      %v1641 = vunpack.c.l.b16 %v1609
      %v1642 = vunpack.c.l.b16 %v1610
      %v1643 = vunpack.c.l.b16 %v1611
      %v1644 = vpack.c.b16 %v1629, %v1628
      %v1645 = vpack.c.b16 %v1631, %v1630
      %v1646 = vpack.c.b16 %v1633, %v1632
      %v1647 = vpack.c.b16 %v1635, %v1634
      %v1648 = vpack.c.b16 %v1637, %v1636
      %v1649 = vpack.c.b16 %v1639, %v1638
      %v1650 = vpack.c.b16 %v1641, %v1640
      %v1651 = vpack.c.b16 %v1643, %v1642
      %1660 = vmatprep.subr.bf16.mxu0 0
      %1661 = vmatpush1.bf16.msra.mxu0 %v1644
      %1662 = vmatprep.subr.bf16.mxu0 0
      %1663 = vmatpush1.bf16.msra.mxu0 %v1645
      %1664 = vmatprep.subr.bf16.mxu0 0
      %1665 = vmatpush1.bf16.msra.mxu0 %v1646
      %1666 = vmatprep.subr.bf16.mxu0 0
      %1667 = vmatpush1.bf16.msra.mxu0 %v1647
      %1668 = vmatprep.subr.bf16.mxu0 0
      %1669 = vmatpush1.bf16.msra.mxu0 %v1648
      %1670 = vmatprep.subr.bf16.mxu0 0
      %1671 = vmatpush1.bf16.msra.mxu0 %v1649
      %1672 = vmatprep.subr.bf16.mxu0 0
      %1673 = vmatpush1.bf16.msra.mxu0 %v1650
      %1674 = vmatprep.subr.bf16.mxu0 0
      %1675 = vmatpush1.bf16.msra.mxu0 %v1651
      %1676 = vmatprep.subr.bf16.mxu0 0
      %1677 = vmatpush1.bf16.msra.mxu0 0
      %1678 = vmatprep.subr.bf16.mxu0 0
      %1679 = vmatpush1.bf16.msra.mxu0 0
      %1680 = vmatprep.subr.bf16.mxu0 0
      %1681 = vmatpush1.bf16.msra.mxu0 0
      %1682 = vmatprep.subr.bf16.mxu0 0
      %1683 = vmatpush1.bf16.msra.mxu0 0
      %1684 = vmatprep.subr.bf16.mxu0 0
      %1685 = vmatpush1.bf16.msra.mxu0 0
      %1686 = vmatprep.subr.bf16.mxu0 0
      %1687 = vmatpush1.bf16.msra.mxu0 0
      %1688 = vmatprep.subr.bf16.mxu0 0
      %1689 = vmatpush1.bf16.msra.mxu0 0
      %1690 = vmatprep.subr.bf16.mxu0 0
      %1691 = vmatpush1.bf16.msra.mxu0 0
      %1692 = vmatprep.mubr.bf16.mxu0 0
      %1693 = vmatmul.mubr.bf16.gmra.mrb[0].mxu0 %v1579
      %v1694 = vpop.f32.mrb[0].mxu0
      %v1695 = vadd.f32 0.0, %v1694
      %v1696 = vpop.f32.mrb[0].mxu0
      %v1697 = vpop.f32.mrb[0].mxu0
      %v1698 = vadd.f32 0.0, %v1697
      %v1699 = vpop.f32.mrb[0].mxu0
      %1700 = vmatprep.mubr.bf16.mxu0 0
      %1701 = vmatmul.mubr.bf16.gmra.mrb[0].mxu0 %v1580
      %v1702 = vpop.f32.mrb[0].mxu0
      %v1703 = vadd.f32 0.0, %v1702
      %v1704 = vpop.f32.mrb[0].mxu0
      %v1705 = vpop.f32.mrb[0].mxu0
      %v1706 = vadd.f32 0.0, %v1705
      %v1707 = vpop.f32.mrb[0].mxu0
      %1708 = vmatprep.mubr.bf16.mxu0 0
      %1709 = vmatmul.mubr.bf16.gmra.mrb[0].mxu0 %v1581
      %v1710 = vpop.f32.mrb[0].mxu0
      %v1711 = vadd.f32 0.0, %v1710
      %v1712 = vpop.f32.mrb[0].mxu0
      %v1713 = vpop.f32.mrb[0].mxu0
      %v1714 = vadd.f32 0.0, %v1713
      %v1715 = vpop.f32.mrb[0].mxu0
      %1716 = vmatprep.mubr.bf16.mxu0 0
      %1717 = vmatmul.mubr.bf16.gmra.mrb[0].mxu0 %v1582
      %v1718 = vpop.f32.mrb[0].mxu0
      %v1719 = vadd.f32 0.0, %v1718
      %v1720 = vpop.f32.mrb[0].mxu0
      %v1721 = vpop.f32.mrb[0].mxu0
      %v1722 = vadd.f32 0.0, %v1721
      %v1723 = vpop.f32.mrb[0].mxu0
      %1724 = vmatprep.mubr.bf16.mxu0 0
      %1725 = vmatmul.mubr.bf16.gmra.mrb[0].mxu0 %v1583
      %v1726 = vpop.f32.mrb[0].mxu0
      %v1727 = vadd.f32 0.0, %v1726
      %v1728 = vpop.f32.mrb[0].mxu0
      %v1729 = vpop.f32.mrb[0].mxu0
      %v1730 = vadd.f32 0.0, %v1729
      %v1731 = vpop.f32.mrb[0].mxu0
      %1732 = vmatprep.mubr.bf16.mxu0 0
      %1733 = vmatmul.mubr.bf16.gmra.mrb[0].mxu0 %v1584
      %v1734 = vpop.f32.mrb[0].mxu0
      %v1735 = vadd.f32 0.0, %v1734
      %v1736 = vpop.f32.mrb[0].mxu0
      %v1737 = vpop.f32.mrb[0].mxu0
      %v1738 = vadd.f32 0.0, %v1737
      %v1739 = vpop.f32.mrb[0].mxu0
      %1740 = vmatprep.mubr.bf16.mxu0 0
      %1741 = vmatmul.mubr.bf16.gmra.mrb[0].mxu0 %v1585
      %v1742 = vpop.f32.mrb[0].mxu0
      %v1743 = vadd.f32 0.0, %v1742
      %v1744 = vpop.f32.mrb[0].mxu0
      %v1745 = vpop.f32.mrb[0].mxu0
      %v1746 = vadd.f32 0.0, %v1745
      %v1747 = vpop.f32.mrb[0].mxu0
      %1748 = vmatprep.mubr.bf16.mxu0 0
      %1749 = vmatmul.mubr.bf16.gmra.mrb[0].mxu0 %v1586
      %v1750 = vpop.f32.mrb[0].mxu0
      %v1751 = vadd.f32 0.0, %v1750
      %v1752 = vpop.f32.mrb[0].mxu0
      %v1753 = vpop.f32.mrb[0].mxu0
      %v1754 = vadd.f32 0.0, %v1753
      %v1755 = vpop.f32.mrb[0].mxu0
      %1756 = vmatprep.mubr.bf16.mxu0 0
      %1757 = vmatmul.mubr.bf16.gmra.mrb[0].mxu0 %v1587
      %v1758 = vpop.f32.mrb[0].mxu0
      %v1759 = vadd.f32 0.0, %v1758
      %v1760 = vpop.f32.mrb[0].mxu0
      %v1761 = vpop.f32.mrb[0].mxu0
      %v1762 = vadd.f32 0.0, %v1761
      %v1763 = vpop.f32.mrb[0].mxu0
      %1764 = vmatprep.mubr.bf16.mxu0 0
      %1765 = vmatmul.mubr.bf16.gmra.mrb[0].mxu0 %v1588
      %v1766 = vpop.f32.mrb[0].mxu0
      %v1767 = vadd.f32 0.0, %v1766
      %v1768 = vpop.f32.mrb[0].mxu0
      %v1769 = vpop.f32.mrb[0].mxu0
      %v1770 = vadd.f32 0.0, %v1769
      %v1771 = vpop.f32.mrb[0].mxu0
      %1772 = vmatprep.mubr.bf16.mxu0 0
      %1773 = vmatmul.mubr.bf16.gmra.mrb[0].mxu0 %v1589
      %v1774 = vpop.f32.mrb[0].mxu0
      %v1775 = vadd.f32 0.0, %v1774
      %v1776 = vpop.f32.mrb[0].mxu0
      %v1777 = vpop.f32.mrb[0].mxu0
      %v1778 = vadd.f32 0.0, %v1777
      %v1779 = vpop.f32.mrb[0].mxu0
      %1780 = vmatprep.mubr.bf16.mxu0 0
      %1781 = vmatmul.mubr.bf16.gmra.mrb[0].mxu0 %v1590
      %v1782 = vpop.f32.mrb[0].mxu0
      %v1783 = vadd.f32 0.0, %v1782
      %v1784 = vpop.f32.mrb[0].mxu0
      %v1785 = vpop.f32.mrb[0].mxu0
      %v1786 = vadd.f32 0.0, %v1785
      %v1787 = vpop.f32.mrb[0].mxu0
      %1788 = vmatprep.mubr.bf16.mxu0 0
      %1789 = vmatmul.mubr.bf16.gmra.mrb[0].mxu0 %v1591
      %v1790 = vpop.f32.mrb[0].mxu0
      %v1791 = vadd.f32 0.0, %v1790
      %v1792 = vpop.f32.mrb[0].mxu0
      %v1793 = vpop.f32.mrb[0].mxu0
      %v1794 = vadd.f32 0.0, %v1793
      %v1795 = vpop.f32.mrb[0].mxu0
      %1796 = vmatprep.mubr.bf16.mxu0 0
      %1797 = vmatmul.mubr.bf16.gmra.mrb[0].mxu0 %v1592
      %v1798 = vpop.f32.mrb[0].mxu0
      %v1799 = vadd.f32 0.0, %v1798
      %v1800 = vpop.f32.mrb[0].mxu0
      %v1801 = vpop.f32.mrb[0].mxu0
      %v1802 = vadd.f32 0.0, %v1801
      %v1803 = vpop.f32.mrb[0].mxu0
      %1804 = vmatprep.mubr.bf16.mxu0 0
      %1805 = vmatmul.mubr.bf16.gmra.mrb[0].mxu0 %v1593
      %v1806 = vpop.f32.mrb[0].mxu0
      %v1807 = vadd.f32 0.0, %v1806
      %v1808 = vpop.f32.mrb[0].mxu0
      %v1809 = vpop.f32.mrb[0].mxu0
      %v1810 = vadd.f32 0.0, %v1809
      %v1811 = vpop.f32.mrb[0].mxu0
      %1812 = vmatprep.mubr.bf16.mxu0 0
      %1813 = vmatmul.mubr.bf16.gmra.mrb[0].mxu0 %v1594
      %v1814 = vpop.f32.mrb[0].mxu0
      %v1815 = vadd.f32 0.0, %v1814
      %v1816 = vpop.f32.mrb[0].mxu0
      %v1817 = vpop.f32.mrb[0].mxu0
      %v1818 = vadd.f32 0.0, %v1817
      %v1819 = vpop.f32.mrb[0].mxu0
      %1820 = vdwg.mxu0
      %v1821 = vadd.f32 %v1515, %v1695
      %v1822 = vadd.f32 %v1516, %v1698
      %v1823 = vadd.f32 %v1517, %v1703
      %v1824 = vadd.f32 %v1518, %v1706
      %v1825 = vadd.f32 %v1519, %v1711
      %v1826 = vadd.f32 %v1520, %v1714
      %v1827 = vadd.f32 %v1521, %v1719
      %v1828 = vadd.f32 %v1522, %v1722
      %v1829 = vadd.f32 %v1523, %v1727
      %v1830 = vadd.f32 %v1524, %v1730
      %v1831 = vadd.f32 %v1525, %v1735
      %v1832 = vadd.f32 %v1526, %v1738
      %v1833 = vadd.f32 %v1527, %v1743
      %v1834 = vadd.f32 %v1528, %v1746
      %v1835 = vadd.f32 %v1529, %v1751
      %v1836 = vadd.f32 %v1530, %v1754
      %v1837 = vadd.f32 %v1531, %v1759
      %v1838 = vadd.f32 %v1532, %v1762
      %v1839 = vadd.f32 %v1533, %v1767
      %v1840 = vadd.f32 %v1534, %v1770
      %v1841 = vadd.f32 %v1535, %v1775
      %v1842 = vadd.f32 %v1536, %v1778
      %v1843 = vadd.f32 %v1537, %v1783
      %v1844 = vadd.f32 %v1538, %v1786
      %v1845 = vadd.f32 %v1539, %v1791
      %v1846 = vadd.f32 %v1540, %v1794
      %v1847 = vadd.f32 %v1541, %v1799
      %v1848 = vadd.f32 %v1542, %v1802
      %v1849 = vadd.f32 %v1543, %v1807
      %v1850 = vadd.f32 %v1544, %v1810
      %v1851 = vadd.f32 %v1545, %v1815
      %v1852 = vadd.f32 %v1546, %v1818
      %v1853 = vld [vmem:[%s661 + $0x1] sm:$0xff]
      %v1854 = vld [vmem:[%s661 + $0x9] sm:$0xff]
      %v1855 = vld [vmem:[%s661 + $0x19] sm:$0xff]
      %v1856 = vld [vmem:[%s661 + $0x21] sm:$0xff]
      %v1857 = vld [vmem:[%s661 + $0x31] sm:$0xff]
      %v1858 = vld [vmem:[%s661 + $0x39] sm:$0xff]
      %v1859 = vld [vmem:[%s661 + $0x49] sm:$0xff]
      %v1860 = vld [vmem:[%s661 + $0x51] sm:$0xff]
      %v1861 = vld [vmem:[%s661 + $0x61] sm:$0xff]
      %v1862 = vld [vmem:[%s661 + $0x69] sm:$0xff]
      %v1863 = vld [vmem:[%s661 + $0x79] sm:$0xff]
      %v1864 = vld [vmem:[%s661 + $0x81] sm:$0xff]
      %v1865 = vld [vmem:[%s661 + $0x91] sm:$0xff]
      %v1866 = vld [vmem:[%s661 + $0x99] sm:$0xff]
      %v1867 = vld [vmem:[%s661 + $0xa9] sm:$0xff]
      %v1868 = vld [vmem:[%s661 + $0xb1] sm:$0xff]
      %v1869 = vld [vmem:[%s661 + $0xc1] sm:$0xff]
      %v1870 = vld [vmem:[%s661 + $0xc9] sm:$0xff]
      %v1871 = vld [vmem:[%s661 + $0xd9] sm:$0xff]
      %v1872 = vld [vmem:[%s661 + $0xe1] sm:$0xff]
      %v1873 = vld [vmem:[%s661 + $0xf1] sm:$0xff]
      %v1874 = vld [vmem:[%s661 + $0xf9] sm:$0xff]
      %v1875 = vld [vmem:[%s661 + $0x109] sm:$0xff]
      %v1876 = vld [vmem:[%s661 + $0x111] sm:$0xff]
      %v1877 = vld [vmem:[%s661 + $0x121] sm:$0xff]
      %v1878 = vld [vmem:[%s661 + $0x129] sm:$0xff]
      %v1879 = vld [vmem:[%s661 + $0x139] sm:$0xff]
      %v1880 = vld [vmem:[%s661 + $0x141] sm:$0xff]
      %v1881 = vld [vmem:[%s661 + $0x151] sm:$0xff]
      %v1882 = vld [vmem:[%s661 + $0x159] sm:$0xff]
      %v1883 = vld [vmem:[%s661 + $0x169] sm:$0xff]
      %v1884 = vld [vmem:[%s661 + $0x171] sm:$0xff]
      %v1885 = vpack.c.bf16 %v1854, %v1853
      %v1886 = vpack.c.bf16 %v1856, %v1855
      %v1887 = vpack.c.bf16 %v1858, %v1857
      %v1888 = vpack.c.bf16 %v1860, %v1859
      %v1889 = vpack.c.bf16 %v1862, %v1861
      %v1890 = vpack.c.bf16 %v1864, %v1863
      %v1891 = vpack.c.bf16 %v1866, %v1865
      %v1892 = vpack.c.bf16 %v1868, %v1867
      %v1893 = vpack.c.bf16 %v1870, %v1869
      %v1894 = vpack.c.bf16 %v1872, %v1871
      %v1895 = vpack.c.bf16 %v1874, %v1873
      %v1896 = vpack.c.bf16 %v1876, %v1875
      %v1897 = vpack.c.bf16 %v1878, %v1877
      %v1898 = vpack.c.bf16 %v1880, %v1879
      %v1899 = vpack.c.bf16 %v1882, %v1881
      %v1900 = vpack.c.bf16 %v1884, %v1883
      %s1901 = scalar_lea.vmem %s3, 256
      %v1902 = vld [vmem:[%s1901] sm:$0xf]
      %v1903 = vld [vmem:[%s1901 + $0x4] sm:$0xf]
      %v1904 = vld [vmem:[%s1901 + $0x8] sm:$0xf]
      %v1905 = vld [vmem:[%s1901 + $0xc] sm:$0xf]
      %v1906 = vld [vmem:[%s1901 + $0x10] sm:$0xf]
      %v1907 = vld [vmem:[%s1901 + $0x14] sm:$0xf]
      %v1908 = vld [vmem:[%s1901 + $0x18] sm:$0xf]
      %v1909 = vld [vmem:[%s1901 + $0x1c] sm:$0xf]
      %v1910 = vld [vmem:[%s1901 + $0x20] sm:$0xf]
      %v1911 = vld [vmem:[%s1901 + $0x24] sm:$0xf]
      %v1912 = vld [vmem:[%s1901 + $0x28] sm:$0xf]
      %v1913 = vld [vmem:[%s1901 + $0x2c] sm:$0xf]
      %v1914 = vld [vmem:[%s1901 + $0x30] sm:$0xf]
      %v1915 = vld [vmem:[%s1901 + $0x34] sm:$0xf]
      %v1916 = vld [vmem:[%s1901 + $0x38] sm:$0xf]
      %v1917 = vld [vmem:[%s1901 + $0x3c] sm:$0xf]
      %v1934 = vunpack.c.l.b16 %v1902
      %v1935 = vunpack.c.l.b16 %v1903
      %v1936 = vunpack.c.l.b16 %v1904
      %v1937 = vunpack.c.l.b16 %v1905
      %v1938 = vunpack.c.l.b16 %v1906
      %v1939 = vunpack.c.l.b16 %v1907
      %v1940 = vunpack.c.l.b16 %v1908
      %v1941 = vunpack.c.l.b16 %v1909
      %v1942 = vunpack.c.l.b16 %v1910
      %v1943 = vunpack.c.l.b16 %v1911
      %v1944 = vunpack.c.l.b16 %v1912
      %v1945 = vunpack.c.l.b16 %v1913
      %v1946 = vunpack.c.l.b16 %v1914
      %v1947 = vunpack.c.l.b16 %v1915
      %v1948 = vunpack.c.l.b16 %v1916
      %v1949 = vunpack.c.l.b16 %v1917
      %v1950 = vpack.c.b16 %v1935, %v1934
      %v1951 = vpack.c.b16 %v1937, %v1936
      %v1952 = vpack.c.b16 %v1939, %v1938
      %v1953 = vpack.c.b16 %v1941, %v1940
      %v1954 = vpack.c.b16 %v1943, %v1942
      %v1955 = vpack.c.b16 %v1945, %v1944
      %v1956 = vpack.c.b16 %v1947, %v1946
      %v1957 = vpack.c.b16 %v1949, %v1948
      %1966 = vmatprep.subr.bf16.mxu0 0
      %1967 = vmatpush1.bf16.msra.mxu0 %v1950
      %1968 = vmatprep.subr.bf16.mxu0 0
      %1969 = vmatpush1.bf16.msra.mxu0 %v1951
      %1970 = vmatprep.subr.bf16.mxu0 0
      %1971 = vmatpush1.bf16.msra.mxu0 %v1952
      %1972 = vmatprep.subr.bf16.mxu0 0
      %1973 = vmatpush1.bf16.msra.mxu0 %v1953
      %1974 = vmatprep.subr.bf16.mxu0 0
      %1975 = vmatpush1.bf16.msra.mxu0 %v1954
      %1976 = vmatprep.subr.bf16.mxu0 0
      %1977 = vmatpush1.bf16.msra.mxu0 %v1955
      %1978 = vmatprep.subr.bf16.mxu0 0
      %1979 = vmatpush1.bf16.msra.mxu0 %v1956
      %1980 = vmatprep.subr.bf16.mxu0 0
      %1981 = vmatpush1.bf16.msra.mxu0 %v1957
      %1982 = vmatprep.subr.bf16.mxu0 0
      %1983 = vmatpush1.bf16.msra.mxu0 0
      %1984 = vmatprep.subr.bf16.mxu0 0
      %1985 = vmatpush1.bf16.msra.mxu0 0
      %1986 = vmatprep.subr.bf16.mxu0 0
      %1987 = vmatpush1.bf16.msra.mxu0 0
      %1988 = vmatprep.subr.bf16.mxu0 0
      %1989 = vmatpush1.bf16.msra.mxu0 0
      %1990 = vmatprep.subr.bf16.mxu0 0
      %1991 = vmatpush1.bf16.msra.mxu0 0
      %1992 = vmatprep.subr.bf16.mxu0 0
      %1993 = vmatpush1.bf16.msra.mxu0 0
      %1994 = vmatprep.subr.bf16.mxu0 0
      %1995 = vmatpush1.bf16.msra.mxu0 0
      %1996 = vmatprep.subr.bf16.mxu0 0
      %1997 = vmatpush1.bf16.msra.mxu0 0
      %1998 = vmatprep.mubr.bf16.mxu0 0
      %1999 = vmatmul.mubr.bf16.gmra.mrb[0].mxu0 %v1885
      %v2000 = vpop.f32.mrb[0].mxu0
      %v2001 = vadd.f32 0.0, %v2000
      %v2002 = vpop.f32.mrb[0].mxu0
      %v2003 = vpop.f32.mrb[0].mxu0
      %v2004 = vadd.f32 0.0, %v2003
      %v2005 = vpop.f32.mrb[0].mxu0
      %2006 = vmatprep.mubr.bf16.mxu0 0
      %2007 = vmatmul.mubr.bf16.gmra.mrb[0].mxu0 %v1886
      %v2008 = vpop.f32.mrb[0].mxu0
      %v2009 = vadd.f32 0.0, %v2008
      %v2010 = vpop.f32.mrb[0].mxu0
      %v2011 = vpop.f32.mrb[0].mxu0
      %v2012 = vadd.f32 0.0, %v2011
      %v2013 = vpop.f32.mrb[0].mxu0
      %2014 = vmatprep.mubr.bf16.mxu0 0
      %2015 = vmatmul.mubr.bf16.gmra.mrb[0].mxu0 %v1887
      %v2016 = vpop.f32.mrb[0].mxu0
      %v2017 = vadd.f32 0.0, %v2016
      %v2018 = vpop.f32.mrb[0].mxu0
      %v2019 = vpop.f32.mrb[0].mxu0
      %v2020 = vadd.f32 0.0, %v2019
      %v2021 = vpop.f32.mrb[0].mxu0
      %2022 = vmatprep.mubr.bf16.mxu0 0
      %2023 = vmatmul.mubr.bf16.gmra.mrb[0].mxu0 %v1888
      %v2024 = vpop.f32.mrb[0].mxu0
      %v2025 = vadd.f32 0.0, %v2024
      %v2026 = vpop.f32.mrb[0].mxu0
      %v2027 = vpop.f32.mrb[0].mxu0
      %v2028 = vadd.f32 0.0, %v2027
      %v2029 = vpop.f32.mrb[0].mxu0
      %2030 = vmatprep.mubr.bf16.mxu0 0
      %2031 = vmatmul.mubr.bf16.gmra.mrb[0].mxu0 %v1889
      %v2032 = vpop.f32.mrb[0].mxu0
      %v2033 = vadd.f32 0.0, %v2032
      %v2034 = vpop.f32.mrb[0].mxu0
      %v2035 = vpop.f32.mrb[0].mxu0
      %v2036 = vadd.f32 0.0, %v2035
      %v2037 = vpop.f32.mrb[0].mxu0
      %2038 = vmatprep.mubr.bf16.mxu0 0
      %2039 = vmatmul.mubr.bf16.gmra.mrb[0].mxu0 %v1890
      %v2040 = vpop.f32.mrb[0].mxu0
      %v2041 = vadd.f32 0.0, %v2040
      %v2042 = vpop.f32.mrb[0].mxu0
      %v2043 = vpop.f32.mrb[0].mxu0
      %v2044 = vadd.f32 0.0, %v2043
      %v2045 = vpop.f32.mrb[0].mxu0
      %2046 = vmatprep.mubr.bf16.mxu0 0
      %2047 = vmatmul.mubr.bf16.gmra.mrb[0].mxu0 %v1891
      %v2048 = vpop.f32.mrb[0].mxu0
      %v2049 = vadd.f32 0.0, %v2048
      %v2050 = vpop.f32.mrb[0].mxu0
      %v2051 = vpop.f32.mrb[0].mxu0
      %v2052 = vadd.f32 0.0, %v2051
      %v2053 = vpop.f32.mrb[0].mxu0
      %2054 = vmatprep.mubr.bf16.mxu0 0
      %2055 = vmatmul.mubr.bf16.gmra.mrb[0].mxu0 %v1892
      %v2056 = vpop.f32.mrb[0].mxu0
      %v2057 = vadd.f32 0.0, %v2056
      %v2058 = vpop.f32.mrb[0].mxu0
      %v2059 = vpop.f32.mrb[0].mxu0
      %v2060 = vadd.f32 0.0, %v2059
      %v2061 = vpop.f32.mrb[0].mxu0
      %2062 = vmatprep.mubr.bf16.mxu0 0
      %2063 = vmatmul.mubr.bf16.gmra.mrb[0].mxu0 %v1893
      %v2064 = vpop.f32.mrb[0].mxu0
      %v2065 = vadd.f32 0.0, %v2064
      %v2066 = vpop.f32.mrb[0].mxu0
      %v2067 = vpop.f32.mrb[0].mxu0
      %v2068 = vadd.f32 0.0, %v2067
      %v2069 = vpop.f32.mrb[0].mxu0
      %2070 = vmatprep.mubr.bf16.mxu0 0
      %2071 = vmatmul.mubr.bf16.gmra.mrb[0].mxu0 %v1894
      %v2072 = vpop.f32.mrb[0].mxu0
      %v2073 = vadd.f32 0.0, %v2072
      %v2074 = vpop.f32.mrb[0].mxu0
      %v2075 = vpop.f32.mrb[0].mxu0
      %v2076 = vadd.f32 0.0, %v2075
      %v2077 = vpop.f32.mrb[0].mxu0
      %2078 = vmatprep.mubr.bf16.mxu0 0
      %2079 = vmatmul.mubr.bf16.gmra.mrb[0].mxu0 %v1895
      %v2080 = vpop.f32.mrb[0].mxu0
      %v2081 = vadd.f32 0.0, %v2080
      %v2082 = vpop.f32.mrb[0].mxu0
      %v2083 = vpop.f32.mrb[0].mxu0
      %v2084 = vadd.f32 0.0, %v2083
      %v2085 = vpop.f32.mrb[0].mxu0
      %2086 = vmatprep.mubr.bf16.mxu0 0
      %2087 = vmatmul.mubr.bf16.gmra.mrb[0].mxu0 %v1896
      %v2088 = vpop.f32.mrb[0].mxu0
      %v2089 = vadd.f32 0.0, %v2088
      %v2090 = vpop.f32.mrb[0].mxu0
      %v2091 = vpop.f32.mrb[0].mxu0
      %v2092 = vadd.f32 0.0, %v2091
      %v2093 = vpop.f32.mrb[0].mxu0
      %2094 = vmatprep.mubr.bf16.mxu0 0
      %2095 = vmatmul.mubr.bf16.gmra.mrb[0].mxu0 %v1897
      %v2096 = vpop.f32.mrb[0].mxu0
      %v2097 = vadd.f32 0.0, %v2096
      %v2098 = vpop.f32.mrb[0].mxu0
      %v2099 = vpop.f32.mrb[0].mxu0
      %v2100 = vadd.f32 0.0, %v2099
      %v2101 = vpop.f32.mrb[0].mxu0
      %2102 = vmatprep.mubr.bf16.mxu0 0
      %2103 = vmatmul.mubr.bf16.gmra.mrb[0].mxu0 %v1898
      %v2104 = vpop.f32.mrb[0].mxu0
      %v2105 = vadd.f32 0.0, %v2104
      %v2106 = vpop.f32.mrb[0].mxu0
      %v2107 = vpop.f32.mrb[0].mxu0
      %v2108 = vadd.f32 0.0, %v2107
      %v2109 = vpop.f32.mrb[0].mxu0
      %2110 = vmatprep.mubr.bf16.mxu0 0
      %2111 = vmatmul.mubr.bf16.gmra.mrb[0].mxu0 %v1899
      %v2112 = vpop.f32.mrb[0].mxu0
      %v2113 = vadd.f32 0.0, %v2112
      %v2114 = vpop.f32.mrb[0].mxu0
      %v2115 = vpop.f32.mrb[0].mxu0
      %v2116 = vadd.f32 0.0, %v2115
      %v2117 = vpop.f32.mrb[0].mxu0
      %2118 = vmatprep.mubr.bf16.mxu0 0
      %2119 = vmatmul.mubr.bf16.gmra.mrb[0].mxu0 %v1900
      %v2120 = vpop.f32.mrb[0].mxu0
      %v2121 = vadd.f32 0.0, %v2120
      %v2122 = vpop.f32.mrb[0].mxu0
      %v2123 = vpop.f32.mrb[0].mxu0
      %v2124 = vadd.f32 0.0, %v2123
      %v2125 = vpop.f32.mrb[0].mxu0
      %2126 = vdwg.mxu0
      %v2127 = vadd.f32 %v1821, %v2001
      %v2128 = vadd.f32 %v1822, %v2004
      %v2129 = vadd.f32 %v1823, %v2009
      %v2130 = vadd.f32 %v1824, %v2012
      %v2131 = vadd.f32 %v1825, %v2017
      %v2132 = vadd.f32 %v1826, %v2020
      %v2133 = vadd.f32 %v1827, %v2025
      %v2134 = vadd.f32 %v1828, %v2028
      %v2135 = vadd.f32 %v1829, %v2033
      %v2136 = vadd.f32 %v1830, %v2036
      %v2137 = vadd.f32 %v1831, %v2041
      %v2138 = vadd.f32 %v1832, %v2044
      %v2139 = vadd.f32 %v1833, %v2049
      %v2140 = vadd.f32 %v1834, %v2052
      %v2141 = vadd.f32 %v1835, %v2057
      %v2142 = vadd.f32 %v1836, %v2060
      %v2143 = vadd.f32 %v1837, %v2065
      %v2144 = vadd.f32 %v1838, %v2068
      %v2145 = vadd.f32 %v1839, %v2073
      %v2146 = vadd.f32 %v1840, %v2076
      %v2147 = vadd.f32 %v1841, %v2081
      %v2148 = vadd.f32 %v1842, %v2084
      %v2149 = vadd.f32 %v1843, %v2089
      %v2150 = vadd.f32 %v1844, %v2092
      %v2151 = vadd.f32 %v1845, %v2097
      %v2152 = vadd.f32 %v1846, %v2100
      %v2153 = vadd.f32 %v1847, %v2105
      %v2154 = vadd.f32 %v1848, %v2108
      %v2155 = vadd.f32 %v1849, %v2113
      %v2156 = vadd.f32 %v1850, %v2116
      %v2157 = vadd.f32 %v1851, %v2121
      %v2158 = vadd.f32 %v1852, %v2124
      %v2159 = vld [vmem:[%s661 + $0x2] sm:$0xff]
      %v2160 = vld [vmem:[%s661 + $0xa] sm:$0xff]
      %v2161 = vld [vmem:[%s661 + $0x1a] sm:$0xff]
      %v2162 = vld [vmem:[%s661 + $0x22] sm:$0xff]
      %v2163 = vld [vmem:[%s661 + $0x32] sm:$0xff]
      %v2164 = vld [vmem:[%s661 + $0x3a] sm:$0xff]
      %v2165 = vld [vmem:[%s661 + $0x4a] sm:$0xff]
      %v2166 = vld [vmem:[%s661 + $0x52] sm:$0xff]
      %v2167 = vld [vmem:[%s661 + $0x62] sm:$0xff]
      %v2168 = vld [vmem:[%s661 + $0x6a] sm:$0xff]
      %v2169 = vld [vmem:[%s661 + $0x7a] sm:$0xff]
      %v2170 = vld [vmem:[%s661 + $0x82] sm:$0xff]
      %v2171 = vld [vmem:[%s661 + $0x92] sm:$0xff]
      %v2172 = vld [vmem:[%s661 + $0x9a] sm:$0xff]
      %v2173 = vld [vmem:[%s661 + $0xaa] sm:$0xff]
      %v2174 = vld [vmem:[%s661 + $0xb2] sm:$0xff]
      %v2175 = vld [vmem:[%s661 + $0xc2] sm:$0xff]
      %v2176 = vld [vmem:[%s661 + $0xca] sm:$0xff]
      %v2177 = vld [vmem:[%s661 + $0xda] sm:$0xff]
      %v2178 = vld [vmem:[%s661 + $0xe2] sm:$0xff]
      %v2179 = vld [vmem:[%s661 + $0xf2] sm:$0xff]
      %v2180 = vld [vmem:[%s661 + $0xfa] sm:$0xff]
      %v2181 = vld [vmem:[%s661 + $0x10a] sm:$0xff]
      %v2182 = vld [vmem:[%s661 + $0x112] sm:$0xff]
      %v2183 = vld [vmem:[%s661 + $0x122] sm:$0xff]
      %v2184 = vld [vmem:[%s661 + $0x12a] sm:$0xff]
      %v2185 = vld [vmem:[%s661 + $0x13a] sm:$0xff]
      %v2186 = vld [vmem:[%s661 + $0x142] sm:$0xff]
      %v2187 = vld [vmem:[%s661 + $0x152] sm:$0xff]
      %v2188 = vld [vmem:[%s661 + $0x15a] sm:$0xff]
      %v2189 = vld [vmem:[%s661 + $0x16a] sm:$0xff]
      %v2190 = vld [vmem:[%s661 + $0x172] sm:$0xff]
      %v2191 = vpack.c.bf16 %v2160, %v2159
      %v2192 = vpack.c.bf16 %v2162, %v2161
      %v2193 = vpack.c.bf16 %v2164, %v2163
      %v2194 = vpack.c.bf16 %v2166, %v2165
      %v2195 = vpack.c.bf16 %v2168, %v2167
      %v2196 = vpack.c.bf16 %v2170, %v2169
      %v2197 = vpack.c.bf16 %v2172, %v2171
      %v2198 = vpack.c.bf16 %v2174, %v2173
      %v2199 = vpack.c.bf16 %v2176, %v2175
      %v2200 = vpack.c.bf16 %v2178, %v2177
      %v2201 = vpack.c.bf16 %v2180, %v2179
      %v2202 = vpack.c.bf16 %v2182, %v2181
      %v2203 = vpack.c.bf16 %v2184, %v2183
      %v2204 = vpack.c.bf16 %v2186, %v2185
      %v2205 = vpack.c.bf16 %v2188, %v2187
      %v2206 = vpack.c.bf16 %v2190, %v2189
      %s2207 = scalar_lea.vmem %s3, 320
      %v2208 = vld [vmem:[%s2207] sm:$0xf]
      %v2209 = vld [vmem:[%s2207 + $0x4] sm:$0xf]
      %v2210 = vld [vmem:[%s2207 + $0x8] sm:$0xf]
      %v2211 = vld [vmem:[%s2207 + $0xc] sm:$0xf]
      %v2212 = vld [vmem:[%s2207 + $0x10] sm:$0xf]
      %v2213 = vld [vmem:[%s2207 + $0x14] sm:$0xf]
      %v2214 = vld [vmem:[%s2207 + $0x18] sm:$0xf]
      %v2215 = vld [vmem:[%s2207 + $0x1c] sm:$0xf]
      %v2216 = vld [vmem:[%s2207 + $0x20] sm:$0xf]
      %v2217 = vld [vmem:[%s2207 + $0x24] sm:$0xf]
      %v2218 = vld [vmem:[%s2207 + $0x28] sm:$0xf]
      %v2219 = vld [vmem:[%s2207 + $0x2c] sm:$0xf]
      %v2220 = vld [vmem:[%s2207 + $0x30] sm:$0xf]
      %v2221 = vld [vmem:[%s2207 + $0x34] sm:$0xf]
      %v2222 = vld [vmem:[%s2207 + $0x38] sm:$0xf]
      %v2223 = vld [vmem:[%s2207 + $0x3c] sm:$0xf]
      %v2240 = vunpack.c.l.b16 %v2208
      %v2241 = vunpack.c.l.b16 %v2209
      %v2242 = vunpack.c.l.b16 %v2210
      %v2243 = vunpack.c.l.b16 %v2211
      %v2244 = vunpack.c.l.b16 %v2212
      %v2245 = vunpack.c.l.b16 %v2213
      %v2246 = vunpack.c.l.b16 %v2214
      %v2247 = vunpack.c.l.b16 %v2215
      %v2248 = vunpack.c.l.b16 %v2216
      %v2249 = vunpack.c.l.b16 %v2217
      %v2250 = vunpack.c.l.b16 %v2218
      %v2251 = vunpack.c.l.b16 %v2219
      %v2252 = vunpack.c.l.b16 %v2220
      %v2253 = vunpack.c.l.b16 %v2221
      %v2254 = vunpack.c.l.b16 %v2222
      %v2255 = vunpack.c.l.b16 %v2223
      %v2256 = vpack.c.b16 %v2241, %v2240
      %v2257 = vpack.c.b16 %v2243, %v2242
      %v2258 = vpack.c.b16 %v2245, %v2244
      %v2259 = vpack.c.b16 %v2247, %v2246
      %v2260 = vpack.c.b16 %v2249, %v2248
      %v2261 = vpack.c.b16 %v2251, %v2250
      %v2262 = vpack.c.b16 %v2253, %v2252
      %v2263 = vpack.c.b16 %v2255, %v2254
      %2272 = vmatprep.subr.bf16.mxu0 0
      %2273 = vmatpush1.bf16.msra.mxu0 %v2256
      %2274 = vmatprep.subr.bf16.mxu0 0
      %2275 = vmatpush1.bf16.msra.mxu0 %v2257
      %2276 = vmatprep.subr.bf16.mxu0 0
      %2277 = vmatpush1.bf16.msra.mxu0 %v2258
      %2278 = vmatprep.subr.bf16.mxu0 0
      %2279 = vmatpush1.bf16.msra.mxu0 %v2259
      %2280 = vmatprep.subr.bf16.mxu0 0
      %2281 = vmatpush1.bf16.msra.mxu0 %v2260
      %2282 = vmatprep.subr.bf16.mxu0 0
      %2283 = vmatpush1.bf16.msra.mxu0 %v2261
      %2284 = vmatprep.subr.bf16.mxu0 0
      %2285 = vmatpush1.bf16.msra.mxu0 %v2262
      %2286 = vmatprep.subr.bf16.mxu0 0
      %2287 = vmatpush1.bf16.msra.mxu0 %v2263
      %2288 = vmatprep.subr.bf16.mxu0 0
      %2289 = vmatpush1.bf16.msra.mxu0 0
      %2290 = vmatprep.subr.bf16.mxu0 0
      %2291 = vmatpush1.bf16.msra.mxu0 0
      %2292 = vmatprep.subr.bf16.mxu0 0
      %2293 = vmatpush1.bf16.msra.mxu0 0
      %2294 = vmatprep.subr.bf16.mxu0 0
      %2295 = vmatpush1.bf16.msra.mxu0 0
      %2296 = vmatprep.subr.bf16.mxu0 0
      %2297 = vmatpush1.bf16.msra.mxu0 0
      %2298 = vmatprep.subr.bf16.mxu0 0
      %2299 = vmatpush1.bf16.msra.mxu0 0
      %2300 = vmatprep.subr.bf16.mxu0 0
      %2301 = vmatpush1.bf16.msra.mxu0 0
      %2302 = vmatprep.subr.bf16.mxu0 0
      %2303 = vmatpush1.bf16.msra.mxu0 0
      %2304 = vmatprep.mubr.bf16.mxu0 0
      %2305 = vmatmul.mubr.bf16.gmra.mrb[0].mxu0 %v2191
      %v2306 = vpop.f32.mrb[0].mxu0
      %v2307 = vadd.f32 0.0, %v2306
      %v2308 = vpop.f32.mrb[0].mxu0
      %v2309 = vpop.f32.mrb[0].mxu0
      %v2310 = vadd.f32 0.0, %v2309
      %v2311 = vpop.f32.mrb[0].mxu0
      %2312 = vmatprep.mubr.bf16.mxu0 0
      %2313 = vmatmul.mubr.bf16.gmra.mrb[0].mxu0 %v2192
      %v2314 = vpop.f32.mrb[0].mxu0
      %v2315 = vadd.f32 0.0, %v2314
      %v2316 = vpop.f32.mrb[0].mxu0
      %v2317 = vpop.f32.mrb[0].mxu0
      %v2318 = vadd.f32 0.0, %v2317
      %v2319 = vpop.f32.mrb[0].mxu0
      %2320 = vmatprep.mubr.bf16.mxu0 0
      %2321 = vmatmul.mubr.bf16.gmra.mrb[0].mxu0 %v2193
      %v2322 = vpop.f32.mrb[0].mxu0
      %v2323 = vadd.f32 0.0, %v2322
      %v2324 = vpop.f32.mrb[0].mxu0
      %v2325 = vpop.f32.mrb[0].mxu0
      %v2326 = vadd.f32 0.0, %v2325
      %v2327 = vpop.f32.mrb[0].mxu0
      %2328 = vmatprep.mubr.bf16.mxu0 0
      %2329 = vmatmul.mubr.bf16.gmra.mrb[0].mxu0 %v2194
      %v2330 = vpop.f32.mrb[0].mxu0
      %v2331 = vadd.f32 0.0, %v2330
      %v2332 = vpop.f32.mrb[0].mxu0
      %v2333 = vpop.f32.mrb[0].mxu0
      %v2334 = vadd.f32 0.0, %v2333
      %v2335 = vpop.f32.mrb[0].mxu0
      %2336 = vmatprep.mubr.bf16.mxu0 0
      %2337 = vmatmul.mubr.bf16.gmra.mrb[0].mxu0 %v2195
      %v2338 = vpop.f32.mrb[0].mxu0
      %v2339 = vadd.f32 0.0, %v2338
      %v2340 = vpop.f32.mrb[0].mxu0
      %v2341 = vpop.f32.mrb[0].mxu0
      %v2342 = vadd.f32 0.0, %v2341
      %v2343 = vpop.f32.mrb[0].mxu0
      %2344 = vmatprep.mubr.bf16.mxu0 0
      %2345 = vmatmul.mubr.bf16.gmra.mrb[0].mxu0 %v2196
      %v2346 = vpop.f32.mrb[0].mxu0
      %v2347 = vadd.f32 0.0, %v2346
      %v2348 = vpop.f32.mrb[0].mxu0
      %v2349 = vpop.f32.mrb[0].mxu0
      %v2350 = vadd.f32 0.0, %v2349
      %v2351 = vpop.f32.mrb[0].mxu0
      %2352 = vmatprep.mubr.bf16.mxu0 0
      %2353 = vmatmul.mubr.bf16.gmra.mrb[0].mxu0 %v2197
      %v2354 = vpop.f32.mrb[0].mxu0
      %v2355 = vadd.f32 0.0, %v2354
      %v2356 = vpop.f32.mrb[0].mxu0
      %v2357 = vpop.f32.mrb[0].mxu0
      %v2358 = vadd.f32 0.0, %v2357
      %v2359 = vpop.f32.mrb[0].mxu0
      %2360 = vmatprep.mubr.bf16.mxu0 0
      %2361 = vmatmul.mubr.bf16.gmra.mrb[0].mxu0 %v2198
      %v2362 = vpop.f32.mrb[0].mxu0
      %v2363 = vadd.f32 0.0, %v2362
      %v2364 = vpop.f32.mrb[0].mxu0
      %v2365 = vpop.f32.mrb[0].mxu0
      %v2366 = vadd.f32 0.0, %v2365
      %v2367 = vpop.f32.mrb[0].mxu0
      %2368 = vmatprep.mubr.bf16.mxu0 0
      %2369 = vmatmul.mubr.bf16.gmra.mrb[0].mxu0 %v2199
      %v2370 = vpop.f32.mrb[0].mxu0
      %v2371 = vadd.f32 0.0, %v2370
      %v2372 = vpop.f32.mrb[0].mxu0
      %v2373 = vpop.f32.mrb[0].mxu0
      %v2374 = vadd.f32 0.0, %v2373
      %v2375 = vpop.f32.mrb[0].mxu0
      %2376 = vmatprep.mubr.bf16.mxu0 0
      %2377 = vmatmul.mubr.bf16.gmra.mrb[0].mxu0 %v2200
      %v2378 = vpop.f32.mrb[0].mxu0
      %v2379 = vadd.f32 0.0, %v2378
      %v2380 = vpop.f32.mrb[0].mxu0
      %v2381 = vpop.f32.mrb[0].mxu0
      %v2382 = vadd.f32 0.0, %v2381
      %v2383 = vpop.f32.mrb[0].mxu0
      %2384 = vmatprep.mubr.bf16.mxu0 0
      %2385 = vmatmul.mubr.bf16.gmra.mrb[0].mxu0 %v2201
      %v2386 = vpop.f32.mrb[0].mxu0
      %v2387 = vadd.f32 0.0, %v2386
      %v2388 = vpop.f32.mrb[0].mxu0
      %v2389 = vpop.f32.mrb[0].mxu0
      %v2390 = vadd.f32 0.0, %v2389
      %v2391 = vpop.f32.mrb[0].mxu0
      %2392 = vmatprep.mubr.bf16.mxu0 0
      %2393 = vmatmul.mubr.bf16.gmra.mrb[0].mxu0 %v2202
      %v2394 = vpop.f32.mrb[0].mxu0
      %v2395 = vadd.f32 0.0, %v2394
      %v2396 = vpop.f32.mrb[0].mxu0
      %v2397 = vpop.f32.mrb[0].mxu0
      %v2398 = vadd.f32 0.0, %v2397
      %v2399 = vpop.f32.mrb[0].mxu0
      %2400 = vmatprep.mubr.bf16.mxu0 0
      %2401 = vmatmul.mubr.bf16.gmra.mrb[0].mxu0 %v2203
      %v2402 = vpop.f32.mrb[0].mxu0
      %v2403 = vadd.f32 0.0, %v2402
      %v2404 = vpop.f32.mrb[0].mxu0
      %v2405 = vpop.f32.mrb[0].mxu0
      %v2406 = vadd.f32 0.0, %v2405
      %v2407 = vpop.f32.mrb[0].mxu0
      %2408 = vmatprep.mubr.bf16.mxu0 0
      %2409 = vmatmul.mubr.bf16.gmra.mrb[0].mxu0 %v2204
      %v2410 = vpop.f32.mrb[0].mxu0
      %v2411 = vadd.f32 0.0, %v2410
      %v2412 = vpop.f32.mrb[0].mxu0
      %v2413 = vpop.f32.mrb[0].mxu0
      %v2414 = vadd.f32 0.0, %v2413
      %v2415 = vpop.f32.mrb[0].mxu0
      %2416 = vmatprep.mubr.bf16.mxu0 0
      %2417 = vmatmul.mubr.bf16.gmra.mrb[0].mxu0 %v2205
      %v2418 = vpop.f32.mrb[0].mxu0
      %v2419 = vadd.f32 0.0, %v2418
      %v2420 = vpop.f32.mrb[0].mxu0
      %v2421 = vpop.f32.mrb[0].mxu0
      %v2422 = vadd.f32 0.0, %v2421
      %v2423 = vpop.f32.mrb[0].mxu0
      %2424 = vmatprep.mubr.bf16.mxu0 0
      %2425 = vmatmul.mubr.bf16.gmra.mrb[0].mxu0 %v2206
      %v2426 = vpop.f32.mrb[0].mxu0
      %v2427 = vadd.f32 0.0, %v2426
      %v2428 = vpop.f32.mrb[0].mxu0
      %v2429 = vpop.f32.mrb[0].mxu0
      %v2430 = vadd.f32 0.0, %v2429
      %v2431 = vpop.f32.mrb[0].mxu0
      %2432 = vdwg.mxu0
      %v2433 = vadd.f32 %v2127, %v2307
      %v2434 = vadd.f32 %v2128, %v2310
      %v2435 = vadd.f32 %v2129, %v2315
      %v2436 = vadd.f32 %v2130, %v2318
      %v2437 = vadd.f32 %v2131, %v2323
      %v2438 = vadd.f32 %v2132, %v2326
      %v2439 = vadd.f32 %v2133, %v2331
      %v2440 = vadd.f32 %v2134, %v2334
      %v2441 = vadd.f32 %v2135, %v2339
      %v2442 = vadd.f32 %v2136, %v2342
      %v2443 = vadd.f32 %v2137, %v2347
      %v2444 = vadd.f32 %v2138, %v2350
      %v2445 = vadd.f32 %v2139, %v2355
      %v2446 = vadd.f32 %v2140, %v2358
      %v2447 = vadd.f32 %v2141, %v2363
      %v2448 = vadd.f32 %v2142, %v2366
      %v2449 = vadd.f32 %v2143, %v2371
      %v2450 = vadd.f32 %v2144, %v2374
      %v2451 = vadd.f32 %v2145, %v2379
      %v2452 = vadd.f32 %v2146, %v2382
      %v2453 = vadd.f32 %v2147, %v2387
      %v2454 = vadd.f32 %v2148, %v2390
      %v2455 = vadd.f32 %v2149, %v2395
      %v2456 = vadd.f32 %v2150, %v2398
      %v2457 = vadd.f32 %v2151, %v2403
      %v2458 = vadd.f32 %v2152, %v2406
      %v2459 = vadd.f32 %v2153, %v2411
      %v2460 = vadd.f32 %v2154, %v2414
      %v2461 = vadd.f32 %v2155, %v2419
      %v2462 = vadd.f32 %v2156, %v2422
      %v2463 = vadd.f32 %v2157, %v2427
      %v2464 = vadd.f32 %v2158, %v2430
      %s2465 = scalar_lea.vmem [#allocation2], 48
      %v2466 = vld [vmem:[%s2465] sm:$0xff]
      %v2467 = vld [vmem:[%s2465 + $0x8] sm:$0xff]
      %v2468 = vld [vmem:[%s2465 + $0x18] sm:$0xff]
      %v2469 = vld [vmem:[%s2465 + $0x20] sm:$0xff]
      %v2470 = vld [vmem:[%s2465 + $0x30] sm:$0xff]
      %v2471 = vld [vmem:[%s2465 + $0x38] sm:$0xff]
      %v2472 = vld [vmem:[%s2465 + $0x48] sm:$0xff]
      %v2473 = vld [vmem:[%s2465 + $0x50] sm:$0xff]
      %v2474 = vld [vmem:[%s2465 + $0x60] sm:$0xff]
      %v2475 = vld [vmem:[%s2465 + $0x68] sm:$0xff]
      %v2476 = vld [vmem:[%s2465 + $0x78] sm:$0xff]
      %v2477 = vld [vmem:[%s2465 + $0x80] sm:$0xff]
      %v2478 = vld [vmem:[%s2465 + $0x90] sm:$0xff]
      %v2479 = vld [vmem:[%s2465 + $0x98] sm:$0xff]
      %v2480 = vld [vmem:[%s2465 + $0xa8] sm:$0xff]
      %v2481 = vld [vmem:[%s2465 + $0xb0] sm:$0xff]
      %v2482 = vld [vmem:[%s2465 + $0xc0] sm:$0xff]
      %v2483 = vld [vmem:[%s2465 + $0xc8] sm:$0xff]
      %v2484 = vld [vmem:[%s2465 + $0xd8] sm:$0xff]
      %v2485 = vld [vmem:[%s2465 + $0xe0] sm:$0xff]
      %v2486 = vld [vmem:[%s2465 + $0xf0] sm:$0xff]
      %v2487 = vld [vmem:[%s2465 + $0xf8] sm:$0xff]
      %v2488 = vld [vmem:[%s2465 + $0x108] sm:$0xff]
      %v2489 = vld [vmem:[%s2465 + $0x110] sm:$0xff]
      %v2490 = vld [vmem:[%s2465 + $0x120] sm:$0xff]
      %v2491 = vld [vmem:[%s2465 + $0x128] sm:$0xff]
      %v2492 = vld [vmem:[%s2465 + $0x138] sm:$0xff]
      %v2493 = vld [vmem:[%s2465 + $0x140] sm:$0xff]
      %v2494 = vld [vmem:[%s2465 + $0x150] sm:$0xff]
      %v2495 = vld [vmem:[%s2465 + $0x158] sm:$0xff]
      %v2496 = vld [vmem:[%s2465 + $0x168] sm:$0xff]
      %v2497 = vld [vmem:[%s2465 + $0x170] sm:$0xff]
      %v2498 = vpack.c.bf16 %v2467, %v2466
      %v2499 = vpack.c.bf16 %v2469, %v2468
      %v2500 = vpack.c.bf16 %v2471, %v2470
      %v2501 = vpack.c.bf16 %v2473, %v2472
      %v2502 = vpack.c.bf16 %v2475, %v2474
      %v2503 = vpack.c.bf16 %v2477, %v2476
      %v2504 = vpack.c.bf16 %v2479, %v2478
      %v2505 = vpack.c.bf16 %v2481, %v2480
      %v2506 = vpack.c.bf16 %v2483, %v2482
      %v2507 = vpack.c.bf16 %v2485, %v2484
      %v2508 = vpack.c.bf16 %v2487, %v2486
      %v2509 = vpack.c.bf16 %v2489, %v2488
      %v2510 = vpack.c.bf16 %v2491, %v2490
      %v2511 = vpack.c.bf16 %v2493, %v2492
      %v2512 = vpack.c.bf16 %v2495, %v2494
      %v2513 = vpack.c.bf16 %v2497, %v2496
      %s2514 = scalar_lea.vmem %s3, 384
      %v2515 = vld [vmem:[%s2514] sm:$0xf]
      %v2516 = vld [vmem:[%s2514 + $0x4] sm:$0xf]
      %v2517 = vld [vmem:[%s2514 + $0x8] sm:$0xf]
      %v2518 = vld [vmem:[%s2514 + $0xc] sm:$0xf]
      %v2519 = vld [vmem:[%s2514 + $0x10] sm:$0xf]
      %v2520 = vld [vmem:[%s2514 + $0x14] sm:$0xf]
      %v2521 = vld [vmem:[%s2514 + $0x18] sm:$0xf]
      %v2522 = vld [vmem:[%s2514 + $0x1c] sm:$0xf]
      %v2523 = vld [vmem:[%s2514 + $0x20] sm:$0xf]
      %v2524 = vld [vmem:[%s2514 + $0x24] sm:$0xf]
      %v2525 = vld [vmem:[%s2514 + $0x28] sm:$0xf]
      %v2526 = vld [vmem:[%s2514 + $0x2c] sm:$0xf]
      %v2527 = vld [vmem:[%s2514 + $0x30] sm:$0xf]
      %v2528 = vld [vmem:[%s2514 + $0x34] sm:$0xf]
      %v2529 = vld [vmem:[%s2514 + $0x38] sm:$0xf]
      %v2530 = vld [vmem:[%s2514 + $0x3c] sm:$0xf]
      %v2547 = vunpack.c.l.b16 %v2515
      %v2548 = vunpack.c.l.b16 %v2516
      %v2549 = vunpack.c.l.b16 %v2517
      %v2550 = vunpack.c.l.b16 %v2518
      %v2551 = vunpack.c.l.b16 %v2519
      %v2552 = vunpack.c.l.b16 %v2520
      %v2553 = vunpack.c.l.b16 %v2521
      %v2554 = vunpack.c.l.b16 %v2522
      %v2555 = vunpack.c.l.b16 %v2523
      %v2556 = vunpack.c.l.b16 %v2524
      %v2557 = vunpack.c.l.b16 %v2525
      %v2558 = vunpack.c.l.b16 %v2526
      %v2559 = vunpack.c.l.b16 %v2527
      %v2560 = vunpack.c.l.b16 %v2528
      %v2561 = vunpack.c.l.b16 %v2529
      %v2562 = vunpack.c.l.b16 %v2530
      %v2563 = vpack.c.b16 %v2548, %v2547
      %v2564 = vpack.c.b16 %v2550, %v2549
      %v2565 = vpack.c.b16 %v2552, %v2551
      %v2566 = vpack.c.b16 %v2554, %v2553
      %v2567 = vpack.c.b16 %v2556, %v2555
      %v2568 = vpack.c.b16 %v2558, %v2557
      %v2569 = vpack.c.b16 %v2560, %v2559
      %v2570 = vpack.c.b16 %v2562, %v2561
      %2579 = vmatprep.subr.bf16.mxu0 0
      %2580 = vmatpush1.bf16.msra.mxu0 %v2563
      %2581 = vmatprep.subr.bf16.mxu0 0
      %2582 = vmatpush1.bf16.msra.mxu0 %v2564
      %2583 = vmatprep.subr.bf16.mxu0 0
      %2584 = vmatpush1.bf16.msra.mxu0 %v2565
      %2585 = vmatprep.subr.bf16.mxu0 0
      %2586 = vmatpush1.bf16.msra.mxu0 %v2566
      %2587 = vmatprep.subr.bf16.mxu0 0
      %2588 = vmatpush1.bf16.msra.mxu0 %v2567
      %2589 = vmatprep.subr.bf16.mxu0 0
      %2590 = vmatpush1.bf16.msra.mxu0 %v2568
      %2591 = vmatprep.subr.bf16.mxu0 0
      %2592 = vmatpush1.bf16.msra.mxu0 %v2569
      %2593 = vmatprep.subr.bf16.mxu0 0
      %2594 = vmatpush1.bf16.msra.mxu0 %v2570
      %2595 = vmatprep.subr.bf16.mxu0 0
      %2596 = vmatpush1.bf16.msra.mxu0 0
      %2597 = vmatprep.subr.bf16.mxu0 0
      %2598 = vmatpush1.bf16.msra.mxu0 0
      %2599 = vmatprep.subr.bf16.mxu0 0
      %2600 = vmatpush1.bf16.msra.mxu0 0
      %2601 = vmatprep.subr.bf16.mxu0 0
      %2602 = vmatpush1.bf16.msra.mxu0 0
      %2603 = vmatprep.subr.bf16.mxu0 0
      %2604 = vmatpush1.bf16.msra.mxu0 0
      %2605 = vmatprep.subr.bf16.mxu0 0
      %2606 = vmatpush1.bf16.msra.mxu0 0
      %2607 = vmatprep.subr.bf16.mxu0 0
      %2608 = vmatpush1.bf16.msra.mxu0 0
      %2609 = vmatprep.subr.bf16.mxu0 0
      %2610 = vmatpush1.bf16.msra.mxu0 0
      %2611 = vmatprep.mubr.bf16.mxu0 0
      %2612 = vmatmul.mubr.bf16.gmra.mrb[0].mxu0 %v2498
      %v2613 = vpop.f32.mrb[0].mxu0
      %v2614 = vadd.f32 0.0, %v2613
      %v2615 = vpop.f32.mrb[0].mxu0
      %v2616 = vpop.f32.mrb[0].mxu0
      %v2617 = vadd.f32 0.0, %v2616
      %v2618 = vpop.f32.mrb[0].mxu0
      %2619 = vmatprep.mubr.bf16.mxu0 0
      %2620 = vmatmul.mubr.bf16.gmra.mrb[0].mxu0 %v2499
      %v2621 = vpop.f32.mrb[0].mxu0
      %v2622 = vadd.f32 0.0, %v2621
      %v2623 = vpop.f32.mrb[0].mxu0
      %v2624 = vpop.f32.mrb[0].mxu0
      %v2625 = vadd.f32 0.0, %v2624
      %v2626 = vpop.f32.mrb[0].mxu0
      %2627 = vmatprep.mubr.bf16.mxu0 0
      %2628 = vmatmul.mubr.bf16.gmra.mrb[0].mxu0 %v2500
      %v2629 = vpop.f32.mrb[0].mxu0
      %v2630 = vadd.f32 0.0, %v2629
      %v2631 = vpop.f32.mrb[0].mxu0
      %v2632 = vpop.f32.mrb[0].mxu0
      %v2633 = vadd.f32 0.0, %v2632
      %v2634 = vpop.f32.mrb[0].mxu0
      %2635 = vmatprep.mubr.bf16.mxu0 0
      %2636 = vmatmul.mubr.bf16.gmra.mrb[0].mxu0 %v2501
      %v2637 = vpop.f32.mrb[0].mxu0
      %v2638 = vadd.f32 0.0, %v2637
      %v2639 = vpop.f32.mrb[0].mxu0
      %v2640 = vpop.f32.mrb[0].mxu0
      %v2641 = vadd.f32 0.0, %v2640
      %v2642 = vpop.f32.mrb[0].mxu0
      %2643 = vmatprep.mubr.bf16.mxu0 0
      %2644 = vmatmul.mubr.bf16.gmra.mrb[0].mxu0 %v2502
      %v2645 = vpop.f32.mrb[0].mxu0
      %v2646 = vadd.f32 0.0, %v2645
      %v2647 = vpop.f32.mrb[0].mxu0
      %v2648 = vpop.f32.mrb[0].mxu0
      %v2649 = vadd.f32 0.0, %v2648
      %v2650 = vpop.f32.mrb[0].mxu0
      %2651 = vmatprep.mubr.bf16.mxu0 0
      %2652 = vmatmul.mubr.bf16.gmra.mrb[0].mxu0 %v2503
      %v2653 = vpop.f32.mrb[0].mxu0
      %v2654 = vadd.f32 0.0, %v2653
      %v2655 = vpop.f32.mrb[0].mxu0
      %v2656 = vpop.f32.mrb[0].mxu0
      %v2657 = vadd.f32 0.0, %v2656
      %v2658 = vpop.f32.mrb[0].mxu0
      %2659 = vmatprep.mubr.bf16.mxu0 0
      %2660 = vmatmul.mubr.bf16.gmra.mrb[0].mxu0 %v2504
      %v2661 = vpop.f32.mrb[0].mxu0
      %v2662 = vadd.f32 0.0, %v2661
      %v2663 = vpop.f32.mrb[0].mxu0
      %v2664 = vpop.f32.mrb[0].mxu0
      %v2665 = vadd.f32 0.0, %v2664
      %v2666 = vpop.f32.mrb[0].mxu0
      %2667 = vmatprep.mubr.bf16.mxu0 0
      %2668 = vmatmul.mubr.bf16.gmra.mrb[0].mxu0 %v2505
      %v2669 = vpop.f32.mrb[0].mxu0
      %v2670 = vadd.f32 0.0, %v2669
      %v2671 = vpop.f32.mrb[0].mxu0
      %v2672 = vpop.f32.mrb[0].mxu0
      %v2673 = vadd.f32 0.0, %v2672
      %v2674 = vpop.f32.mrb[0].mxu0
      %2675 = vmatprep.mubr.bf16.mxu0 0
      %2676 = vmatmul.mubr.bf16.gmra.mrb[0].mxu0 %v2506
      %v2677 = vpop.f32.mrb[0].mxu0
      %v2678 = vadd.f32 0.0, %v2677
      %v2679 = vpop.f32.mrb[0].mxu0
      %v2680 = vpop.f32.mrb[0].mxu0
      %v2681 = vadd.f32 0.0, %v2680
      %v2682 = vpop.f32.mrb[0].mxu0
      %2683 = vmatprep.mubr.bf16.mxu0 0
      %2684 = vmatmul.mubr.bf16.gmra.mrb[0].mxu0 %v2507
      %v2685 = vpop.f32.mrb[0].mxu0
      %v2686 = vadd.f32 0.0, %v2685
      %v2687 = vpop.f32.mrb[0].mxu0
      %v2688 = vpop.f32.mrb[0].mxu0
      %v2689 = vadd.f32 0.0, %v2688
      %v2690 = vpop.f32.mrb[0].mxu0
      %2691 = vmatprep.mubr.bf16.mxu0 0
      %2692 = vmatmul.mubr.bf16.gmra.mrb[0].mxu0 %v2508
      %v2693 = vpop.f32.mrb[0].mxu0
      %v2694 = vadd.f32 0.0, %v2693
      %v2695 = vpop.f32.mrb[0].mxu0
      %v2696 = vpop.f32.mrb[0].mxu0
      %v2697 = vadd.f32 0.0, %v2696
      %v2698 = vpop.f32.mrb[0].mxu0
      %2699 = vmatprep.mubr.bf16.mxu0 0
      %2700 = vmatmul.mubr.bf16.gmra.mrb[0].mxu0 %v2509
      %v2701 = vpop.f32.mrb[0].mxu0
      %v2702 = vadd.f32 0.0, %v2701
      %v2703 = vpop.f32.mrb[0].mxu0
      %v2704 = vpop.f32.mrb[0].mxu0
      %v2705 = vadd.f32 0.0, %v2704
      %v2706 = vpop.f32.mrb[0].mxu0
      %2707 = vmatprep.mubr.bf16.mxu0 0
      %2708 = vmatmul.mubr.bf16.gmra.mrb[0].mxu0 %v2510
      %v2709 = vpop.f32.mrb[0].mxu0
      %v2710 = vadd.f32 0.0, %v2709
      %v2711 = vpop.f32.mrb[0].mxu0
      %v2712 = vpop.f32.mrb[0].mxu0
      %v2713 = vadd.f32 0.0, %v2712
      %v2714 = vpop.f32.mrb[0].mxu0
      %2715 = vmatprep.mubr.bf16.mxu0 0
      %2716 = vmatmul.mubr.bf16.gmra.mrb[0].mxu0 %v2511
      %v2717 = vpop.f32.mrb[0].mxu0
      %v2718 = vadd.f32 0.0, %v2717
      %v2719 = vpop.f32.mrb[0].mxu0
      %v2720 = vpop.f32.mrb[0].mxu0
      %v2721 = vadd.f32 0.0, %v2720
      %v2722 = vpop.f32.mrb[0].mxu0
      %2723 = vmatprep.mubr.bf16.mxu0 0
      %2724 = vmatmul.mubr.bf16.gmra.mrb[0].mxu0 %v2512
      %v2725 = vpop.f32.mrb[0].mxu0
      %v2726 = vadd.f32 0.0, %v2725
      %v2727 = vpop.f32.mrb[0].mxu0
      %v2728 = vpop.f32.mrb[0].mxu0
      %v2729 = vadd.f32 0.0, %v2728
      %v2730 = vpop.f32.mrb[0].mxu0
      %2731 = vmatprep.mubr.bf16.mxu0 0
      %2732 = vmatmul.mubr.bf16.gmra.mrb[0].mxu0 %v2513
      %v2733 = vpop.f32.mrb[0].mxu0
      %v2734 = vadd.f32 0.0, %v2733
      %v2735 = vpop.f32.mrb[0].mxu0
      %v2736 = vpop.f32.mrb[0].mxu0
      %v2737 = vadd.f32 0.0, %v2736
      %v2738 = vpop.f32.mrb[0].mxu0
      %2739 = vdwg.mxu0
      %v2740 = vadd.f32 %v2433, %v2614
      %v2741 = vadd.f32 %v2434, %v2617
      %v2742 = vadd.f32 %v2435, %v2622
      %v2743 = vadd.f32 %v2436, %v2625
      %v2744 = vadd.f32 %v2437, %v2630
      %v2745 = vadd.f32 %v2438, %v2633
      %v2746 = vadd.f32 %v2439, %v2638
      %v2747 = vadd.f32 %v2440, %v2641
      %v2748 = vadd.f32 %v2441, %v2646
      %v2749 = vadd.f32 %v2442, %v2649
      %v2750 = vadd.f32 %v2443, %v2654
      %v2751 = vadd.f32 %v2444, %v2657
      %v2752 = vadd.f32 %v2445, %v2662
      %v2753 = vadd.f32 %v2446, %v2665
      %v2754 = vadd.f32 %v2447, %v2670
      %v2755 = vadd.f32 %v2448, %v2673
      %v2756 = vadd.f32 %v2449, %v2678
      %v2757 = vadd.f32 %v2450, %v2681
      %v2758 = vadd.f32 %v2451, %v2686
      %v2759 = vadd.f32 %v2452, %v2689
      %v2760 = vadd.f32 %v2453, %v2694
      %v2761 = vadd.f32 %v2454, %v2697
      %v2762 = vadd.f32 %v2455, %v2702
      %v2763 = vadd.f32 %v2456, %v2705
      %v2764 = vadd.f32 %v2457, %v2710
      %v2765 = vadd.f32 %v2458, %v2713
      %v2766 = vadd.f32 %v2459, %v2718
      %v2767 = vadd.f32 %v2460, %v2721
      %v2768 = vadd.f32 %v2461, %v2726
      %v2769 = vadd.f32 %v2462, %v2729
      %v2770 = vadd.f32 %v2463, %v2734
      %v2771 = vadd.f32 %v2464, %v2737
      %v2772 = vld [vmem:[%s2465 + $0x1] sm:$0xff]
      %v2773 = vld [vmem:[%s2465 + $0x9] sm:$0xff]
      %v2774 = vld [vmem:[%s2465 + $0x19] sm:$0xff]
      %v2775 = vld [vmem:[%s2465 + $0x21] sm:$0xff]
      %v2776 = vld [vmem:[%s2465 + $0x31] sm:$0xff]
      %v2777 = vld [vmem:[%s2465 + $0x39] sm:$0xff]
      %v2778 = vld [vmem:[%s2465 + $0x49] sm:$0xff]
      %v2779 = vld [vmem:[%s2465 + $0x51] sm:$0xff]
      %v2780 = vld [vmem:[%s2465 + $0x61] sm:$0xff]
      %v2781 = vld [vmem:[%s2465 + $0x69] sm:$0xff]
      %v2782 = vld [vmem:[%s2465 + $0x79] sm:$0xff]
      %v2783 = vld [vmem:[%s2465 + $0x81] sm:$0xff]
      %v2784 = vld [vmem:[%s2465 + $0x91] sm:$0xff]
      %v2785 = vld [vmem:[%s2465 + $0x99] sm:$0xff]
      %v2786 = vld [vmem:[%s2465 + $0xa9] sm:$0xff]
      %v2787 = vld [vmem:[%s2465 + $0xb1] sm:$0xff]
      %v2788 = vld [vmem:[%s2465 + $0xc1] sm:$0xff]
      %v2789 = vld [vmem:[%s2465 + $0xc9] sm:$0xff]
      %v2790 = vld [vmem:[%s2465 + $0xd9] sm:$0xff]
      %v2791 = vld [vmem:[%s2465 + $0xe1] sm:$0xff]
      %v2792 = vld [vmem:[%s2465 + $0xf1] sm:$0xff]
      %v2793 = vld [vmem:[%s2465 + $0xf9] sm:$0xff]
      %v2794 = vld [vmem:[%s2465 + $0x109] sm:$0xff]
      %v2795 = vld [vmem:[%s2465 + $0x111] sm:$0xff]
      %v2796 = vld [vmem:[%s2465 + $0x121] sm:$0xff]
      %v2797 = vld [vmem:[%s2465 + $0x129] sm:$0xff]
      %v2798 = vld [vmem:[%s2465 + $0x139] sm:$0xff]
      %v2799 = vld [vmem:[%s2465 + $0x141] sm:$0xff]
      %v2800 = vld [vmem:[%s2465 + $0x151] sm:$0xff]
      %v2801 = vld [vmem:[%s2465 + $0x159] sm:$0xff]
      %v2802 = vld [vmem:[%s2465 + $0x169] sm:$0xff]
      %v2803 = vld [vmem:[%s2465 + $0x171] sm:$0xff]
      %v2804 = vpack.c.bf16 %v2773, %v2772
      %v2805 = vpack.c.bf16 %v2775, %v2774
      %v2806 = vpack.c.bf16 %v2777, %v2776
      %v2807 = vpack.c.bf16 %v2779, %v2778
      %v2808 = vpack.c.bf16 %v2781, %v2780
      %v2809 = vpack.c.bf16 %v2783, %v2782
      %v2810 = vpack.c.bf16 %v2785, %v2784
      %v2811 = vpack.c.bf16 %v2787, %v2786
      %v2812 = vpack.c.bf16 %v2789, %v2788
      %v2813 = vpack.c.bf16 %v2791, %v2790
      %v2814 = vpack.c.bf16 %v2793, %v2792
      %v2815 = vpack.c.bf16 %v2795, %v2794
      %v2816 = vpack.c.bf16 %v2797, %v2796
      %v2817 = vpack.c.bf16 %v2799, %v2798
      %v2818 = vpack.c.bf16 %v2801, %v2800
      %v2819 = vpack.c.bf16 %v2803, %v2802
      %s2820 = scalar_lea.vmem %s3, 448
      %v2821 = vld [vmem:[%s2820] sm:$0xf]
      %v2822 = vld [vmem:[%s2820 + $0x4] sm:$0xf]
      %v2823 = vld [vmem:[%s2820 + $0x8] sm:$0xf]
      %v2824 = vld [vmem:[%s2820 + $0xc] sm:$0xf]
      %v2825 = vld [vmem:[%s2820 + $0x10] sm:$0xf]
      %v2826 = vld [vmem:[%s2820 + $0x14] sm:$0xf]
      %v2827 = vld [vmem:[%s2820 + $0x18] sm:$0xf]
      %v2828 = vld [vmem:[%s2820 + $0x1c] sm:$0xf]
      %v2829 = vld [vmem:[%s2820 + $0x20] sm:$0xf]
      %v2830 = vld [vmem:[%s2820 + $0x24] sm:$0xf]
      %v2831 = vld [vmem:[%s2820 + $0x28] sm:$0xf]
      %v2832 = vld [vmem:[%s2820 + $0x2c] sm:$0xf]
      %v2833 = vld [vmem:[%s2820 + $0x30] sm:$0xf]
      %v2834 = vld [vmem:[%s2820 + $0x34] sm:$0xf]
      %v2835 = vld [vmem:[%s2820 + $0x38] sm:$0xf]
      %v2836 = vld [vmem:[%s2820 + $0x3c] sm:$0xf]
      %v2853 = vunpack.c.l.b16 %v2821
      %v2854 = vunpack.c.l.b16 %v2822
      %v2855 = vunpack.c.l.b16 %v2823
      %v2856 = vunpack.c.l.b16 %v2824
      %v2857 = vunpack.c.l.b16 %v2825
      %v2858 = vunpack.c.l.b16 %v2826
      %v2859 = vunpack.c.l.b16 %v2827
      %v2860 = vunpack.c.l.b16 %v2828
      %v2861 = vunpack.c.l.b16 %v2829
      %v2862 = vunpack.c.l.b16 %v2830
      %v2863 = vunpack.c.l.b16 %v2831
      %v2864 = vunpack.c.l.b16 %v2832
      %v2865 = vunpack.c.l.b16 %v2833
      %v2866 = vunpack.c.l.b16 %v2834
      %v2867 = vunpack.c.l.b16 %v2835
      %v2868 = vunpack.c.l.b16 %v2836
      %v2869 = vpack.c.b16 %v2854, %v2853
      %v2870 = vpack.c.b16 %v2856, %v2855
      %v2871 = vpack.c.b16 %v2858, %v2857
      %v2872 = vpack.c.b16 %v2860, %v2859
      %v2873 = vpack.c.b16 %v2862, %v2861
      %v2874 = vpack.c.b16 %v2864, %v2863
      %v2875 = vpack.c.b16 %v2866, %v2865
      %v2876 = vpack.c.b16 %v2868, %v2867
      %2885 = vmatprep.subr.bf16.mxu0 0
      %2886 = vmatpush1.bf16.msra.mxu0 %v2869
      %2887 = vmatprep.subr.bf16.mxu0 0
      %2888 = vmatpush1.bf16.msra.mxu0 %v2870
      %2889 = vmatprep.subr.bf16.mxu0 0
      %2890 = vmatpush1.bf16.msra.mxu0 %v2871
      %2891 = vmatprep.subr.bf16.mxu0 0
      %2892 = vmatpush1.bf16.msra.mxu0 %v2872
      %2893 = vmatprep.subr.bf16.mxu0 0
      %2894 = vmatpush1.bf16.msra.mxu0 %v2873
      %2895 = vmatprep.subr.bf16.mxu0 0
      %2896 = vmatpush1.bf16.msra.mxu0 %v2874
      %2897 = vmatprep.subr.bf16.mxu0 0
      %2898 = vmatpush1.bf16.msra.mxu0 %v2875
      %2899 = vmatprep.subr.bf16.mxu0 0
      %2900 = vmatpush1.bf16.msra.mxu0 %v2876
      %2901 = vmatprep.subr.bf16.mxu0 0
      %2902 = vmatpush1.bf16.msra.mxu0 0
      %2903 = vmatprep.subr.bf16.mxu0 0
      %2904 = vmatpush1.bf16.msra.mxu0 0
      %2905 = vmatprep.subr.bf16.mxu0 0
      %2906 = vmatpush1.bf16.msra.mxu0 0
      %2907 = vmatprep.subr.bf16.mxu0 0
      %2908 = vmatpush1.bf16.msra.mxu0 0
      %2909 = vmatprep.subr.bf16.mxu0 0
      %2910 = vmatpush1.bf16.msra.mxu0 0
      %2911 = vmatprep.subr.bf16.mxu0 0
      %2912 = vmatpush1.bf16.msra.mxu0 0
      %2913 = vmatprep.subr.bf16.mxu0 0
      %2914 = vmatpush1.bf16.msra.mxu0 0
      %2915 = vmatprep.subr.bf16.mxu0 0
      %2916 = vmatpush1.bf16.msra.mxu0 0
      %2917 = vmatprep.mubr.bf16.mxu0 0
      %2918 = vmatmul.mubr.bf16.gmra.mrb[0].mxu0 %v2804
      %v2919 = vpop.f32.mrb[0].mxu0
      %v2920 = vadd.f32 0.0, %v2919
      %v2921 = vpop.f32.mrb[0].mxu0
      %v2922 = vpop.f32.mrb[0].mxu0
      %v2923 = vadd.f32 0.0, %v2922
      %v2924 = vpop.f32.mrb[0].mxu0
      %2925 = vmatprep.mubr.bf16.mxu0 0
      %2926 = vmatmul.mubr.bf16.gmra.mrb[0].mxu0 %v2805
      %v2927 = vpop.f32.mrb[0].mxu0
      %v2928 = vadd.f32 0.0, %v2927
      %v2929 = vpop.f32.mrb[0].mxu0
      %v2930 = vpop.f32.mrb[0].mxu0
      %v2931 = vadd.f32 0.0, %v2930
      %v2932 = vpop.f32.mrb[0].mxu0
      %2933 = vmatprep.mubr.bf16.mxu0 0
      %2934 = vmatmul.mubr.bf16.gmra.mrb[0].mxu0 %v2806
      %v2935 = vpop.f32.mrb[0].mxu0
      %v2936 = vadd.f32 0.0, %v2935
      %v2937 = vpop.f32.mrb[0].mxu0
      %v2938 = vpop.f32.mrb[0].mxu0
      %v2939 = vadd.f32 0.0, %v2938
      %v2940 = vpop.f32.mrb[0].mxu0
      %2941 = vmatprep.mubr.bf16.mxu0 0
      %2942 = vmatmul.mubr.bf16.gmra.mrb[0].mxu0 %v2807
      %v2943 = vpop.f32.mrb[0].mxu0
      %v2944 = vadd.f32 0.0, %v2943
      %v2945 = vpop.f32.mrb[0].mxu0
      %v2946 = vpop.f32.mrb[0].mxu0
      %v2947 = vadd.f32 0.0, %v2946
      %v2948 = vpop.f32.mrb[0].mxu0
      %2949 = vmatprep.mubr.bf16.mxu0 0
      %2950 = vmatmul.mubr.bf16.gmra.mrb[0].mxu0 %v2808
      %v2951 = vpop.f32.mrb[0].mxu0
      %v2952 = vadd.f32 0.0, %v2951
      %v2953 = vpop.f32.mrb[0].mxu0
      %v2954 = vpop.f32.mrb[0].mxu0
      %v2955 = vadd.f32 0.0, %v2954
      %v2956 = vpop.f32.mrb[0].mxu0
      %2957 = vmatprep.mubr.bf16.mxu0 0
      %2958 = vmatmul.mubr.bf16.gmra.mrb[0].mxu0 %v2809
      %v2959 = vpop.f32.mrb[0].mxu0
      %v2960 = vadd.f32 0.0, %v2959
      %v2961 = vpop.f32.mrb[0].mxu0
      %v2962 = vpop.f32.mrb[0].mxu0
      %v2963 = vadd.f32 0.0, %v2962
      %v2964 = vpop.f32.mrb[0].mxu0
      %2965 = vmatprep.mubr.bf16.mxu0 0
      %2966 = vmatmul.mubr.bf16.gmra.mrb[0].mxu0 %v2810
      %v2967 = vpop.f32.mrb[0].mxu0
      %v2968 = vadd.f32 0.0, %v2967
      %v2969 = vpop.f32.mrb[0].mxu0
      %v2970 = vpop.f32.mrb[0].mxu0
      %v2971 = vadd.f32 0.0, %v2970
      %v2972 = vpop.f32.mrb[0].mxu0
      %2973 = vmatprep.mubr.bf16.mxu0 0
      %2974 = vmatmul.mubr.bf16.gmra.mrb[0].mxu0 %v2811
      %v2975 = vpop.f32.mrb[0].mxu0
      %v2976 = vadd.f32 0.0, %v2975
      %v2977 = vpop.f32.mrb[0].mxu0
      %v2978 = vpop.f32.mrb[0].mxu0
      %v2979 = vadd.f32 0.0, %v2978
      %v2980 = vpop.f32.mrb[0].mxu0
      %2981 = vmatprep.mubr.bf16.mxu0 0
      %2982 = vmatmul.mubr.bf16.gmra.mrb[0].mxu0 %v2812
      %v2983 = vpop.f32.mrb[0].mxu0
      %v2984 = vadd.f32 0.0, %v2983
      %v2985 = vpop.f32.mrb[0].mxu0
      %v2986 = vpop.f32.mrb[0].mxu0
      %v2987 = vadd.f32 0.0, %v2986
      %v2988 = vpop.f32.mrb[0].mxu0
      %2989 = vmatprep.mubr.bf16.mxu0 0
      %2990 = vmatmul.mubr.bf16.gmra.mrb[0].mxu0 %v2813
      %v2991 = vpop.f32.mrb[0].mxu0
      %v2992 = vadd.f32 0.0, %v2991
      %v2993 = vpop.f32.mrb[0].mxu0
      %v2994 = vpop.f32.mrb[0].mxu0
      %v2995 = vadd.f32 0.0, %v2994
      %v2996 = vpop.f32.mrb[0].mxu0
      %2997 = vmatprep.mubr.bf16.mxu0 0
      %2998 = vmatmul.mubr.bf16.gmra.mrb[0].mxu0 %v2814
      %v2999 = vpop.f32.mrb[0].mxu0
      %v3000 = vadd.f32 0.0, %v2999
      %v3001 = vpop.f32.mrb[0].mxu0
      %v3002 = vpop.f32.mrb[0].mxu0
      %v3003 = vadd.f32 0.0, %v3002
      %v3004 = vpop.f32.mrb[0].mxu0
      %3005 = vmatprep.mubr.bf16.mxu0 0
      %3006 = vmatmul.mubr.bf16.gmra.mrb[0].mxu0 %v2815
      %v3007 = vpop.f32.mrb[0].mxu0
      %v3008 = vadd.f32 0.0, %v3007
      %v3009 = vpop.f32.mrb[0].mxu0
      %v3010 = vpop.f32.mrb[0].mxu0
      %v3011 = vadd.f32 0.0, %v3010
      %v3012 = vpop.f32.mrb[0].mxu0
      %3013 = vmatprep.mubr.bf16.mxu0 0
      %3014 = vmatmul.mubr.bf16.gmra.mrb[0].mxu0 %v2816
      %v3015 = vpop.f32.mrb[0].mxu0
      %v3016 = vadd.f32 0.0, %v3015
      %v3017 = vpop.f32.mrb[0].mxu0
      %v3018 = vpop.f32.mrb[0].mxu0
      %v3019 = vadd.f32 0.0, %v3018
      %v3020 = vpop.f32.mrb[0].mxu0
      %3021 = vmatprep.mubr.bf16.mxu0 0
      %3022 = vmatmul.mubr.bf16.gmra.mrb[0].mxu0 %v2817
      %v3023 = vpop.f32.mrb[0].mxu0
      %v3024 = vadd.f32 0.0, %v3023
      %v3025 = vpop.f32.mrb[0].mxu0
      %v3026 = vpop.f32.mrb[0].mxu0
      %v3027 = vadd.f32 0.0, %v3026
      %v3028 = vpop.f32.mrb[0].mxu0
      %3029 = vmatprep.mubr.bf16.mxu0 0
      %3030 = vmatmul.mubr.bf16.gmra.mrb[0].mxu0 %v2818
      %v3031 = vpop.f32.mrb[0].mxu0
      %v3032 = vadd.f32 0.0, %v3031
      %v3033 = vpop.f32.mrb[0].mxu0
      %v3034 = vpop.f32.mrb[0].mxu0
      %v3035 = vadd.f32 0.0, %v3034
      %v3036 = vpop.f32.mrb[0].mxu0
      %3037 = vmatprep.mubr.bf16.mxu0 0
      %3038 = vmatmul.mubr.bf16.gmra.mrb[0].mxu0 %v2819
      %v3039 = vpop.f32.mrb[0].mxu0
      %v3040 = vadd.f32 0.0, %v3039
      %v3041 = vpop.f32.mrb[0].mxu0
      %v3042 = vpop.f32.mrb[0].mxu0
      %v3043 = vadd.f32 0.0, %v3042
      %v3044 = vpop.f32.mrb[0].mxu0
      %3045 = vdwg.mxu0
      %v3046 = vadd.f32 %v2740, %v2920
      %v3047 = vadd.f32 %v2741, %v2923
      %v3048 = vadd.f32 %v2742, %v2928
      %v3049 = vadd.f32 %v2743, %v2931
      %v3050 = vadd.f32 %v2744, %v2936
      %v3051 = vadd.f32 %v2745, %v2939
      %v3052 = vadd.f32 %v2746, %v2944
      %v3053 = vadd.f32 %v2747, %v2947
      %v3054 = vadd.f32 %v2748, %v2952
      %v3055 = vadd.f32 %v2749, %v2955
      %v3056 = vadd.f32 %v2750, %v2960
      %v3057 = vadd.f32 %v2751, %v2963
      %v3058 = vadd.f32 %v2752, %v2968
      %v3059 = vadd.f32 %v2753, %v2971
      %v3060 = vadd.f32 %v2754, %v2976
      %v3061 = vadd.f32 %v2755, %v2979
      %v3062 = vadd.f32 %v2756, %v2984
      %v3063 = vadd.f32 %v2757, %v2987
      %v3064 = vadd.f32 %v2758, %v2992
      %v3065 = vadd.f32 %v2759, %v2995
      %v3066 = vadd.f32 %v2760, %v3000
      %v3067 = vadd.f32 %v2761, %v3003
      %v3068 = vadd.f32 %v2762, %v3008
      %v3069 = vadd.f32 %v2763, %v3011
      %v3070 = vadd.f32 %v2764, %v3016
      %v3071 = vadd.f32 %v2765, %v3019
      %v3072 = vadd.f32 %v2766, %v3024
      %v3073 = vadd.f32 %v2767, %v3027
      %v3074 = vadd.f32 %v2768, %v3032
      %v3075 = vadd.f32 %v2769, %v3035
      %v3076 = vadd.f32 %v2770, %v3040
      %v3077 = vadd.f32 %v2771, %v3043
      %v3078 = vld [vmem:[%s2465 + $0x2] sm:$0xff]
      %v3079 = vld [vmem:[%s2465 + $0xa] sm:$0xff]
      %v3080 = vld [vmem:[%s2465 + $0x1a] sm:$0xff]
      %v3081 = vld [vmem:[%s2465 + $0x22] sm:$0xff]
      %v3082 = vld [vmem:[%s2465 + $0x32] sm:$0xff]
      %v3083 = vld [vmem:[%s2465 + $0x3a] sm:$0xff]
      %v3084 = vld [vmem:[%s2465 + $0x4a] sm:$0xff]
      %v3085 = vld [vmem:[%s2465 + $0x52] sm:$0xff]
      %v3086 = vld [vmem:[%s2465 + $0x62] sm:$0xff]
      %v3087 = vld [vmem:[%s2465 + $0x6a] sm:$0xff]
      %v3088 = vld [vmem:[%s2465 + $0x7a] sm:$0xff]
      %v3089 = vld [vmem:[%s2465 + $0x82] sm:$0xff]
      %v3090 = vld [vmem:[%s2465 + $0x92] sm:$0xff]
      %v3091 = vld [vmem:[%s2465 + $0x9a] sm:$0xff]
      %v3092 = vld [vmem:[%s2465 + $0xaa] sm:$0xff]
      %v3093 = vld [vmem:[%s2465 + $0xb2] sm:$0xff]
      %v3094 = vld [vmem:[%s2465 + $0xc2] sm:$0xff]
      %v3095 = vld [vmem:[%s2465 + $0xca] sm:$0xff]
      %v3096 = vld [vmem:[%s2465 + $0xda] sm:$0xff]
      %v3097 = vld [vmem:[%s2465 + $0xe2] sm:$0xff]
      %v3098 = vld [vmem:[%s2465 + $0xf2] sm:$0xff]
      %v3099 = vld [vmem:[%s2465 + $0xfa] sm:$0xff]
      %v3100 = vld [vmem:[%s2465 + $0x10a] sm:$0xff]
      %v3101 = vld [vmem:[%s2465 + $0x112] sm:$0xff]
      %v3102 = vld [vmem:[%s2465 + $0x122] sm:$0xff]
      %v3103 = vld [vmem:[%s2465 + $0x12a] sm:$0xff]
      %v3104 = vld [vmem:[%s2465 + $0x13a] sm:$0xff]
      %v3105 = vld [vmem:[%s2465 + $0x142] sm:$0xff]
      %v3106 = vld [vmem:[%s2465 + $0x152] sm:$0xff]
      %v3107 = vld [vmem:[%s2465 + $0x15a] sm:$0xff]
      %v3108 = vld [vmem:[%s2465 + $0x16a] sm:$0xff]
      %v3109 = vld [vmem:[%s2465 + $0x172] sm:$0xff]
      %v3110 = vpack.c.bf16 %v3079, %v3078
      %v3111 = vpack.c.bf16 %v3081, %v3080
      %v3112 = vpack.c.bf16 %v3083, %v3082
      %v3113 = vpack.c.bf16 %v3085, %v3084
      %v3114 = vpack.c.bf16 %v3087, %v3086
      %v3115 = vpack.c.bf16 %v3089, %v3088
      %v3116 = vpack.c.bf16 %v3091, %v3090
      %v3117 = vpack.c.bf16 %v3093, %v3092
      %v3118 = vpack.c.bf16 %v3095, %v3094
      %v3119 = vpack.c.bf16 %v3097, %v3096
      %v3120 = vpack.c.bf16 %v3099, %v3098
      %v3121 = vpack.c.bf16 %v3101, %v3100
      %v3122 = vpack.c.bf16 %v3103, %v3102
      %v3123 = vpack.c.bf16 %v3105, %v3104
      %v3124 = vpack.c.bf16 %v3107, %v3106
      %v3125 = vpack.c.bf16 %v3109, %v3108
      %s3126 = scalar_lea.vmem %s3, 512
      %v3127 = vld [vmem:[%s3126] sm:$0xf]
      %v3128 = vld [vmem:[%s3126 + $0x4] sm:$0xf]
      %v3129 = vld [vmem:[%s3126 + $0x8] sm:$0xf]
      %v3130 = vld [vmem:[%s3126 + $0xc] sm:$0xf]
      %v3131 = vld [vmem:[%s3126 + $0x10] sm:$0xf]
      %v3132 = vld [vmem:[%s3126 + $0x14] sm:$0xf]
      %v3133 = vld [vmem:[%s3126 + $0x18] sm:$0xf]
      %v3134 = vld [vmem:[%s3126 + $0x1c] sm:$0xf]
      %v3135 = vld [vmem:[%s3126 + $0x20] sm:$0xf]
      %v3136 = vld [vmem:[%s3126 + $0x24] sm:$0xf]
      %v3137 = vld [vmem:[%s3126 + $0x28] sm:$0xf]
      %v3138 = vld [vmem:[%s3126 + $0x2c] sm:$0xf]
      %v3139 = vld [vmem:[%s3126 + $0x30] sm:$0xf]
      %v3140 = vld [vmem:[%s3126 + $0x34] sm:$0xf]
      %v3141 = vld [vmem:[%s3126 + $0x38] sm:$0xf]
      %v3142 = vld [vmem:[%s3126 + $0x3c] sm:$0xf]
      %v3159 = vunpack.c.l.b16 %v3127
      %v3160 = vunpack.c.l.b16 %v3128
      %v3161 = vunpack.c.l.b16 %v3129
      %v3162 = vunpack.c.l.b16 %v3130
      %v3163 = vunpack.c.l.b16 %v3131
      %v3164 = vunpack.c.l.b16 %v3132
      %v3165 = vunpack.c.l.b16 %v3133
      %v3166 = vunpack.c.l.b16 %v3134
      %v3167 = vunpack.c.l.b16 %v3135
      %v3168 = vunpack.c.l.b16 %v3136
      %v3169 = vunpack.c.l.b16 %v3137
      %v3170 = vunpack.c.l.b16 %v3138
      %v3171 = vunpack.c.l.b16 %v3139
      %v3172 = vunpack.c.l.b16 %v3140
      %v3173 = vunpack.c.l.b16 %v3141
      %v3174 = vunpack.c.l.b16 %v3142
      %v3175 = vpack.c.b16 %v3160, %v3159
      %v3176 = vpack.c.b16 %v3162, %v3161
      %v3177 = vpack.c.b16 %v3164, %v3163
      %v3178 = vpack.c.b16 %v3166, %v3165
      %v3179 = vpack.c.b16 %v3168, %v3167
      %v3180 = vpack.c.b16 %v3170, %v3169
      %v3181 = vpack.c.b16 %v3172, %v3171
      %v3182 = vpack.c.b16 %v3174, %v3173
      %3191 = vmatprep.subr.bf16.mxu0 0
      %3192 = vmatpush1.bf16.msra.mxu0 %v3175
      %3193 = vmatprep.subr.bf16.mxu0 0
      %3194 = vmatpush1.bf16.msra.mxu0 %v3176
      %3195 = vmatprep.subr.bf16.mxu0 0
      %3196 = vmatpush1.bf16.msra.mxu0 %v3177
      %3197 = vmatprep.subr.bf16.mxu0 0
      %3198 = vmatpush1.bf16.msra.mxu0 %v3178
      %3199 = vmatprep.subr.bf16.mxu0 0
      %3200 = vmatpush1.bf16.msra.mxu0 %v3179
      %3201 = vmatprep.subr.bf16.mxu0 0
      %3202 = vmatpush1.bf16.msra.mxu0 %v3180
      %3203 = vmatprep.subr.bf16.mxu0 0
      %3204 = vmatpush1.bf16.msra.mxu0 %v3181
      %3205 = vmatprep.subr.bf16.mxu0 0
      %3206 = vmatpush1.bf16.msra.mxu0 %v3182
      %3207 = vmatprep.subr.bf16.mxu0 0
      %3208 = vmatpush1.bf16.msra.mxu0 0
      %3209 = vmatprep.subr.bf16.mxu0 0
      %3210 = vmatpush1.bf16.msra.mxu0 0
      %3211 = vmatprep.subr.bf16.mxu0 0
      %3212 = vmatpush1.bf16.msra.mxu0 0
      %3213 = vmatprep.subr.bf16.mxu0 0
      %3214 = vmatpush1.bf16.msra.mxu0 0
      %3215 = vmatprep.subr.bf16.mxu0 0
      %3216 = vmatpush1.bf16.msra.mxu0 0
      %3217 = vmatprep.subr.bf16.mxu0 0
      %3218 = vmatpush1.bf16.msra.mxu0 0
      %3219 = vmatprep.subr.bf16.mxu0 0
      %3220 = vmatpush1.bf16.msra.mxu0 0
      %3221 = vmatprep.subr.bf16.mxu0 0
      %3222 = vmatpush1.bf16.msra.mxu0 0
      %3223 = vmatprep.mubr.bf16.mxu0 0
      %3224 = vmatmul.mubr.bf16.gmra.mrb[0].mxu0 %v3110
      %v3225 = vpop.f32.mrb[0].mxu0
      %v3226 = vadd.f32 0.0, %v3225
      %v3227 = vpop.f32.mrb[0].mxu0
      %v3228 = vpop.f32.mrb[0].mxu0
      %v3229 = vadd.f32 0.0, %v3228
      %v3230 = vpop.f32.mrb[0].mxu0
      %3231 = vmatprep.mubr.bf16.mxu0 0
      %3232 = vmatmul.mubr.bf16.gmra.mrb[0].mxu0 %v3111
      %v3233 = vpop.f32.mrb[0].mxu0
      %v3234 = vadd.f32 0.0, %v3233
      %v3235 = vpop.f32.mrb[0].mxu0
      %v3236 = vpop.f32.mrb[0].mxu0
      %v3237 = vadd.f32 0.0, %v3236
      %v3238 = vpop.f32.mrb[0].mxu0
      %3239 = vmatprep.mubr.bf16.mxu0 0
      %3240 = vmatmul.mubr.bf16.gmra.mrb[0].mxu0 %v3112
      %v3241 = vpop.f32.mrb[0].mxu0
      %v3242 = vadd.f32 0.0, %v3241
      %v3243 = vpop.f32.mrb[0].mxu0
      %v3244 = vpop.f32.mrb[0].mxu0
      %v3245 = vadd.f32 0.0, %v3244
      %v3246 = vpop.f32.mrb[0].mxu0
      %3247 = vmatprep.mubr.bf16.mxu0 0
      %3248 = vmatmul.mubr.bf16.gmra.mrb[0].mxu0 %v3113
      %v3249 = vpop.f32.mrb[0].mxu0
      %v3250 = vadd.f32 0.0, %v3249
      %v3251 = vpop.f32.mrb[0].mxu0
      %v3252 = vpop.f32.mrb[0].mxu0
      %v3253 = vadd.f32 0.0, %v3252
      %v3254 = vpop.f32.mrb[0].mxu0
      %3255 = vmatprep.mubr.bf16.mxu0 0
      %3256 = vmatmul.mubr.bf16.gmra.mrb[0].mxu0 %v3114
      %v3257 = vpop.f32.mrb[0].mxu0
      %v3258 = vadd.f32 0.0, %v3257
      %v3259 = vpop.f32.mrb[0].mxu0
      %v3260 = vpop.f32.mrb[0].mxu0
      %v3261 = vadd.f32 0.0, %v3260
      %v3262 = vpop.f32.mrb[0].mxu0
      %3263 = vmatprep.mubr.bf16.mxu0 0
      %3264 = vmatmul.mubr.bf16.gmra.mrb[0].mxu0 %v3115
      %v3265 = vpop.f32.mrb[0].mxu0
      %v3266 = vadd.f32 0.0, %v3265
      %v3267 = vpop.f32.mrb[0].mxu0
      %v3268 = vpop.f32.mrb[0].mxu0
      %v3269 = vadd.f32 0.0, %v3268
      %v3270 = vpop.f32.mrb[0].mxu0
      %3271 = vmatprep.mubr.bf16.mxu0 0
      %3272 = vmatmul.mubr.bf16.gmra.mrb[0].mxu0 %v3116
      %v3273 = vpop.f32.mrb[0].mxu0
      %v3274 = vadd.f32 0.0, %v3273
      %v3275 = vpop.f32.mrb[0].mxu0
      %v3276 = vpop.f32.mrb[0].mxu0
      %v3277 = vadd.f32 0.0, %v3276
      %v3278 = vpop.f32.mrb[0].mxu0
      %3279 = vmatprep.mubr.bf16.mxu0 0
      %3280 = vmatmul.mubr.bf16.gmra.mrb[0].mxu0 %v3117
      %v3281 = vpop.f32.mrb[0].mxu0
      %v3282 = vadd.f32 0.0, %v3281
      %v3283 = vpop.f32.mrb[0].mxu0
      %v3284 = vpop.f32.mrb[0].mxu0
      %v3285 = vadd.f32 0.0, %v3284
      %v3286 = vpop.f32.mrb[0].mxu0
      %3287 = vmatprep.mubr.bf16.mxu0 0
      %3288 = vmatmul.mubr.bf16.gmra.mrb[0].mxu0 %v3118
      %v3289 = vpop.f32.mrb[0].mxu0
      %v3290 = vadd.f32 0.0, %v3289
      %v3291 = vpop.f32.mrb[0].mxu0
      %v3292 = vpop.f32.mrb[0].mxu0
      %v3293 = vadd.f32 0.0, %v3292
      %v3294 = vpop.f32.mrb[0].mxu0
      %3295 = vmatprep.mubr.bf16.mxu0 0
      %3296 = vmatmul.mubr.bf16.gmra.mrb[0].mxu0 %v3119
      %v3297 = vpop.f32.mrb[0].mxu0
      %v3298 = vadd.f32 0.0, %v3297
      %v3299 = vpop.f32.mrb[0].mxu0
      %v3300 = vpop.f32.mrb[0].mxu0
      %v3301 = vadd.f32 0.0, %v3300
      %v3302 = vpop.f32.mrb[0].mxu0
      %3303 = vmatprep.mubr.bf16.mxu0 0
      %3304 = vmatmul.mubr.bf16.gmra.mrb[0].mxu0 %v3120
      %v3305 = vpop.f32.mrb[0].mxu0
      %v3306 = vadd.f32 0.0, %v3305
      %v3307 = vpop.f32.mrb[0].mxu0
      %v3308 = vpop.f32.mrb[0].mxu0
      %v3309 = vadd.f32 0.0, %v3308
      %v3310 = vpop.f32.mrb[0].mxu0
      %3311 = vmatprep.mubr.bf16.mxu0 0
      %3312 = vmatmul.mubr.bf16.gmra.mrb[0].mxu0 %v3121
      %v3313 = vpop.f32.mrb[0].mxu0
      %v3314 = vadd.f32 0.0, %v3313
      %v3315 = vpop.f32.mrb[0].mxu0
      %v3316 = vpop.f32.mrb[0].mxu0
      %v3317 = vadd.f32 0.0, %v3316
      %v3318 = vpop.f32.mrb[0].mxu0
      %3319 = vmatprep.mubr.bf16.mxu0 0
      %3320 = vmatmul.mubr.bf16.gmra.mrb[0].mxu0 %v3122
      %v3321 = vpop.f32.mrb[0].mxu0
      %v3322 = vadd.f32 0.0, %v3321
      %v3323 = vpop.f32.mrb[0].mxu0
      %v3324 = vpop.f32.mrb[0].mxu0
      %v3325 = vadd.f32 0.0, %v3324
      %v3326 = vpop.f32.mrb[0].mxu0
      %3327 = vmatprep.mubr.bf16.mxu0 0
      %3328 = vmatmul.mubr.bf16.gmra.mrb[0].mxu0 %v3123
      %v3329 = vpop.f32.mrb[0].mxu0
      %v3330 = vadd.f32 0.0, %v3329
      %v3331 = vpop.f32.mrb[0].mxu0
      %v3332 = vpop.f32.mrb[0].mxu0
      %v3333 = vadd.f32 0.0, %v3332
      %v3334 = vpop.f32.mrb[0].mxu0
      %3335 = vmatprep.mubr.bf16.mxu0 0
      %3336 = vmatmul.mubr.bf16.gmra.mrb[0].mxu0 %v3124
      %v3337 = vpop.f32.mrb[0].mxu0
      %v3338 = vadd.f32 0.0, %v3337
      %v3339 = vpop.f32.mrb[0].mxu0
      %v3340 = vpop.f32.mrb[0].mxu0
      %v3341 = vadd.f32 0.0, %v3340
      %v3342 = vpop.f32.mrb[0].mxu0
      %3343 = vmatprep.mubr.bf16.mxu0 0
      %3344 = vmatmul.mubr.bf16.gmra.mrb[0].mxu0 %v3125
      %v3345 = vpop.f32.mrb[0].mxu0
      %v3346 = vadd.f32 0.0, %v3345
      %v3347 = vpop.f32.mrb[0].mxu0
      %v3348 = vpop.f32.mrb[0].mxu0
      %v3349 = vadd.f32 0.0, %v3348
      %v3350 = vpop.f32.mrb[0].mxu0
      %3351 = vdwg.mxu0
      %v3352 = vadd.f32 %v3046, %v3226
      %v3353 = vadd.f32 %v3047, %v3229
      %v3354 = vadd.f32 %v3048, %v3234
      %v3355 = vadd.f32 %v3049, %v3237
      %v3356 = vadd.f32 %v3050, %v3242
      %v3357 = vadd.f32 %v3051, %v3245
      %v3358 = vadd.f32 %v3052, %v3250
      %v3359 = vadd.f32 %v3053, %v3253
      %v3360 = vadd.f32 %v3054, %v3258
      %v3361 = vadd.f32 %v3055, %v3261
      %v3362 = vadd.f32 %v3056, %v3266
      %v3363 = vadd.f32 %v3057, %v3269
      %v3364 = vadd.f32 %v3058, %v3274
      %v3365 = vadd.f32 %v3059, %v3277
      %v3366 = vadd.f32 %v3060, %v3282
      %v3367 = vadd.f32 %v3061, %v3285
      %v3368 = vadd.f32 %v3062, %v3290
      %v3369 = vadd.f32 %v3063, %v3293
      %v3370 = vadd.f32 %v3064, %v3298
      %v3371 = vadd.f32 %v3065, %v3301
      %v3372 = vadd.f32 %v3066, %v3306
      %v3373 = vadd.f32 %v3067, %v3309
      %v3374 = vadd.f32 %v3068, %v3314
      %v3375 = vadd.f32 %v3069, %v3317
      %v3376 = vadd.f32 %v3070, %v3322
      %v3377 = vadd.f32 %v3071, %v3325
      %v3378 = vadd.f32 %v3072, %v3330
      %v3379 = vadd.f32 %v3073, %v3333
      %v3380 = vadd.f32 %v3074, %v3338
      %v3381 = vadd.f32 %v3075, %v3341
      %v3382 = vadd.f32 %v3076, %v3346
      %v3383 = vadd.f32 %v3077, %v3349
      %v3384 = vld [vmem:[%s4] sm:$0x1]
      %v3386 = vlaneseq
      %v3387 = vshrl.u32 %v3386, 7
      %v3388 = vsub.s32 0, %v3387
      %v3389 = vrot.slane %v3384, %v3388
      %v3391 = vadd.f32 %v3352, %v3389
      %v3392 = vadd.f32 %v3353, %v3389
      %v3393 = vadd.f32 %v3354, %v3389
      %v3394 = vadd.f32 %v3355, %v3389
      %v3395 = vadd.f32 %v3356, %v3389
      %v3396 = vadd.f32 %v3357, %v3389
      %v3397 = vadd.f32 %v3358, %v3389
      %v3398 = vadd.f32 %v3359, %v3389
      %v3399 = vadd.f32 %v3360, %v3389
      %v3400 = vadd.f32 %v3361, %v3389
      %v3401 = vadd.f32 %v3362, %v3389
      %v3402 = vadd.f32 %v3363, %v3389
      %v3403 = vadd.f32 %v3364, %v3389
      %v3404 = vadd.f32 %v3365, %v3389
      %v3405 = vadd.f32 %v3366, %v3389
      %v3406 = vadd.f32 %v3367, %v3389
      %v3407 = vadd.f32 %v3368, %v3389
      %v3408 = vadd.f32 %v3369, %v3389
      %v3409 = vadd.f32 %v3370, %v3389
      %v3410 = vadd.f32 %v3371, %v3389
      %v3411 = vadd.f32 %v3372, %v3389
      %v3412 = vadd.f32 %v3373, %v3389
      %v3413 = vadd.f32 %v3374, %v3389
      %v3414 = vadd.f32 %v3375, %v3389
      %v3415 = vadd.f32 %v3376, %v3389
      %v3416 = vadd.f32 %v3377, %v3389
      %v3417 = vadd.f32 %v3378, %v3389
      %v3418 = vadd.f32 %v3379, %v3389
      %v3419 = vadd.f32 %v3380, %v3389
      %v3420 = vadd.f32 %v3381, %v3389
      %v3421 = vadd.f32 %v3382, %v3389
      %v3422 = vadd.f32 %v3383, %v3389
      %v3423 = vmax.f32 %v3391, 0.0
      %v3424 = vmax.f32 %v3392, 0.0
      %v3425 = vmax.f32 %v3393, 0.0
      %v3426 = vmax.f32 %v3394, 0.0
      %v3427 = vmax.f32 %v3395, 0.0
      %v3428 = vmax.f32 %v3396, 0.0
      %v3429 = vmax.f32 %v3397, 0.0
      %v3430 = vmax.f32 %v3398, 0.0
      %v3431 = vmax.f32 %v3399, 0.0
      %v3432 = vmax.f32 %v3400, 0.0
      %v3433 = vmax.f32 %v3401, 0.0
      %v3434 = vmax.f32 %v3402, 0.0
      %v3435 = vmax.f32 %v3403, 0.0
      %v3436 = vmax.f32 %v3404, 0.0
      %v3437 = vmax.f32 %v3405, 0.0
      %v3438 = vmax.f32 %v3406, 0.0
      %v3439 = vmax.f32 %v3407, 0.0
      %v3440 = vmax.f32 %v3408, 0.0
      %v3441 = vmax.f32 %v3409, 0.0
      %v3442 = vmax.f32 %v3410, 0.0
      %v3443 = vmax.f32 %v3411, 0.0
      %v3444 = vmax.f32 %v3412, 0.0
      %v3445 = vmax.f32 %v3413, 0.0
      %v3446 = vmax.f32 %v3414, 0.0
      %v3447 = vmax.f32 %v3415, 0.0
      %v3448 = vmax.f32 %v3416, 0.0
      %v3449 = vmax.f32 %v3417, 0.0
      %v3450 = vmax.f32 %v3418, 0.0
      %v3451 = vmax.f32 %v3419, 0.0
      %v3452 = vmax.f32 %v3420, 0.0
      %v3453 = vmax.f32 %v3421, 0.0
      %v3454 = vmax.f32 %v3422, 0.0
      %3455 = vst [vmem:[%s224] sm:$0xff] %v3423
      %3456 = vst [vmem:[%s224 + $0x8] sm:$0xff] %v3424
      %3457 = vst [vmem:[%s224 + $0x10] sm:$0xff] %v3425
      %3458 = vst [vmem:[%s224 + $0x18] sm:$0xff] %v3426
      %3459 = vst [vmem:[%s224 + $0x20] sm:$0xff] %v3427
      %3460 = vst [vmem:[%s224 + $0x28] sm:$0xff] %v3428
      %3461 = vst [vmem:[%s224 + $0x30] sm:$0xff] %v3429
      %3462 = vst [vmem:[%s224 + $0x38] sm:$0xff] %v3430
      %3463 = vst [vmem:[%s224 + $0x40] sm:$0xff] %v3431
      %3464 = vst [vmem:[%s224 + $0x48] sm:$0xff] %v3432
      %3465 = vst [vmem:[%s224 + $0x50] sm:$0xff] %v3433
      %3466 = vst [vmem:[%s224 + $0x58] sm:$0xff] %v3434
      %3467 = vst [vmem:[%s224 + $0x60] sm:$0xff] %v3435
      %3468 = vst [vmem:[%s224 + $0x68] sm:$0xff] %v3436
      %3469 = vst [vmem:[%s224 + $0x70] sm:$0xff] %v3437
      %3470 = vst [vmem:[%s224 + $0x78] sm:$0xff] %v3438
      %3471 = vst [vmem:[%s224 + $0x80] sm:$0xff] %v3439
      %3472 = vst [vmem:[%s224 + $0x88] sm:$0xff] %v3440
      %3473 = vst [vmem:[%s224 + $0x90] sm:$0xff] %v3441
      %3474 = vst [vmem:[%s224 + $0x98] sm:$0xff] %v3442
      %3475 = vst [vmem:[%s224 + $0xa0] sm:$0xff] %v3443
      %3476 = vst [vmem:[%s224 + $0xa8] sm:$0xff] %v3444
      %3477 = vst [vmem:[%s224 + $0xb0] sm:$0xff] %v3445
      %3478 = vst [vmem:[%s224 + $0xb8] sm:$0xff] %v3446
      %3479 = vst [vmem:[%s224 + $0xc0] sm:$0xff] %v3447
      %3480 = vst [vmem:[%s224 + $0xc8] sm:$0xff] %v3448
      %3481 = vst [vmem:[%s224 + $0xd0] sm:$0xff] %v3449
      %3482 = vst [vmem:[%s224 + $0xd8] sm:$0xff] %v3450
      %3483 = vst [vmem:[%s224 + $0xe0] sm:$0xff] %v3451
      %3484 = vst [vmem:[%s224 + $0xe8] sm:$0xff] %v3452
      %3485 = vst [vmem:[%s224 + $0xf0] sm:$0xff] %v3453
      %3486 = vst [vmem:[%s224 + $0xf8] sm:$0xff] %v3454
      %p3487 = scmp.lt.s32.totalorder %s16, 1
      %s3488 = scalar_select %p3487, %s16, 1
      %s3489 = smul.addr %s3488, 32
      %s3490 = smul.addr %s3489, 8
      %s3491 = scalar_lea.vmem %s5, %s3490
      // Predicated region
      $region41: #{efficient_double_conv.1} parent=39 // pred_check
        %p3492 = pneg %p144
      $region42: #{efficient_double_conv.1} parent=39 // pred_check_branch
        %3494 = sbr.rel (%p3492) target = $region44
      $region43: #{efficient_double_conv.1} parent=39 // pred_region
        _
      $region44: #{efficient_double_conv.1} parent=39 // pred_fallthru
        _
    $region40: #{efficient_double_conv.1} parent=5 // pred_fallthru
      _
    %p3495 = scmp.le.s32.totalorder 2, %s11
    // Predicated region
    $region45: #{efficient_double_conv.1} parent=5 // pred_check
      %p3496 = pneg %p3495
    $region46: #{efficient_double_conv.1} parent=5 // pred_check_branch
      %3498 = sbr.rel (%p3496) target = $region48
    $region47: #{efficient_double_conv.1} parent=5 // pred_region
      %s3499 = ssub.s32 %s11, 2
      // Predicated region
      $region49: #{efficient_double_conv.1} parent=47 // pred_check
        %p3500 = pneg %p150
      $region50: #{efficient_double_conv.1} parent=47 // pred_check_branch
        %3502 = sbr.rel (%p3500) target = $region52
      $region51: #{efficient_double_conv.1} parent=47 // pred_region
        %p3503 = scmp.lt.s32.totalorder %s17, 1
        %s3504 = scalar_select %p3503, %s17, 1
        %s3505 = smul.addr %s3504, 32
        %s3506 = smul.addr %s3505, 8
        %s3507 = scalar_lea.vmem %s5, %s3506
      $region52: #{efficient_double_conv.1} parent=47 // pred_fallthru
        _
    $region48: #{efficient_double_conv.1} parent=5 // pred_fallthru
      _
  $region6: #{efficient_double_conv.1} parent=0 // loop_footer
    %s15 = sadd.s32 1, %s11
  $region7: #{efficient_double_conv.1} parent=0 // loop_footer_branch
    %10 = sbr.rel target = $region3
  $region8: #{efficient_double_conv.1} parent=0 // loop_exit
    _

</llo_original>
